<compile_context>
chip_gen: v5e
topology: v5e:2x2
jax: 0.10.0
libtpu: 0.0.40
codegen_flags: <defaults>
</compile_context>

<pallas_src>
import functools

import jax
import jax.numpy as jnp
from jax.experimental import pallas as pl
from jax.experimental.pallas import tpu as pltpu


# ------------------------------ Pallas kernels -------------------------------

def _xp_kernel(ids_ref, feat_ref, tab_ref, wih_ref, b_ref, xp_ref):
    """Fused embedding + concat(features) + LSTM input projection.

    Per M-tile of the time-major (T*B) rows:
      x   = one_hot(ids) @ embed_tab          (bf16 MXU, exact row select)
      xp  = x @ W_ih^T + (b_ih + b_hh)        (bf16 MXU, f32 accumulate)
    Rows [0, B) of the sequence are the image-feature step; tile 0 overwrites
    them with features @ W_ih^T + b.
    """
    tm = xp_ref.shape[0]
    v = tab_ref.shape[0]
    bsz = feat_ref.shape[0]

    ids = ids_ref[...]                                           # (tm, 1) int32
    onehot = (jax.lax.broadcasted_iota(jnp.int32, (tm, v), 1) == ids)
    x = jnp.dot(onehot.astype(jnp.bfloat16), tab_ref[...],
                preferred_element_type=jnp.float32)              # (tm, E)
    xp = jnp.dot(x.astype(jnp.bfloat16), wih_ref[...],
                 preferred_element_type=jnp.float32) + b_ref[...]
    xp_ref[...] = xp.astype(xp_ref.dtype)

    @pl.when(pl.program_id(0) == 0)
    def _write_feature_rows():
        xp_feat = jnp.dot(feat_ref[...].astype(jnp.bfloat16), wih_ref[...],
                          preferred_element_type=jnp.float32) + b_ref[...]
        xp_ref[0:bsz, :] = xp_feat.astype(xp_ref.dtype)


def _lstm_fc_kernel(xp_ref, whh_ref, fcw_ref, fcb_ref, out_ref, hseq_sc):
    """Whole-sequence LSTM recurrence + fc_out in one grid step.

    xp (T, B, 4H) is VMEM-resident; the T-loop is fully unrolled so the LLO
    scheduler can overlap MXU / EUP / VPU work across timesteps. h_seq stays
    in VMEM scratch; fc_out is one bulk MXU matmul at the end.
    """
    seq, bsz, h4 = xp_ref.shape
    hid = h4 // 4

    def step(t, carry):
        h_prev, c_prev = carry
        gates = xp_ref[t] + jnp.dot(h_prev.astype(jnp.bfloat16), whh_ref[...],
                                    preferred_element_type=jnp.float32)
        # PyTorch LSTM gate order: i, f, g, o.
        i_g = jax.nn.sigmoid(gates[:, 0 * hid:1 * hid])
        f_g = jax.nn.sigmoid(gates[:, 1 * hid:2 * hid])
        g_g = jnp.tanh(gates[:, 2 * hid:3 * hid])
        o_g = jax.nn.sigmoid(gates[:, 3 * hid:4 * hid])
        c_new = f_g * c_prev + i_g * g_g
        h_new = o_g * jnp.tanh(c_new)
        hseq_sc[t] = h_new
        return h_new, c_new

    init = (jnp.zeros((bsz, hid), jnp.float32),
            jnp.zeros((bsz, hid), jnp.float32))
    jax.lax.fori_loop(0, seq, step, init, unroll=True)

    # Bulk fc_out while h_seq is still VMEM-resident; single lane-dense store.
    h_all = hseq_sc[...].reshape(seq * bsz, hid)
    logits = jnp.dot(h_all.astype(jnp.bfloat16), fcw_ref[...],
                     preferred_element_type=jnp.float32) + fcb_ref[...]
    out_ref[...] = logits.reshape(seq, bsz, -1).astype(out_ref.dtype)


# ----------------------------- kernel builders -------------------------------

def _pick_m_tile(m, b, cap=512):
    """Largest multiple of 8 dividing m with >= 2 tiles (v7x megacore), >= b."""
    assert m % 8 == 0, m
    target = min(cap, max(8, m // 2))
    best = None
    for t in range(8, m + 1, 8):
        if m % t == 0 and t >= b and t <= target:
            best = t
    return best if best is not None else m


@functools.lru_cache(maxsize=None)
def _build_xp(m, b, e, v, h4, tm):
    return pl.pallas_call(
        _xp_kernel,
        grid=(m // tm,),
        in_specs=[
            pl.BlockSpec((tm, 1), lambda i: (i, 0)),     # time-major token ids
            pl.BlockSpec((b, e), lambda i: (0, 0)),      # image features
            pl.BlockSpec((v, e), lambda i: (0, 0)),      # embedding table (bf16)
            pl.BlockSpec((e, h4), lambda i: (0, 0)),     # W_ih^T (bf16)
            pl.BlockSpec((1, h4), lambda i: (0, 0)),     # folded gate bias (f32)
        ],
        out_specs=pl.BlockSpec((tm, h4), lambda i: (i, 0)),
        out_shape=jax.ShapeDtypeStruct((m, h4), jnp.float32),
        compiler_params=pltpu.CompilerParams(
            dimension_semantics=("parallel",)),
        cost_estimate=pl.CostEstimate(
            flops=2 * m * v * e + 2 * m * e * h4 + 2 * b * e * h4,
            transcendentals=0,
            bytes_accessed=(m * 4 + b * e * 4 + v * e * 2 + e * h4 * 2
                            + h4 * 4 + m * h4 * 4)),
    )


@functools.lru_cache(maxsize=None)
def _build_lstm_fc(t, b, h, v):
    return pl.pallas_call(
        _lstm_fc_kernel,
        grid=(1,),
        in_specs=[
            pl.BlockSpec((t, b, 4 * h), lambda i: (0, 0, 0)),  # xp, VMEM-resident
            pl.BlockSpec((h, 4 * h), lambda i: (0, 0)),        # W_hh^T (bf16)
            pl.BlockSpec((h, v), lambda i: (0, 0)),            # fc_w^T (bf16)
            pl.BlockSpec((1, v), lambda i: (0, 0)),            # fc_b (f32)
        ],
        out_specs=pl.BlockSpec((t, b, v), lambda i: (0, 0, 0)),
        out_shape=jax.ShapeDtypeStruct((t, b, v), jnp.float32),
        scratch_shapes=[pltpu.VMEM((t, b, h), jnp.float32)],   # h_seq
        compiler_params=pltpu.CompilerParams(
            dimension_semantics=("arbitrary",)),               # true recurrence
        cost_estimate=pl.CostEstimate(
            flops=2 * t * b * h * 4 * h + 2 * t * b * h * v,
            transcendentals=5 * t * b * h,
            bytes_accessed=(t * b * 4 * h * 4 + h * 4 * h * 2 + h * v * 2
                            + v * 4 + t * b * v * 4)),
    )


# -------------------------------- forward pass --------------------------------

def decoder_forward(params, features, captions):
    """DecoderRNN.forward(features, captions) -> (B, T, V) logits."""
    B, Tc = captions.shape
    V, E = params["embed_tab"].shape
    H = params["w_hh_t"].shape[0]
    T = Tc                                   # (Tc - 1) tokens + 1 feature step
    M = T * B
    assert M % 8 == 0, "B * T must be a multiple of 8 (pad for other sizes)"

    # Time-major token ids; row 0 is a dummy placeholder for the feature step
    # (overwritten inside the xp kernel), rows 1..T-1 are captions[:, :-1].T.
    ids_tm = jnp.concatenate(
        [jnp.zeros((1, B), jnp.int32),
         jnp.transpose(captions[:, :-1]).astype(jnp.int32)], axis=0)  # (T, B)
    ids_flat = ids_tm.reshape(M, 1)

    # Kernel A: embedding + concat + whole-sequence input projection.
    tm = _pick_m_tile(M, B)
    xp = _build_xp(M, B, E, V, 4 * H, tm)(
        ids_flat, features, params["embed_tab"],
        params["w_ih_t"], params["b_gates"])                          # (M, 4H)

    # Kernel B: LSTM recurrence over T + fc_out, single fused grid step.
    logits_tm = _build_lstm_fc(T, B, H, V)(
        xp.reshape(T, B, 4 * H), params["w_hh_t"],
        params["fc_w_t"], params["fc_b"])                             # (T, B, V)

    # One final tiny transpose back to batch-major.
    return jnp.transpose(logits_tm, (1, 0, 2))                        # (B, T, V)


# --------------------------------- parameters ---------------------------------

def init_decoder_params(key, embed_size, hidden_size, vocab_size):
    """PyTorch-default init; weights stored pre-transposed, MXU operands bf16."""
    k_emb, k_wih, k_whh, k_bih, k_bhh, k_fcw, k_fcb = jax.random.split(key, 7)

    # nn.Embedding: N(0, 1)
    emb = jax.random.normal(k_emb, (vocab_size, embed_size), jnp.float32)

    # nn.LSTM: U(-1/sqrt(H), 1/sqrt(H)); gate order i, f, g, o.
    s = 1.0 / float(hidden_size) ** 0.5
    w_ih = jax.random.uniform(k_wih, (4 * hidden_size, embed_size), jnp.float32, -s, s)
    w_hh = jax.random.uniform(k_whh, (4 * hidden_size, hidden_size), jnp.float32, -s, s)
    b_ih = jax.random.uniform(k_bih, (4 * hidden_size,), jnp.float32, -s, s)
    b_hh = jax.random.uniform(k_bhh, (4 * hidden_size,), jnp.float32, -s, s)

    # nn.Linear(hidden_size, vocab_size): U(-1/sqrt(H), 1/sqrt(H))
    fc_w = jax.random.uniform(k_fcw, (vocab_size, hidden_size), jnp.float32, -s, s)
    fc_b = jax.random.uniform(k_fcb, (vocab_size,), jnp.float32, -s, s)

    return {
        "embed_tab": emb.astype(jnp.bfloat16),                 # (V, E)  bf16
        "w_ih_t": jnp.transpose(w_ih).astype(jnp.bfloat16),    # (E, 4H) bf16
        "w_hh_t": jnp.transpose(w_hh).astype(jnp.bfloat16),    # (H, 4H) bf16
        "b_gates": (b_ih + b_hh).reshape(1, 4 * hidden_size),  # folded bias, f32
        "fc_w_t": jnp.transpose(fc_w).astype(jnp.bfloat16),    # (H, V)  bf16
        "fc_b": fc_b.reshape(1, vocab_size),                   # f32
    }


# ------------------------------------ main -------------------------------------

if __name__ == "__main__":
    key = jax.random.PRNGKey(0)
    pkey, fkey, ckey = jax.random.split(key, 3)

    # Small but lane/sublane-friendly shapes (8-multiple M, 128-multiple lanes).
    batch, seq_len = 8, 8
    embed_size, hidden_size, vocab_size = 128, 128, 256

    params = init_decoder_params(pkey, embed_size, hidden_size, vocab_size)
    features = jax.random.normal(fkey, (batch, embed_size), jnp.float32)
    captions = jax.random.randint(ckey, (batch, seq_len), 0, vocab_size, jnp.int32)

    fwd = jax.jit(decoder_forward)
    out = jax.block_until_ready(fwd(params, features, captions))

    assert out.shape == (batch, seq_len, vocab_size), out.shape
    assert bool(jnp.all(jnp.isfinite(out)))
    print("KERNEL_OK")
</pallas_src>

<mosaic_0001>
module attributes {stable_mosaic.version = 11 : i64} {
  func.func @_xp_kernel(%arg0: i32, %arg1: memref<32x1xi32, #tpu.memory_space<vmem>>, %arg2: memref<8x128xf32, #tpu.memory_space<vmem>>, %arg3: memref<256x128xbf16, #tpu.memory_space<vmem>>, %arg4: memref<128x512xbf16, #tpu.memory_space<vmem>>, %arg5: memref<1x512xf32, #tpu.memory_space<vmem>>, %arg6: memref<32x512xf32, #tpu.memory_space<vmem>>) attributes {dimension_semantics = [#tpu.dimension_semantics<parallel>], iteration_bounds = array<i64: 2>, scalar_prefetch = 0 : i64, scratch_operands = 0 : i64, tpu.core_type = #tpu.core_type<tc>, window_params = [{transform_indices = @transform_0, window_bounds = array<i64: 32, 1>}, {pipeline_mode = #tpu.pipeline_mode<synchronous>, transform_indices = @transform_1, window_bounds = array<i64: 8, 128>}, {pipeline_mode = #tpu.pipeline_mode<synchronous>, transform_indices = @transform_2, window_bounds = array<i64: 256, 128>}, {pipeline_mode = #tpu.pipeline_mode<synchronous>, transform_indices = @transform_3, window_bounds = array<i64: 128, 512>}, {pipeline_mode = #tpu.pipeline_mode<synchronous>, transform_indices = @transform_4, window_bounds = array<i64: 1, 512>}, {transform_indices = @transform_5, window_bounds = array<i64: 32, 512>}]} {
    %c0 = arith.constant 0 : index
    %c0_0 = arith.constant 0 : index
    %0 = vector.load %arg1[%c0, %c0_0] : memref<32x1xi32, #tpu.memory_space<vmem>>, vector<32x1xi32>
    %1 = tpu.iota {dimensions = array<i32: 1>} : vector<32x256xi32>
    %2 = vector.broadcast %0 : vector<32x1xi32> to vector<32x256xi32>
    %3 = arith.cmpi eq, %1, %2 : vector<32x256xi32>
    %4 = arith.extui %3 : vector<32x256xi1> to vector<32x256xi32>
    %5 = arith.sitofp %4 : vector<32x256xi32> to vector<32x256xf32>
    %6 = arith.truncf %5 : vector<32x256xf32> to vector<32x256xbf16>
    %c0_1 = arith.constant 0 : index
    %c0_2 = arith.constant 0 : index
    %7 = vector.load %arg3[%c0_1, %c0_2] : memref<256x128xbf16, #tpu.memory_space<vmem>>, vector<256x128xbf16>
    %cst = arith.constant dense<0.000000e+00> : vector<32x128xf32>
    %8 = tpu.matmul %6, %7, %cst {dimension_numbers = #tpu.dot_dimension_numbers<[1], [0], [0], [1], [0, 0, 1, 1], [], []>} : vector<32x256xbf16>, vector<256x128xbf16>, vector<32x128xf32> -> vector<32x128xf32>
    %9 = arith.truncf %8 : vector<32x128xf32> to vector<32x128xbf16>
    %c0_3 = arith.constant 0 : index
    %c0_4 = arith.constant 0 : index
    %10 = vector.load %arg4[%c0_3, %c0_4] : memref<128x512xbf16, #tpu.memory_space<vmem>>, vector<128x512xbf16>
    %cst_5 = arith.constant dense<0.000000e+00> : vector<32x512xf32>
    %11 = tpu.matmul %9, %10, %cst_5 {dimension_numbers = #tpu.dot_dimension_numbers<[1], [0], [0], [1], [0, 0, 1, 1], [], []>} : vector<32x128xbf16>, vector<128x512xbf16>, vector<32x512xf32> -> vector<32x512xf32>
    %c0_6 = arith.constant 0 : index
    %c0_7 = arith.constant 0 : index
    %12 = vector.load %arg5[%c0_6, %c0_7] : memref<1x512xf32, #tpu.memory_space<vmem>>, vector<1x512xf32>
    %13 = vector.broadcast %12 : vector<1x512xf32> to vector<32x512xf32>
    %14 = arith.addf %11, %13 : vector<32x512xf32>
    %c0_8 = arith.constant 0 : index
    %c0_9 = arith.constant 0 : index
    %15 = vector.load %arg6[%c0_8, %c0_9] : memref<32x512xf32, #tpu.memory_space<vmem>>, vector<32x512xf32>
    tpu.vector_store %arg6[%c0_8, %c0_9], %14 {strides = array<i32>} : memref<32x512xf32, #tpu.memory_space<vmem>>, vector<32x512xf32>,
    %c0_i32 = arith.constant 0 : i32
    %16 = arith.cmpi eq, %arg0, %c0_i32 : i32
    %17 = arith.extui %16 : i1 to i32
    %c0_i32_10 = arith.constant 0 : i32
    %18 = arith.cmpi ne, %17, %c0_i32_10 : i32
    scf.if %18 {
      %c0_11 = arith.constant 0 : index
      %c0_12 = arith.constant 0 : index
      %19 = vector.load %arg2[%c0_11, %c0_12] : memref<8x128xf32, #tpu.memory_space<vmem>>, vector<8x128xf32>
      %20 = arith.truncf %19 : vector<8x128xf32> to vector<8x128xbf16>
      %c0_13 = arith.constant 0 : index
      %c0_14 = arith.constant 0 : index
      %21 = vector.load %arg4[%c0_13, %c0_14] : memref<128x512xbf16, #tpu.memory_space<vmem>>, vector<128x512xbf16>
      %cst_15 = arith.constant dense<0.000000e+00> : vector<8x512xf32>
      %22 = tpu.matmul %20, %21, %cst_15 {dimension_numbers = #tpu.dot_dimension_numbers<[1], [0], [0], [1], [0, 0, 1, 1], [], []>} : vector<8x128xbf16>, vector<128x512xbf16>, vector<8x512xf32> -> vector<8x512xf32>
      %c0_16 = arith.constant 0 : index
      %c0_17 = arith.constant 0 : index
      %23 = vector.load %arg5[%c0_16, %c0_17] : memref<1x512xf32, #tpu.memory_space<vmem>>, vector<1x512xf32>
      %24 = vector.broadcast %23 : vector<1x512xf32> to vector<8x512xf32>
      %25 = arith.addf %22, %24 : vector<8x512xf32>
      %c0_18 = arith.constant 0 : index
      %c0_19 = arith.constant 0 : index
      %26 = vector.load %arg6[%c0_18, %c0_19] : memref<32x512xf32, #tpu.memory_space<vmem>>, vector<8x512xf32>
      tpu.vector_store %arg6[%c0_18, %c0_19], %25 {strides = array<i32>} : memref<32x512xf32, #tpu.memory_space<vmem>>, vector<8x512xf32>,
    } else {
    }
    return
  }
  func.func @transform_0(%arg0: i32) -> (i32, i32) {
    %c0_i32 = arith.constant 0 : i32
    %c0_i32_0 = arith.constant 0 : i32
    return %arg0, %c0_i32 : i32, i32
  }
  func.func @transform_1(%arg0: i32) -> (i32, i32) {
    %c0_i32 = arith.constant 0 : i32
    %c0_i32_0 = arith.constant 0 : i32
    %c0_i32_1 = arith.constant 0 : i32
    return %c0_i32, %c0_i32_0 : i32, i32
  }
  func.func @transform_2(%arg0: i32) -> (i32, i32) {
    %c0_i32 = arith.constant 0 : i32
    %c0_i32_0 = arith.constant 0 : i32
    %c0_i32_1 = arith.constant 0 : i32
    return %c0_i32, %c0_i32_0 : i32, i32
  }
  func.func @transform_3(%arg0: i32) -> (i32, i32) {
    %c0_i32 = arith.constant 0 : i32
    %c0_i32_0 = arith.constant 0 : i32
    %c0_i32_1 = arith.constant 0 : i32
    return %c0_i32, %c0_i32_0 : i32, i32
  }
  func.func @transform_4(%arg0: i32) -> (i32, i32) {
    %c0_i32 = arith.constant 0 : i32
    %c0_i32_0 = arith.constant 0 : i32
    %c0_i32_1 = arith.constant 0 : i32
    return %c0_i32, %c0_i32_0 : i32, i32
  }
  func.func @transform_5(%arg0: i32) -> (i32, i32) {
    %c0_i32 = arith.constant 0 : i32
    %c0_i32_0 = arith.constant 0 : i32
    return %arg0, %c0_i32 : i32, i32
  }
}

module attributes {stable_mosaic.version = 11 : i64} {
  func.func @_lstm_fc_kernel(%arg0: i32, %arg1: memref<8x8x512xf32, #tpu.memory_space<vmem>>, %arg2: memref<128x512xbf16, #tpu.memory_space<vmem>>, %arg3: memref<128x256xbf16, #tpu.memory_space<vmem>>, %arg4: memref<1x256xf32, #tpu.memory_space<vmem>>, %arg5: memref<8x8x256xf32, #tpu.memory_space<vmem>>, %arg6: memref<8x8x128xf32, #tpu.memory_space<vmem>>) attributes {dimension_semantics = [#tpu.dimension_semantics<arbitrary>], iteration_bounds = array<i64: 1>, scalar_prefetch = 0 : i64, scratch_operands = 1 : i64, tpu.core_type = #tpu.core_type<tc>, window_params = [{pipeline_mode = #tpu.pipeline_mode<synchronous>, transform_indices = @transform_0, window_bounds = array<i64: 8, 8, 512>}, {pipeline_mode = #tpu.pipeline_mode<synchronous>, transform_indices = @transform_1, window_bounds = array<i64: 128, 512>}, {pipeline_mode = #tpu.pipeline_mode<synchronous>, transform_indices = @transform_2, window_bounds = array<i64: 128, 256>}, {pipeline_mode = #tpu.pipeline_mode<synchronous>, transform_indices = @transform_3, window_bounds = array<i64: 1, 256>}, {pipeline_mode = #tpu.pipeline_mode<synchronous>, transform_indices = @transform_4, window_bounds = array<i64: 8, 8, 256>}]} {
    %cst = arith.constant 0.000000e+00 : f32
    %0 = vector.broadcast %cst : f32 to vector<8x128xf32>
    %cst_0 = arith.constant 0.000000e+00 : f32
    %1 = vector.broadcast %cst_0 : f32 to vector<8x128xf32>
    %c0_i32 = arith.constant 0 : i32
    %2 = arith.index_cast %c0_i32 : i32 to index
    %c0 = arith.constant 0 : index
    %c0_1 = arith.constant 0 : index
    %3 = vector.load %arg1[%2, %c0, %c0_1] : memref<8x8x512xf32, #tpu.memory_space<vmem>>, vector<1x8x512xf32>
    %4 = vector.shape_cast %3 : vector<1x8x512xf32> to vector<8x512xf32>
    %5 = arith.truncf %0 : vector<8x128xf32> to vector<8x128xbf16>
    %c0_2 = arith.constant 0 : index
    %c0_3 = arith.constant 0 : index
    %6 = vector.load %arg2[%c0_2, %c0_3] : memref<128x512xbf16, #tpu.memory_space<vmem>>, vector<128x512xbf16>
    %cst_4 = arith.constant dense<0.000000e+00> : vector<8x512xf32>
    %7 = tpu.matmul %5, %6, %cst_4 {dimension_numbers = #tpu.dot_dimension_numbers<[1], [0], [0], [1], [0, 0, 1, 1], [], []>} : vector<8x128xbf16>, vector<128x512xbf16>, vector<8x512xf32> -> vector<8x512xf32>
    %8 = arith.addf %4, %7 : vector<8x512xf32>
    %9 = vector.extract_strided_slice %8 {offsets = [0, 0], sizes = [8, 128], strides = [1, 1]} : vector<8x512xf32> to vector<8x128xf32>
    %10 = arith.negf %9 : vector<8x128xf32>
    %11 = math.exp %10 : vector<8x128xf32>
    %cst_5 = arith.constant 1.000000e+00 : f32
    %12 = vector.broadcast %cst_5 : f32 to vector<8x128xf32>
    %13 = arith.addf %12, %11 : vector<8x128xf32>
    %14 = arith.divf %12, %13 : vector<8x128xf32>
    %15 = vector.extract_strided_slice %8 {offsets = [0, 128], sizes = [8, 128], strides = [1, 1]} : vector<8x512xf32> to vector<8x128xf32>
    %16 = arith.negf %15 : vector<8x128xf32>
    %17 = math.exp %16 : vector<8x128xf32>
    %cst_6 = arith.constant 1.000000e+00 : f32
    %18 = vector.broadcast %cst_6 : f32 to vector<8x128xf32>
    %19 = arith.addf %18, %17 : vector<8x128xf32>
    %20 = arith.divf %18, %19 : vector<8x128xf32>
    %21 = vector.extract_strided_slice %8 {offsets = [0, 256], sizes = [8, 128], strides = [1, 1]} : vector<8x512xf32> to vector<8x128xf32>
    %22 = math.tanh %21 : vector<8x128xf32>
    %23 = vector.extract_strided_slice %8 {offsets = [0, 384], sizes = [8, 128], strides = [1, 1]} : vector<8x512xf32> to vector<8x128xf32>
    %24 = arith.negf %23 : vector<8x128xf32>
    %25 = math.exp %24 : vector<8x128xf32>
    %cst_7 = arith.constant 1.000000e+00 : f32
    %26 = vector.broadcast %cst_7 : f32 to vector<8x128xf32>
    %27 = arith.addf %26, %25 : vector<8x128xf32>
    %28 = arith.divf %26, %27 : vector<8x128xf32>
    %29 = arith.mulf %20, %1 : vector<8x128xf32>
    %30 = arith.mulf %14, %22 : vector<8x128xf32>
    %31 = arith.addf %29, %30 : vector<8x128xf32>
    %32 = math.tanh %31 : vector<8x128xf32>
    %33 = arith.mulf %28, %32 : vector<8x128xf32>
    %34 = arith.index_cast %c0_i32 : i32 to index
    %c0_8 = arith.constant 0 : index
    %c0_9 = arith.constant 0 : index
    %35 = vector.load %arg6[%34, %c0_8, %c0_9] : memref<8x8x128xf32, #tpu.memory_space<vmem>>, vector<1x8x128xf32>
    %36 = vector.shape_cast %35 : vector<1x8x128xf32> to vector<8x128xf32>
    %37 = vector.shape_cast %33 : vector<8x128xf32> to vector<1x8x128xf32>
    tpu.vector_store %arg6[%34, %c0_8, %c0_9], %37 {strides = array<i32>} : memref<8x8x128xf32, #tpu.memory_space<vmem>>, vector<1x8x128xf32>,
    %c1_i32 = arith.constant 1 : i32
    %38 = arith.index_cast %c1_i32 : i32 to index
    %c0_10 = arith.constant 0 : index
    %c0_11 = arith.constant 0 : index
    %39 = vector.load %arg1[%38, %c0_10, %c0_11] : memref<8x8x512xf32, #tpu.memory_space<vmem>>, vector<1x8x512xf32>
    %40 = vector.shape_cast %39 : vector<1x8x512xf32> to vector<8x512xf32>
    %41 = arith.truncf %33 : vector<8x128xf32> to vector<8x128xbf16>
    %c0_12 = arith.constant 0 : index
    %c0_13 = arith.constant 0 : index
    %42 = vector.load %arg2[%c0_12, %c0_13] : memref<128x512xbf16, #tpu.memory_space<vmem>>, vector<128x512xbf16>
    %cst_14 = arith.constant dense<0.000000e+00> : vector<8x512xf32>
    %43 = tpu.matmul %41, %42, %cst_14 {dimension_numbers = #tpu.dot_dimension_numbers<[1], [0], [0], [1], [0, 0, 1, 1], [], []>} : vector<8x128xbf16>, vector<128x512xbf16>, vector<8x512xf32> -> vector<8x512xf32>
    %44 = arith.addf %40, %43 : vector<8x512xf32>
    %45 = vector.extract_strided_slice %44 {offsets = [0, 0], sizes = [8, 128], strides = [1, 1]} : vector<8x512xf32> to vector<8x128xf32>
    %46 = arith.negf %45 : vector<8x128xf32>
    %47 = math.exp %46 : vector<8x128xf32>
    %cst_15 = arith.constant 1.000000e+00 : f32
    %48 = vector.broadcast %cst_15 : f32 to vector<8x128xf32>
    %49 = arith.addf %48, %47 : vector<8x128xf32>
    %50 = arith.divf %48, %49 : vector<8x128xf32>
    %51 = vector.extract_strided_slice %44 {offsets = [0, 128], sizes = [8, 128], strides = [1, 1]} : vector<8x512xf32> to vector<8x128xf32>
    %52 = arith.negf %51 : vector<8x128xf32>
    %53 = math.exp %52 : vector<8x128xf32>
    %cst_16 = arith.constant 1.000000e+00 : f32
    %54 = vector.broadcast %cst_16 : f32 to vector<8x128xf32>
    %55 = arith.addf %54, %53 : vector<8x128xf32>
    %56 = arith.divf %54, %55 : vector<8x128xf32>
    %57 = vector.extract_strided_slice %44 {offsets = [0, 256], sizes = [8, 128], strides = [1, 1]} : vector<8x512xf32> to vector<8x128xf32>
    %58 = math.tanh %57 : vector<8x128xf32>
    %59 = vector.extract_strided_slice %44 {offsets = [0, 384], sizes = [8, 128], strides = [1, 1]} : vector<8x512xf32> to vector<8x128xf32>
    %60 = arith.negf %59 : vector<8x128xf32>
    %61 = math.exp %60 : vector<8x128xf32>
    %cst_17 = arith.constant 1.000000e+00 : f32
    %62 = vector.broadcast %cst_17 : f32 to vector<8x128xf32>
    %63 = arith.addf %62, %61 : vector<8x128xf32>
    %64 = arith.divf %62, %63 : vector<8x128xf32>
    %65 = arith.mulf %56, %31 : vector<8x128xf32>
    %66 = arith.mulf %50, %58 : vector<8x128xf32>
    %67 = arith.addf %65, %66 : vector<8x128xf32>
    %68 = math.tanh %67 : vector<8x128xf32>
    %69 = arith.mulf %64, %68 : vector<8x128xf32>
    %70 = arith.index_cast %c1_i32 : i32 to index
    %c0_18 = arith.constant 0 : index
    %c0_19 = arith.constant 0 : index
    %71 = vector.load %arg6[%70, %c0_18, %c0_19] : memref<8x8x128xf32, #tpu.memory_space<vmem>>, vector<1x8x128xf32>
    %72 = vector.shape_cast %71 : vector<1x8x128xf32> to vector<8x128xf32>
    %73 = vector.shape_cast %69 : vector<8x128xf32> to vector<1x8x128xf32>
    tpu.vector_store %arg6[%70, %c0_18, %c0_19], %73 {strides = array<i32>} : memref<8x8x128xf32, #tpu.memory_space<vmem>>, vector<1x8x128xf32>,
    %c2_i32 = arith.constant 2 : i32
    %74 = arith.index_cast %c2_i32 : i32 to index
    %c0_20 = arith.constant 0 : index
    %c0_21 = arith.constant 0 : index
    %75 = vector.load %arg1[%74, %c0_20, %c0_21] : memref<8x8x512xf32, #tpu.memory_space<vmem>>, vector<1x8x512xf32>
    %76 = vector.shape_cast %75 : vector<1x8x512xf32> to vector<8x512xf32>
    %77 = arith.truncf %69 : vector<8x128xf32> to vector<8x128xbf16>
    %c0_22 = arith.constant 0 : index
    %c0_23 = arith.constant 0 : index
    %78 = vector.load %arg2[%c0_22, %c0_23] : memref<128x512xbf16, #tpu.memory_space<vmem>>, vector<128x512xbf16>
    %cst_24 = arith.constant dense<0.000000e+00> : vector<8x512xf32>
    %79 = tpu.matmul %77, %78, %cst_24 {dimension_numbers = #tpu.dot_dimension_numbers<[1], [0], [0], [1], [0, 0, 1, 1], [], []>} : vector<8x128xbf16>, vector<128x512xbf16>, vector<8x512xf32> -> vector<8x512xf32>
    %80 = arith.addf %76, %79 : vector<8x512xf32>
    %81 = vector.extract_strided_slice %80 {offsets = [0, 0], sizes = [8, 128], strides = [1, 1]} : vector<8x512xf32> to vector<8x128xf32>
    %82 = arith.negf %81 : vector<8x128xf32>
    %83 = math.exp %82 : vector<8x128xf32>
    %cst_25 = arith.constant 1.000000e+00 : f32
    %84 = vector.broadcast %cst_25 : f32 to vector<8x128xf32>
    %85 = arith.addf %84, %83 : vector<8x128xf32>
    %86 = arith.divf %84, %85 : vector<8x128xf32>
    %87 = vector.extract_strided_slice %80 {offsets = [0, 128], sizes = [8, 128], strides = [1, 1]} : vector<8x512xf32> to vector<8x128xf32>
    %88 = arith.negf %87 : vector<8x128xf32>
    %89 = math.exp %88 : vector<8x128xf32>
    %cst_26 = arith.constant 1.000000e+00 : f32
    %90 = vector.broadcast %cst_26 : f32 to vector<8x128xf32>
    %91 = arith.addf %90, %89 : vector<8x128xf32>
    %92 = arith.divf %90, %91 : vector<8x128xf32>
    %93 = vector.extract_strided_slice %80 {offsets = [0, 256], sizes = [8, 128], strides = [1, 1]} : vector<8x512xf32> to vector<8x128xf32>
    %94 = math.tanh %93 : vector<8x128xf32>
    %95 = vector.extract_strided_slice %80 {offsets = [0, 384], sizes = [8, 128], strides = [1, 1]} : vector<8x512xf32> to vector<8x128xf32>
    %96 = arith.negf %95 : vector<8x128xf32>
    %97 = math.exp %96 : vector<8x128xf32>
    %cst_27 = arith.constant 1.000000e+00 : f32
    %98 = vector.broadcast %cst_27 : f32 to vector<8x128xf32>
    %99 = arith.addf %98, %97 : vector<8x128xf32>
    %100 = arith.divf %98, %99 : vector<8x128xf32>
    %101 = arith.mulf %92, %67 : vector<8x128xf32>
    %102 = arith.mulf %86, %94 : vector<8x128xf32>
    %103 = arith.addf %101, %102 : vector<8x128xf32>
    %104 = math.tanh %103 : vector<8x128xf32>
    %105 = arith.mulf %100, %104 : vector<8x128xf32>
    %106 = arith.index_cast %c2_i32 : i32 to index
    %c0_28 = arith.constant 0 : index
    %c0_29 = arith.constant 0 : index
    %107 = vector.load %arg6[%106, %c0_28, %c0_29] : memref<8x8x128xf32, #tpu.memory_space<vmem>>, vector<1x8x128xf32>
    %108 = vector.shape_cast %107 : vector<1x8x128xf32> to vector<8x128xf32>
    %109 = vector.shape_cast %105 : vector<8x128xf32> to vector<1x8x128xf32>
    tpu.vector_store %arg6[%106, %c0_28, %c0_29], %109 {strides = array<i32>} : memref<8x8x128xf32, #tpu.memory_space<vmem>>, vector<1x8x128xf32>,
    %c3_i32 = arith.constant 3 : i32
    %110 = arith.index_cast %c3_i32 : i32 to index
    %c0_30 = arith.constant 0 : index
    %c0_31 = arith.constant 0 : index
    %111 = vector.load %arg1[%110, %c0_30, %c0_31] : memref<8x8x512xf32, #tpu.memory_space<vmem>>, vector<1x8x512xf32>
    %112 = vector.shape_cast %111 : vector<1x8x512xf32> to vector<8x512xf32>
    %113 = arith.truncf %105 : vector<8x128xf32> to vector<8x128xbf16>
    %c0_32 = arith.constant 0 : index
    %c0_33 = arith.constant 0 : index
    %114 = vector.load %arg2[%c0_32, %c0_33] : memref<128x512xbf16, #tpu.memory_space<vmem>>, vector<128x512xbf16>
    %cst_34 = arith.constant dense<0.000000e+00> : vector<8x512xf32>
    %115 = tpu.matmul %113, %114, %cst_34 {dimension_numbers = #tpu.dot_dimension_numbers<[1], [0], [0], [1], [0, 0, 1, 1], [], []>} : vector<8x128xbf16>, vector<128x512xbf16>, vector<8x512xf32> -> vector<8x512xf32>
    %116 = arith.addf %112, %115 : vector<8x512xf32>
    %117 = vector.extract_strided_slice %116 {offsets = [0, 0], sizes = [8, 128], strides = [1, 1]} : vector<8x512xf32> to vector<8x128xf32>
    %118 = arith.negf %117 : vector<8x128xf32>
    %119 = math.exp %118 : vector<8x128xf32>
    %cst_35 = arith.constant 1.000000e+00 : f32
    %120 = vector.broadcast %cst_35 : f32 to vector<8x128xf32>
    %121 = arith.addf %120, %119 : vector<8x128xf32>
    %122 = arith.divf %120, %121 : vector<8x128xf32>
    %123 = vector.extract_strided_slice %116 {offsets = [0, 128], sizes = [8, 128], strides = [1, 1]} : vector<8x512xf32> to vector<8x128xf32>
    %124 = arith.negf %123 : vector<8x128xf32>
    %125 = math.exp %124 : vector<8x128xf32>
    %cst_36 = arith.constant 1.000000e+00 : f32
    %126 = vector.broadcast %cst_36 : f32 to vector<8x128xf32>
    %127 = arith.addf %126, %125 : vector<8x128xf32>
    %128 = arith.divf %126, %127 : vector<8x128xf32>
    %129 = vector.extract_strided_slice %116 {offsets = [0, 256], sizes = [8, 128], strides = [1, 1]} : vector<8x512xf32> to vector<8x128xf32>
    %130 = math.tanh %129 : vector<8x128xf32>
    %131 = vector.extract_strided_slice %116 {offsets = [0, 384], sizes = [8, 128], strides = [1, 1]} : vector<8x512xf32> to vector<8x128xf32>
    %132 = arith.negf %131 : vector<8x128xf32>
    %133 = math.exp %132 : vector<8x128xf32>
    %cst_37 = arith.constant 1.000000e+00 : f32
    %134 = vector.broadcast %cst_37 : f32 to vector<8x128xf32>
    %135 = arith.addf %134, %133 : vector<8x128xf32>
    %136 = arith.divf %134, %135 : vector<8x128xf32>
    %137 = arith.mulf %128, %103 : vector<8x128xf32>
    %138 = arith.mulf %122, %130 : vector<8x128xf32>
    %139 = arith.addf %137, %138 : vector<8x128xf32>
    %140 = math.tanh %139 : vector<8x128xf32>
    %141 = arith.mulf %136, %140 : vector<8x128xf32>
    %142 = arith.index_cast %c3_i32 : i32 to index
    %c0_38 = arith.constant 0 : index
    %c0_39 = arith.constant 0 : index
    %143 = vector.load %arg6[%142, %c0_38, %c0_39] : memref<8x8x128xf32, #tpu.memory_space<vmem>>, vector<1x8x128xf32>
    %144 = vector.shape_cast %143 : vector<1x8x128xf32> to vector<8x128xf32>
    %145 = vector.shape_cast %141 : vector<8x128xf32> to vector<1x8x128xf32>
    tpu.vector_store %arg6[%142, %c0_38, %c0_39], %145 {strides = array<i32>} : memref<8x8x128xf32, #tpu.memory_space<vmem>>, vector<1x8x128xf32>,
    %c4_i32 = arith.constant 4 : i32
    %146 = arith.index_cast %c4_i32 : i32 to index
    %c0_40 = arith.constant 0 : index
    %c0_41 = arith.constant 0 : index
    %147 = vector.load %arg1[%146, %c0_40, %c0_41] : memref<8x8x512xf32, #tpu.memory_space<vmem>>, vector<1x8x512xf32>
    %148 = vector.shape_cast %147 : vector<1x8x512xf32> to vector<8x512xf32>
    %149 = arith.truncf %141 : vector<8x128xf32> to vector<8x128xbf16>
    %c0_42 = arith.constant 0 : index
    %c0_43 = arith.constant 0 : index
    %150 = vector.load %arg2[%c0_42, %c0_43] : memref<128x512xbf16, #tpu.memory_space<vmem>>, vector<128x512xbf16>
    %cst_44 = arith.constant dense<0.000000e+00> : vector<8x512xf32>
    %151 = tpu.matmul %149, %150, %cst_44 {dimension_numbers = #tpu.dot_dimension_numbers<[1], [0], [0], [1], [0, 0, 1, 1], [], []>} : vector<8x128xbf16>, vector<128x512xbf16>, vector<8x512xf32> -> vector<8x512xf32>
    %152 = arith.addf %148, %151 : vector<8x512xf32>
    %153 = vector.extract_strided_slice %152 {offsets = [0, 0], sizes = [8, 128], strides = [1, 1]} : vector<8x512xf32> to vector<8x128xf32>
    %154 = arith.negf %153 : vector<8x128xf32>
    %155 = math.exp %154 : vector<8x128xf32>
    %cst_45 = arith.constant 1.000000e+00 : f32
    %156 = vector.broadcast %cst_45 : f32 to vector<8x128xf32>
    %157 = arith.addf %156, %155 : vector<8x128xf32>
    %158 = arith.divf %156, %157 : vector<8x128xf32>
    %159 = vector.extract_strided_slice %152 {offsets = [0, 128], sizes = [8, 128], strides = [1, 1]} : vector<8x512xf32> to vector<8x128xf32>
    %160 = arith.negf %159 : vector<8x128xf32>
    %161 = math.exp %160 : vector<8x128xf32>
    %cst_46 = arith.constant 1.000000e+00 : f32
    %162 = vector.broadcast %cst_46 : f32 to vector<8x128xf32>
    %163 = arith.addf %162, %161 : vector<8x128xf32>
    %164 = arith.divf %162, %163 : vector<8x128xf32>
    %165 = vector.extract_strided_slice %152 {offsets = [0, 256], sizes = [8, 128], strides = [1, 1]} : vector<8x512xf32> to vector<8x128xf32>
    %166 = math.tanh %165 : vector<8x128xf32>
    %167 = vector.extract_strided_slice %152 {offsets = [0, 384], sizes = [8, 128], strides = [1, 1]} : vector<8x512xf32> to vector<8x128xf32>
    %168 = arith.negf %167 : vector<8x128xf32>
    %169 = math.exp %168 : vector<8x128xf32>
    %cst_47 = arith.constant 1.000000e+00 : f32
    %170 = vector.broadcast %cst_47 : f32 to vector<8x128xf32>
    %171 = arith.addf %170, %169 : vector<8x128xf32>
    %172 = arith.divf %170, %171 : vector<8x128xf32>
    %173 = arith.mulf %164, %139 : vector<8x128xf32>
    %174 = arith.mulf %158, %166 : vector<8x128xf32>
    %175 = arith.addf %173, %174 : vector<8x128xf32>
    %176 = math.tanh %175 : vector<8x128xf32>
    %177 = arith.mulf %172, %176 : vector<8x128xf32>
    %178 = arith.index_cast %c4_i32 : i32 to index
    %c0_48 = arith.constant 0 : index
    %c0_49 = arith.constant 0 : index
    %179 = vector.load %arg6[%178, %c0_48, %c0_49] : memref<8x8x128xf32, #tpu.memory_space<vmem>>, vector<1x8x128xf32>
    %180 = vector.shape_cast %179 : vector<1x8x128xf32> to vector<8x128xf32>
    %181 = vector.shape_cast %177 : vector<8x128xf32> to vector<1x8x128xf32>
    tpu.vector_store %arg6[%178, %c0_48, %c0_49], %181 {strides = array<i32>} : memref<8x8x128xf32, #tpu.memory_space<vmem>>, vector<1x8x128xf32>,
    %c5_i32 = arith.constant 5 : i32
    %182 = arith.index_cast %c5_i32 : i32 to index
    %c0_50 = arith.constant 0 : index
    %c0_51 = arith.constant 0 : index
    %183 = vector.load %arg1[%182, %c0_50, %c0_51] : memref<8x8x512xf32, #tpu.memory_space<vmem>>, vector<1x8x512xf32>
    %184 = vector.shape_cast %183 : vector<1x8x512xf32> to vector<8x512xf32>
    %185 = arith.truncf %177 : vector<8x128xf32> to vector<8x128xbf16>
    %c0_52 = arith.constant 0 : index
    %c0_53 = arith.constant 0 : index
    %186 = vector.load %arg2[%c0_52, %c0_53] : memref<128x512xbf16, #tpu.memory_space<vmem>>, vector<128x512xbf16>
    %cst_54 = arith.constant dense<0.000000e+00> : vector<8x512xf32>
    %187 = tpu.matmul %185, %186, %cst_54 {dimension_numbers = #tpu.dot_dimension_numbers<[1], [0], [0], [1], [0, 0, 1, 1], [], []>} : vector<8x128xbf16>, vector<128x512xbf16>, vector<8x512xf32> -> vector<8x512xf32>
    %188 = arith.addf %184, %187 : vector<8x512xf32>
    %189 = vector.extract_strided_slice %188 {offsets = [0, 0], sizes = [8, 128], strides = [1, 1]} : vector<8x512xf32> to vector<8x128xf32>
    %190 = arith.negf %189 : vector<8x128xf32>
    %191 = math.exp %190 : vector<8x128xf32>
    %cst_55 = arith.constant 1.000000e+00 : f32
    %192 = vector.broadcast %cst_55 : f32 to vector<8x128xf32>
    %193 = arith.addf %192, %191 : vector<8x128xf32>
    %194 = arith.divf %192, %193 : vector<8x128xf32>
    %195 = vector.extract_strided_slice %188 {offsets = [0, 128], sizes = [8, 128], strides = [1, 1]} : vector<8x512xf32> to vector<8x128xf32>
    %196 = arith.negf %195 : vector<8x128xf32>
    %197 = math.exp %196 : vector<8x128xf32>
    %cst_56 = arith.constant 1.000000e+00 : f32
    %198 = vector.broadcast %cst_56 : f32 to vector<8x128xf32>
    %199 = arith.addf %198, %197 : vector<8x128xf32>
    %200 = arith.divf %198, %199 : vector<8x128xf32>
    %201 = vector.extract_strided_slice %188 {offsets = [0, 256], sizes = [8, 128], strides = [1, 1]} : vector<8x512xf32> to vector<8x128xf32>
    %202 = math.tanh %201 : vector<8x128xf32>
    %203 = vector.extract_strided_slice %188 {offsets = [0, 384], sizes = [8, 128], strides = [1, 1]} : vector<8x512xf32> to vector<8x128xf32>
    %204 = arith.negf %203 : vector<8x128xf32>
    %205 = math.exp %204 : vector<8x128xf32>
    %cst_57 = arith.constant 1.000000e+00 : f32
    %206 = vector.broadcast %cst_57 : f32 to vector<8x128xf32>
    %207 = arith.addf %206, %205 : vector<8x128xf32>
    %208 = arith.divf %206, %207 : vector<8x128xf32>
    %209 = arith.mulf %200, %175 : vector<8x128xf32>
    %210 = arith.mulf %194, %202 : vector<8x128xf32>
    %211 = arith.addf %209, %210 : vector<8x128xf32>
    %212 = math.tanh %211 : vector<8x128xf32>
    %213 = arith.mulf %208, %212 : vector<8x128xf32>
    %214 = arith.index_cast %c5_i32 : i32 to index
    %c0_58 = arith.constant 0 : index
    %c0_59 = arith.constant 0 : index
    %215 = vector.load %arg6[%214, %c0_58, %c0_59] : memref<8x8x128xf32, #tpu.memory_space<vmem>>, vector<1x8x128xf32>
    %216 = vector.shape_cast %215 : vector<1x8x128xf32> to vector<8x128xf32>
    %217 = vector.shape_cast %213 : vector<8x128xf32> to vector<1x8x128xf32>
    tpu.vector_store %arg6[%214, %c0_58, %c0_59], %217 {strides = array<i32>} : memref<8x8x128xf32, #tpu.memory_space<vmem>>, vector<1x8x128xf32>,
    %c6_i32 = arith.constant 6 : i32
    %218 = arith.index_cast %c6_i32 : i32 to index
    %c0_60 = arith.constant 0 : index
    %c0_61 = arith.constant 0 : index
    %219 = vector.load %arg1[%218, %c0_60, %c0_61] : memref<8x8x512xf32, #tpu.memory_space<vmem>>, vector<1x8x512xf32>
    %220 = vector.shape_cast %219 : vector<1x8x512xf32> to vector<8x512xf32>
    %221 = arith.truncf %213 : vector<8x128xf32> to vector<8x128xbf16>
    %c0_62 = arith.constant 0 : index
    %c0_63 = arith.constant 0 : index
    %222 = vector.load %arg2[%c0_62, %c0_63] : memref<128x512xbf16, #tpu.memory_space<vmem>>, vector<128x512xbf16>
    %cst_64 = arith.constant dense<0.000000e+00> : vector<8x512xf32>
    %223 = tpu.matmul %221, %222, %cst_64 {dimension_numbers = #tpu.dot_dimension_numbers<[1], [0], [0], [1], [0, 0, 1, 1], [], []>} : vector<8x128xbf16>, vector<128x512xbf16>, vector<8x512xf32> -> vector<8x512xf32>
    %224 = arith.addf %220, %223 : vector<8x512xf32>
    %225 = vector.extract_strided_slice %224 {offsets = [0, 0], sizes = [8, 128], strides = [1, 1]} : vector<8x512xf32> to vector<8x128xf32>
    %226 = arith.negf %225 : vector<8x128xf32>
    %227 = math.exp %226 : vector<8x128xf32>
    %cst_65 = arith.constant 1.000000e+00 : f32
    %228 = vector.broadcast %cst_65 : f32 to vector<8x128xf32>
    %229 = arith.addf %228, %227 : vector<8x128xf32>
    %230 = arith.divf %228, %229 : vector<8x128xf32>
    %231 = vector.extract_strided_slice %224 {offsets = [0, 128], sizes = [8, 128], strides = [1, 1]} : vector<8x512xf32> to vector<8x128xf32>
    %232 = arith.negf %231 : vector<8x128xf32>
    %233 = math.exp %232 : vector<8x128xf32>
    %cst_66 = arith.constant 1.000000e+00 : f32
    %234 = vector.broadcast %cst_66 : f32 to vector<8x128xf32>
    %235 = arith.addf %234, %233 : vector<8x128xf32>
    %236 = arith.divf %234, %235 : vector<8x128xf32>
    %237 = vector.extract_strided_slice %224 {offsets = [0, 256], sizes = [8, 128], strides = [1, 1]} : vector<8x512xf32> to vector<8x128xf32>
    %238 = math.tanh %237 : vector<8x128xf32>
    %239 = vector.extract_strided_slice %224 {offsets = [0, 384], sizes = [8, 128], strides = [1, 1]} : vector<8x512xf32> to vector<8x128xf32>
    %240 = arith.negf %239 : vector<8x128xf32>
    %241 = math.exp %240 : vector<8x128xf32>
    %cst_67 = arith.constant 1.000000e+00 : f32
    %242 = vector.broadcast %cst_67 : f32 to vector<8x128xf32>
    %243 = arith.addf %242, %241 : vector<8x128xf32>
    %244 = arith.divf %242, %243 : vector<8x128xf32>
    %245 = arith.mulf %236, %211 : vector<8x128xf32>
    %246 = arith.mulf %230, %238 : vector<8x128xf32>
    %247 = arith.addf %245, %246 : vector<8x128xf32>
    %248 = math.tanh %247 : vector<8x128xf32>
    %249 = arith.mulf %244, %248 : vector<8x128xf32>
    %250 = arith.index_cast %c6_i32 : i32 to index
    %c0_68 = arith.constant 0 : index
    %c0_69 = arith.constant 0 : index
    %251 = vector.load %arg6[%250, %c0_68, %c0_69] : memref<8x8x128xf32, #tpu.memory_space<vmem>>, vector<1x8x128xf32>
    %252 = vector.shape_cast %251 : vector<1x8x128xf32> to vector<8x128xf32>
    %253 = vector.shape_cast %249 : vector<8x128xf32> to vector<1x8x128xf32>
    tpu.vector_store %arg6[%250, %c0_68, %c0_69], %253 {strides = array<i32>} : memref<8x8x128xf32, #tpu.memory_space<vmem>>, vector<1x8x128xf32>,
    %c7_i32 = arith.constant 7 : i32
    %254 = arith.index_cast %c7_i32 : i32 to index
    %c0_70 = arith.constant 0 : index
    %c0_71 = arith.constant 0 : index
    %255 = vector.load %arg1[%254, %c0_70, %c0_71] : memref<8x8x512xf32, #tpu.memory_space<vmem>>, vector<1x8x512xf32>
    %256 = vector.shape_cast %255 : vector<1x8x512xf32> to vector<8x512xf32>
    %257 = arith.truncf %249 : vector<8x128xf32> to vector<8x128xbf16>
    %c0_72 = arith.constant 0 : index
    %c0_73 = arith.constant 0 : index
    %258 = vector.load %arg2[%c0_72, %c0_73] : memref<128x512xbf16, #tpu.memory_space<vmem>>, vector<128x512xbf16>
    %cst_74 = arith.constant dense<0.000000e+00> : vector<8x512xf32>
    %259 = tpu.matmul %257, %258, %cst_74 {dimension_numbers = #tpu.dot_dimension_numbers<[1], [0], [0], [1], [0, 0, 1, 1], [], []>} : vector<8x128xbf16>, vector<128x512xbf16>, vector<8x512xf32> -> vector<8x512xf32>
    %260 = arith.addf %256, %259 : vector<8x512xf32>
    %261 = vector.extract_strided_slice %260 {offsets = [0, 0], sizes = [8, 128], strides = [1, 1]} : vector<8x512xf32> to vector<8x128xf32>
    %262 = arith.negf %261 : vector<8x128xf32>
    %263 = math.exp %262 : vector<8x128xf32>
    %cst_75 = arith.constant 1.000000e+00 : f32
    %264 = vector.broadcast %cst_75 : f32 to vector<8x128xf32>
    %265 = arith.addf %264, %263 : vector<8x128xf32>
    %266 = arith.divf %264, %265 : vector<8x128xf32>
    %267 = vector.extract_strided_slice %260 {offsets = [0, 128], sizes = [8, 128], strides = [1, 1]} : vector<8x512xf32> to vector<8x128xf32>
    %268 = arith.negf %267 : vector<8x128xf32>
    %269 = math.exp %268 : vector<8x128xf32>
    %cst_76 = arith.constant 1.000000e+00 : f32
    %270 = vector.broadcast %cst_76 : f32 to vector<8x128xf32>
    %271 = arith.addf %270, %269 : vector<8x128xf32>
    %272 = arith.divf %270, %271 : vector<8x128xf32>
    %273 = vector.extract_strided_slice %260 {offsets = [0, 256], sizes = [8, 128], strides = [1, 1]} : vector<8x512xf32> to vector<8x128xf32>
    %274 = math.tanh %273 : vector<8x128xf32>
    %275 = vector.extract_strided_slice %260 {offsets = [0, 384], sizes = [8, 128], strides = [1, 1]} : vector<8x512xf32> to vector<8x128xf32>
    %276 = arith.negf %275 : vector<8x128xf32>
    %277 = math.exp %276 : vector<8x128xf32>
    %cst_77 = arith.constant 1.000000e+00 : f32
    %278 = vector.broadcast %cst_77 : f32 to vector<8x128xf32>
    %279 = arith.addf %278, %277 : vector<8x128xf32>
    %280 = arith.divf %278, %279 : vector<8x128xf32>
    %281 = arith.mulf %272, %247 : vector<8x128xf32>
    %282 = arith.mulf %266, %274 : vector<8x128xf32>
    %283 = arith.addf %281, %282 : vector<8x128xf32>
    %284 = math.tanh %283 : vector<8x128xf32>
    %285 = arith.mulf %280, %284 : vector<8x128xf32>
    %286 = arith.index_cast %c7_i32 : i32 to index
    %c0_78 = arith.constant 0 : index
    %c0_79 = arith.constant 0 : index
    %287 = vector.load %arg6[%286, %c0_78, %c0_79] : memref<8x8x128xf32, #tpu.memory_space<vmem>>, vector<1x8x128xf32>
    %288 = vector.shape_cast %287 : vector<1x8x128xf32> to vector<8x128xf32>
    %289 = vector.shape_cast %285 : vector<8x128xf32> to vector<1x8x128xf32>
    tpu.vector_store %arg6[%286, %c0_78, %c0_79], %289 {strides = array<i32>} : memref<8x8x128xf32, #tpu.memory_space<vmem>>, vector<1x8x128xf32>,
    %c8_i32 = arith.constant 8 : i32
    %c0_80 = arith.constant 0 : index
    %c0_81 = arith.constant 0 : index
    %c0_82 = arith.constant 0 : index
    %290 = vector.load %arg6[%c0_80, %c0_81, %c0_82] : memref<8x8x128xf32, #tpu.memory_space<vmem>>, vector<8x8x128xf32>
    %291 = vector.shape_cast %290 : vector<8x8x128xf32> to vector<64x128xf32>
    %292 = arith.truncf %291 : vector<64x128xf32> to vector<64x128xbf16>
    %c0_83 = arith.constant 0 : index
    %c0_84 = arith.constant 0 : index
    %293 = vector.load %arg3[%c0_83, %c0_84] : memref<128x256xbf16, #tpu.memory_space<vmem>>, vector<128x256xbf16>
    %cst_85 = arith.constant dense<0.000000e+00> : vector<64x256xf32>
    %294 = tpu.matmul %292, %293, %cst_85 {dimension_numbers = #tpu.dot_dimension_numbers<[1], [0], [0], [1], [0, 0, 1, 1], [], []>} : vector<64x128xbf16>, vector<128x256xbf16>, vector<64x256xf32> -> vector<64x256xf32>
    %c0_86 = arith.constant 0 : index
    %c0_87 = arith.constant 0 : index
    %295 = vector.load %arg4[%c0_86, %c0_87] : memref<1x256xf32, #tpu.memory_space<vmem>>, vector<1x256xf32>
    %296 = vector.broadcast %295 : vector<1x256xf32> to vector<64x256xf32>
    %297 = arith.addf %294, %296 : vector<64x256xf32>
    %298 = vector.shape_cast %297 : vector<64x256xf32> to vector<8x8x256xf32>
    %c0_88 = arith.constant 0 : index
    %c0_89 = arith.constant 0 : index
    %c0_90 = arith.constant 0 : index
    %299 = vector.load %arg5[%c0_88, %c0_89, %c0_90] : memref<8x8x256xf32, #tpu.memory_space<vmem>>, vector<8x8x256xf32>
    tpu.vector_store %arg5[%c0_88, %c0_89, %c0_90], %298 {strides = array<i32>} : memref<8x8x256xf32, #tpu.memory_space<vmem>>, vector<8x8x256xf32>,
    return
  }
  func.func @transform_0(%arg0: i32) -> (i32, i32, i32) {
    %c0_i32 = arith.constant 0 : i32
    %c0_i32_0 = arith.constant 0 : i32
    %c0_i32_1 = arith.constant 0 : i32
    %c0_i32_2 = arith.constant 0 : i32
    return %c0_i32, %c0_i32_0, %c0_i32_1 : i32, i32, i32
  }
  func.func @transform_1(%arg0: i32) -> (i32, i32) {
    %c0_i32 = arith.constant 0 : i32
    %c0_i32_0 = arith.constant 0 : i32
    %c0_i32_1 = arith.constant 0 : i32
    return %c0_i32, %c0_i32_0 : i32, i32
  }
  func.func @transform_2(%arg0: i32) -> (i32, i32) {
    %c0_i32 = arith.constant 0 : i32
    %c0_i32_0 = arith.constant 0 : i32
    %c0_i32_1 = arith.constant 0 : i32
    return %c0_i32, %c0_i32_0 : i32, i32
  }
  func.func @transform_3(%arg0: i32) -> (i32, i32) {
    %c0_i32 = arith.constant 0 : i32
    %c0_i32_0 = arith.constant 0 : i32
    %c0_i32_1 = arith.constant 0 : i32
    return %c0_i32, %c0_i32_0 : i32, i32
  }
  func.func @transform_4(%arg0: i32) -> (i32, i32, i32) {
    %c0_i32 = arith.constant 0 : i32
    %c0_i32_0 = arith.constant 0 : i32
    %c0_i32_1 = arith.constant 0 : i32
    %c0_i32_2 = arith.constant 0 : i32
    return %c0_i32, %c0_i32_0, %c0_i32_1 : i32, i32, i32
  }
}

</mosaic_0001>

<llo_original>
// kernel: decoder_forward.2
$region0: #{decoder_forward.2}
  #allocation0 [shape = 'u32[]', space=smem, size = 0x4, offset = 0x4, fixed_abs, tag = 'smem constant byte address 0x4 - core index']
  #allocation1 [shape = 'u32[72,128]{1,0:T(1,128)}', space=vmem, size = 0x9000, scoped, tag = 'internal scratch']
  %s0 = inlined_call_operand.vmem [shape: s32[64,1], index: 0, kind: input, shape index: {}]
  %s1 = inlined_call_operand.vmem [shape: f32[8,128], index: 1, kind: input, shape index: {}]
  %s2 = inlined_call_operand.hbm [shape: bf16[256,128], index: 2, kind: input, shape index: {}]
  %s3 = inlined_call_operand.hbm [shape: bf16[128,512], index: 3, kind: input, shape index: {}]
  %s4 = inlined_call_operand.vmem [shape: f32[1,512], index: 4, kind: input, shape index: {}]
  %s5 = inlined_call_operand.vmem [shape: f32[64,512], index: 5, kind: output, shape index: {}]
  %s6 = sld [smem:[#allocation0]]
  $region65: #{decoder_forward.2} parent=0
    _
  %s8 = ssub.s32 1, %s6
  %s9 = scalar_select 0, %s8, %s6
  $region1: #{decoder_forward.2} parent=0
    #allocation2 [shape = 'u8[65536]{0}', space=vmem, size = 0x10000, scoped, tag = 'input window, operand 2, single buffered']
    #allocation3 [shape = 's32[2]{0}', space=sflag, size = 0x8, scoped, tag = 'scoped memory for decoder_forward.2']
    #allocation4 [shape = 'u8[131072]{0}', space=vmem, size = 0x20000, scoped, tag = 'input window, operand 3, single buffered']
    #allocation5 [shape = 's32[1]{0}', space=sflag, size = 0x4, scoped, tag = 'scoped memory for decoder_forward.2']
    %10 = vsyncpa [#allocation3], 0
    %11 = vsyncpa [#allocation5], 0
    loop: start=0, step=1, limit=4
    $region2: #{decoder_forward.2} parent=1 // loop_pre_header
      _
    $region3: #{decoder_forward.2} parent=1 // loop_header
      %s13 = sphi 0, %s17
      %p14 = scmp.ge.s32.totalorder %s13, 4
      %s23 = sphi 0, %s25
      %s26 = sphi 0, %s23
      %s27 = sphi 0, %s26
      %s43 = sphi 0, %s27
      %s47 = sphi 0, %s47
      %s49 = sphi 0, %s47
      %s50 = sphi 0, %s49
      %s64 = sphi 0, %s50
      %s68 = sphi 0, %s68
      %s70 = sphi 0, %s68
      %s71 = sphi 0, %s70
      %s85 = sphi 0, %s71
      %s89 = sphi 0, %s89
      %s91 = sphi 0, %s89
      %s92 = sphi 0, %s91
      %s106 = sphi 0, %s92
      %s110 = sphi 0, %s110
      %s112 = sphi 0, %s110
      %s113 = sphi 0, %s112
      %s127 = sphi 0, %s113
      %s133 = sphi 0, %s135
      %s136 = sphi 0, %s133
      %s137 = sphi 0, %s136
      %s153 = sphi 0, %s137
    $region4: #{decoder_forward.2} parent=1 // loop_header_branch
      %16 = sbr.rel (%p14) target = $region8
    $region5: #{decoder_forward.2} parent=1 // loop_body
      %s18 = ssub.s32 %s13, 1
      %s19 = ssub.s32 %s13, 2
      %s20 = sadd.s32 %s13, 1
      %s21 = ssub.s32 %s13, %s20
      %p22 = scmp.eq.s32.totalorder %s21, 0
      %s24 = sadd.s32 %s23, 1
      %s25 = scalar_select %p22, %s23, %s24
      %p28 = pneg %p22
      %p29 = scmp.eq.s32.totalorder %s13, 1
      %p30 = por %p28, %p29
      %p31 = scmp.ne.s32.totalorder %s23, %s26
      %p32 = scmp.eq.s32.totalorder %s13, 0
      %p33 = por %p31, %p32
      %p34 = scmp.ne.s32.totalorder %s23, %s26
      %p35 = scmp.eq.s32.totalorder %s18, 1
      %p36 = por %p34, %p35
      %p37 = scmp.ne.s32.totalorder %s26, %s27
      %p38 = scmp.eq.s32.totalorder %s18, 0
      %p39 = por %p37, %p38
      %p40 = scmp.ne.s32.totalorder %s26, %s27
      %p41 = scmp.eq.s32.totalorder %s19, 1
      %p42 = por %p40, %p41
      %p44 = scmp.ne.s32.totalorder %s27, %s43
      %p45 = scmp.eq.s32.totalorder %s19, 0
      %p46 = por %p44, %p45
      %s48 = sadd.s32 %s47, 1
      %p51 = scmp.eq.s32.totalorder %s13, 1
      %p52 = scmp.ne.s32.totalorder %s47, %s49
      %p53 = scmp.eq.s32.totalorder %s13, 0
      %p54 = por %p52, %p53
      %p55 = scmp.ne.s32.totalorder %s47, %s49
      %p56 = scmp.eq.s32.totalorder %s18, 1
      %p57 = por %p55, %p56
      %p58 = scmp.ne.s32.totalorder %s49, %s50
      %p59 = scmp.eq.s32.totalorder %s18, 0
      %p60 = por %p58, %p59
      %p61 = scmp.ne.s32.totalorder %s49, %s50
      %p62 = scmp.eq.s32.totalorder %s19, 1
      %p63 = por %p61, %p62
      %p65 = scmp.ne.s32.totalorder %s50, %s64
      %p66 = scmp.eq.s32.totalorder %s19, 0
      %p67 = por %p65, %p66
      %s69 = sadd.s32 %s68, 1
      %p72 = scmp.eq.s32.totalorder %s13, 1
      %p73 = scmp.ne.s32.totalorder %s68, %s70
      %p74 = scmp.eq.s32.totalorder %s13, 0
      %p75 = por %p73, %p74
      %p76 = scmp.ne.s32.totalorder %s68, %s70
      %p77 = scmp.eq.s32.totalorder %s18, 1
      %p78 = por %p76, %p77
      %p79 = scmp.ne.s32.totalorder %s70, %s71
      %p80 = scmp.eq.s32.totalorder %s18, 0
      %p81 = por %p79, %p80
      %p82 = scmp.ne.s32.totalorder %s70, %s71
      %p83 = scmp.eq.s32.totalorder %s19, 1
      %p84 = por %p82, %p83
      %p86 = scmp.ne.s32.totalorder %s71, %s85
      %p87 = scmp.eq.s32.totalorder %s19, 0
      %p88 = por %p86, %p87
      %s90 = sadd.s32 %s89, 1
      %p93 = scmp.eq.s32.totalorder %s13, 1
      %p94 = scmp.ne.s32.totalorder %s89, %s91
      %p95 = scmp.eq.s32.totalorder %s13, 0
      %p96 = por %p94, %p95
      %p97 = scmp.ne.s32.totalorder %s89, %s91
      %p98 = scmp.eq.s32.totalorder %s18, 1
      %p99 = por %p97, %p98
      %p100 = scmp.ne.s32.totalorder %s91, %s92
      %p101 = scmp.eq.s32.totalorder %s18, 0
      %p102 = por %p100, %p101
      %p103 = scmp.ne.s32.totalorder %s91, %s92
      %p104 = scmp.eq.s32.totalorder %s19, 1
      %p105 = por %p103, %p104
      %p107 = scmp.ne.s32.totalorder %s92, %s106
      %p108 = scmp.eq.s32.totalorder %s19, 0
      %p109 = por %p107, %p108
      %s111 = sadd.s32 %s110, 1
      %p114 = scmp.eq.s32.totalorder %s13, 1
      %p115 = scmp.ne.s32.totalorder %s110, %s112
      %p116 = scmp.eq.s32.totalorder %s13, 0
      %p117 = por %p115, %p116
      %p118 = scmp.ne.s32.totalorder %s110, %s112
      %p119 = scmp.eq.s32.totalorder %s18, 1
      %p120 = por %p118, %p119
      %p121 = scmp.ne.s32.totalorder %s112, %s113
      %p122 = scmp.eq.s32.totalorder %s18, 0
      %p123 = por %p121, %p122
      %p124 = scmp.ne.s32.totalorder %s112, %s113
      %p125 = scmp.eq.s32.totalorder %s19, 1
      %p126 = por %p124, %p125
      %p128 = scmp.ne.s32.totalorder %s113, %s127
      %p129 = scmp.eq.s32.totalorder %s19, 0
      %p130 = por %p128, %p129
      %s131 = ssub.s32 %s13, %s20
      %p132 = scmp.eq.s32.totalorder %s131, 0
      %s134 = sadd.s32 %s133, 1
      %s135 = scalar_select %p132, %s133, %s134
      %p138 = pneg %p132
      %p139 = scmp.eq.s32.totalorder %s13, 1
      %p140 = por %p138, %p139
      %p141 = scmp.ne.s32.totalorder %s133, %s136
      %p142 = scmp.eq.s32.totalorder %s13, 0
      %p143 = por %p141, %p142
      %p144 = scmp.ne.s32.totalorder %s133, %s136
      %p145 = scmp.eq.s32.totalorder %s18, 1
      %p146 = por %p144, %p145
      %p147 = scmp.ne.s32.totalorder %s136, %s137
      %p148 = scmp.eq.s32.totalorder %s18, 0
      %p149 = por %p147, %p148
      %p150 = scmp.ne.s32.totalorder %s136, %s137
      %p151 = scmp.eq.s32.totalorder %s19, 1
      %p152 = por %p150, %p151
      %p154 = scmp.ne.s32.totalorder %s137, %s153
      %p155 = scmp.eq.s32.totalorder %s19, 0
      %p156 = por %p154, %p155
      %p157 = scmp.le.s32.totalorder 1, %s13
      %p158 = scmp.lt.s32.totalorder %s13, 3
      %p159 = pnand %p157, %p158
      %p160 = pneg %p159
      // Predicated region
      $region9: #{decoder_forward.2} parent=5 // pred_check
        _
      $region10: #{decoder_forward.2} parent=5 // pred_check_branch
        %162 = sbr.rel (%p159) target = $region12
      $region11: #{decoder_forward.2} parent=5 // pred_region
        %s163 = ssub.s32 %s13, 1
        // Predicated region
        $region13: #{decoder_forward.2} parent=11 // pred_check
          %p164 = pneg %p60
        $region14: #{decoder_forward.2} parent=11 // pred_check_branch
          %166 = sbr.rel (%p164) target = $region16
        $region15: #{decoder_forward.2} parent=11 // pred_region
          _
        $region16: #{decoder_forward.2} parent=11 // pred_fallthru
          _
        // Predicated region
        $region17: #{decoder_forward.2} parent=11 // pred_check
          %p167 = pneg %p81
        $region18: #{decoder_forward.2} parent=11 // pred_check_branch
          %169 = sbr.rel (%p167) target = $region20
        $region19: #{decoder_forward.2} parent=11 // pred_region
          %171 = vsyncadd [#allocation3], 0
          %s172 = sshll.u32 %s2, 4
          %s173 = int_to_ptr.hbm [resolvable:$true] %s172
          %s174 = sshll.u32 [#allocation2], 4
          %s175 = int_to_ptr.vmem [resolvable:$true] %s174
          %180 = dma.hbm_to_vmem [thread:$0]  %s173, 2048, %s175, [#allocation3], 64, 64, 4
        $region20: #{decoder_forward.2} parent=11 // pred_fallthru
          _
        // Predicated region
        $region21: #{decoder_forward.2} parent=11 // pred_check
          %p181 = pneg %p102
        $region22: #{decoder_forward.2} parent=11 // pred_check_branch
          %183 = sbr.rel (%p181) target = $region24
        $region23: #{decoder_forward.2} parent=11 // pred_region
          %185 = vsyncadd [#allocation5], 0
          %s186 = sshll.u32 %s3, 4
          %s187 = int_to_ptr.hbm [resolvable:$true] %s186
          %s188 = sshll.u32 [#allocation4], 4
          %s189 = int_to_ptr.vmem [resolvable:$true] %s188
          %194 = dma.hbm_to_vmem [thread:$0]  %s187, 4096, %s189, [#allocation5], 256, 256, 16
        $region24: #{decoder_forward.2} parent=11 // pred_fallthru
          _
        // Predicated region
        $region25: #{decoder_forward.2} parent=11 // pred_check
          %p195 = pneg %p123
        $region26: #{decoder_forward.2} parent=11 // pred_check_branch
          %197 = sbr.rel (%p195) target = $region28
        $region27: #{decoder_forward.2} parent=11 // pred_region
          _
        $region28: #{decoder_forward.2} parent=11 // pred_fallthru
          _
      $region12: #{decoder_forward.2} parent=5 // pred_fallthru
        _
      %p198 = scmp.lt.s32.totalorder %s13, 2
      // Predicated region
      $region29: #{decoder_forward.2} parent=5 // pred_check
        %p199 = pneg %p198
      $region30: #{decoder_forward.2} parent=5 // pred_check_branch
        %201 = sbr.rel (%p199) target = $region32
      $region31: #{decoder_forward.2} parent=5 // pred_region
        // Predicated region
        $region33: #{decoder_forward.2} parent=31 // pred_check
          %p202 = pneg %p33
        $region34: #{decoder_forward.2} parent=31 // pred_check_branch
          %204 = sbr.rel (%p202) target = $region36
        $region35: #{decoder_forward.2} parent=31 // pred_region
          %s205 = smul.u32 4, %s13
          %p206 = scmp.lt.s32.totalorder %s205, 7
          %s207 = scalar_select %p206, %s205, 7
          %s208 = smul.addr %s207, 8
          %s209 = scalar_lea.vmem %s0, %s208
          %s210 = smul.u32 4, %s13
        $region36: #{decoder_forward.2} parent=31 // pred_fallthru
          _
      $region32: #{decoder_forward.2} parent=5 // pred_fallthru
        _
      %p211 = scmp.le.s32.totalorder 1, %s13
      %p212 = scmp.lt.s32.totalorder %s13, 3
      %p213 = pnand %p211, %p212
      %p214 = pneg %p213
      // Predicated region
      $region37: #{decoder_forward.2} parent=5 // pred_check
        _
      $region38: #{decoder_forward.2} parent=5 // pred_check_branch
        %216 = sbr.rel (%p213) target = $region40
      $region39: #{decoder_forward.2} parent=5 // pred_region
        %s217 = ssub.s32 %s13, 1
        // Predicated region
        $region41: #{decoder_forward.2} parent=39 // pred_check
          %p218 = pneg %p81
        $region42: #{decoder_forward.2} parent=39 // pred_check_branch
          %220 = sbr.rel (%p218) target = $region44
        $region43: #{decoder_forward.2} parent=39 // pred_region
          %222 = dma.done [#allocation3], 2048
        $region44: #{decoder_forward.2} parent=39 // pred_fallthru
          _
        // Predicated region
        $region45: #{decoder_forward.2} parent=39 // pred_check
          %p223 = pneg %p102
        $region46: #{decoder_forward.2} parent=39 // pred_check_branch
          %225 = sbr.rel (%p223) target = $region48
        $region47: #{decoder_forward.2} parent=39 // pred_region
          %227 = dma.done [#allocation5], 4096
        $region48: #{decoder_forward.2} parent=39 // pred_fallthru
          _
        %s228 = smul.u32 4, %s18
        %p229 = scmp.lt.s32.totalorder %s228, 7
        %s230 = scalar_select %p229, %s228, 7
        %s231 = smul.addr %s230, 8
        %s232 = scalar_lea.vmem %s0, %s231
        %p233 = pneg %p39
        %p234 = pneg %p36
        %p235 = pneg %p60
        %p236 = pneg %p57
        %p237 = pneg %p81
        %p238 = pneg %p78
        %p239 = pneg %p102
        %p240 = pneg %p99
        %p241 = pneg %p123
        %p242 = pneg %p120
        %p243 = pneg %p149
        %p244 = pneg %p146
        %s245 = smul.u32 4, %s18
        %p246 = scmp.lt.s32.totalorder %s245, 7
        %s247 = scalar_select %p246, %s245, 7
        %s248 = smul.addr %s247, 4
        %s249 = smul.addr %s248, 8
        %s250 = scalar_lea.vmem %s5, %s249
        %s251 = smul.u32 4, %s18
        %p252 = scmp.lt.s32.totalorder %s251, 7
        %s253 = scalar_select %p252, %s251, 7
        %s254 = smul.addr %s253, 8
        %s255 = scalar_lea.vmem %s0, %s254
        %s256 = smul.u32 4, %s18
        %s257 = smul.u32 4, %s18
        %p258 = scmp.lt.s32.totalorder %s257, 7
        %s259 = scalar_select %p258, %s257, 7
        %s260 = smul.addr %s259, 4
        %s261 = smul.addr %s260, 8
        %s262 = scalar_lea.vmem %s5, %s261
        %s263 = smul.u32 4, %s18
        %v264 = vld [vmem:[%s255] sm:$0xff]
        %v265 = vld [vmem:[%s255 + $0x8] sm:$0xff]
        %v266 = vld [vmem:[%s255 + $0x10] sm:$0xff]
        %v267 = vld [vmem:[%s255 + $0x18] sm:$0xff]
        %v268 = vlaneseq
        %v269 = vand.u32 %v268, 127
        %v270 = vadd.s32 %v269, 128
        %271 = vset.pattern.permute.xlu0 0
        %272 = vperm.xlu0 %271, %v264
        %v273 = vpop.permute.xlu0 %272
        %274 = vset.pattern.permute.xlu0 0
        %275 = vperm.xlu0 %274, %v265
        %v276 = vpop.permute.xlu0 %275
        %277 = vset.pattern.permute.xlu0 0
        %278 = vperm.xlu0 %277, %v266
        %v279 = vpop.permute.xlu0 %278
        %280 = vset.pattern.permute.xlu0 0
        %281 = vperm.xlu0 %280, %v267
        %v282 = vpop.permute.xlu0 %281
        %vm283 = vcmp.eq.s32.totalorder %v269, %v273
        %vm284 = vcmp.eq.s32.totalorder %v270, %v273
        %vm285 = vcmp.eq.s32.totalorder %v269, %v276
        %vm286 = vcmp.eq.s32.totalorder %v270, %v276
        %vm287 = vcmp.eq.s32.totalorder %v269, %v279
        %vm288 = vcmp.eq.s32.totalorder %v270, %v279
        %vm289 = vcmp.eq.s32.totalorder %v269, %v282
        %vm290 = vcmp.eq.s32.totalorder %v270, %v282
        %v291 = vsel %vm283, 1, 0
        %v292 = vsel %vm284, 1, 0
        %v293 = vsel %vm285, 1, 0
        %v294 = vsel %vm286, 1, 0
        %v295 = vsel %vm287, 1, 0
        %v296 = vsel %vm288, 1, 0
        %v297 = vsel %vm289, 1, 0
        %v298 = vsel %vm290, 1, 0
        %v299 = vcvt.s32.f32 %v291
        %v300 = vcvt.s32.f32 %v292
        %v301 = vcvt.s32.f32 %v293
        %v302 = vcvt.s32.f32 %v294
        %v303 = vcvt.s32.f32 %v295
        %v304 = vcvt.s32.f32 %v296
        %v305 = vcvt.s32.f32 %v297
        %v306 = vcvt.s32.f32 %v298
        %v307 = vpack.c.bf16 %v301, %v299
        %v308 = vpack.c.bf16 %v302, %v300
        %v309 = vpack.c.bf16 %v305, %v303
        %v310 = vpack.c.bf16 %v306, %v304
        %v311 = vld [vmem:[#allocation2] sm:$0xf]
        %v312 = vld [vmem:[#allocation2 + $0x4] sm:$0xf]
        %v313 = vld [vmem:[#allocation2 + $0x8] sm:$0xf]
        %v314 = vld [vmem:[#allocation2 + $0xc] sm:$0xf]
        %v315 = vld [vmem:[#allocation2 + $0x10] sm:$0xf]
        %v316 = vld [vmem:[#allocation2 + $0x14] sm:$0xf]
        %v317 = vld [vmem:[#allocation2 + $0x18] sm:$0xf]
        %v318 = vld [vmem:[#allocation2 + $0x1c] sm:$0xf]
        %v319 = vld [vmem:[#allocation2 + $0x20] sm:$0xf]
        %v320 = vld [vmem:[#allocation2 + $0x24] sm:$0xf]
        %v321 = vld [vmem:[#allocation2 + $0x28] sm:$0xf]
        %v322 = vld [vmem:[#allocation2 + $0x2c] sm:$0xf]
        %v323 = vld [vmem:[#allocation2 + $0x30] sm:$0xf]
        %v324 = vld [vmem:[#allocation2 + $0x34] sm:$0xf]
        %v325 = vld [vmem:[#allocation2 + $0x38] sm:$0xf]
        %v326 = vld [vmem:[#allocation2 + $0x3c] sm:$0xf]
        %v327 = vld [vmem:[#allocation2 + $0x40] sm:$0xf]
        %v328 = vld [vmem:[#allocation2 + $0x44] sm:$0xf]
        %v329 = vld [vmem:[#allocation2 + $0x48] sm:$0xf]
        %v330 = vld [vmem:[#allocation2 + $0x4c] sm:$0xf]
        %v331 = vld [vmem:[#allocation2 + $0x50] sm:$0xf]
        %v332 = vld [vmem:[#allocation2 + $0x54] sm:$0xf]
        %v333 = vld [vmem:[#allocation2 + $0x58] sm:$0xf]
        %v334 = vld [vmem:[#allocation2 + $0x5c] sm:$0xf]
        %v335 = vld [vmem:[#allocation2 + $0x60] sm:$0xf]
        %v336 = vld [vmem:[#allocation2 + $0x64] sm:$0xf]
        %v337 = vld [vmem:[#allocation2 + $0x68] sm:$0xf]
        %v338 = vld [vmem:[#allocation2 + $0x6c] sm:$0xf]
        %v339 = vld [vmem:[#allocation2 + $0x70] sm:$0xf]
        %v340 = vld [vmem:[#allocation2 + $0x74] sm:$0xf]
        %v341 = vld [vmem:[#allocation2 + $0x78] sm:$0xf]
        %v342 = vld [vmem:[#allocation2 + $0x7c] sm:$0xf]
        %v375 = vunpack.c.l.b16 %v311
        %v376 = vunpack.c.l.b16 %v312
        %v377 = vunpack.c.l.b16 %v313
        %v378 = vunpack.c.l.b16 %v314
        %v379 = vunpack.c.l.b16 %v315
        %v380 = vunpack.c.l.b16 %v316
        %v381 = vunpack.c.l.b16 %v317
        %v382 = vunpack.c.l.b16 %v318
        %v383 = vunpack.c.l.b16 %v319
        %v384 = vunpack.c.l.b16 %v320
        %v385 = vunpack.c.l.b16 %v321
        %v386 = vunpack.c.l.b16 %v322
        %v387 = vunpack.c.l.b16 %v323
        %v388 = vunpack.c.l.b16 %v324
        %v389 = vunpack.c.l.b16 %v325
        %v390 = vunpack.c.l.b16 %v326
        %v391 = vunpack.c.l.b16 %v327
        %v392 = vunpack.c.l.b16 %v328
        %v393 = vunpack.c.l.b16 %v329
        %v394 = vunpack.c.l.b16 %v330
        %v395 = vunpack.c.l.b16 %v331
        %v396 = vunpack.c.l.b16 %v332
        %v397 = vunpack.c.l.b16 %v333
        %v398 = vunpack.c.l.b16 %v334
        %v399 = vunpack.c.l.b16 %v335
        %v400 = vunpack.c.l.b16 %v336
        %v401 = vunpack.c.l.b16 %v337
        %v402 = vunpack.c.l.b16 %v338
        %v403 = vunpack.c.l.b16 %v339
        %v404 = vunpack.c.l.b16 %v340
        %v405 = vunpack.c.l.b16 %v341
        %v406 = vunpack.c.l.b16 %v342
        %v407 = vpack.c.b16 %v376, %v375
        %v408 = vpack.c.b16 %v378, %v377
        %v409 = vpack.c.b16 %v380, %v379
        %v410 = vpack.c.b16 %v382, %v381
        %v411 = vpack.c.b16 %v384, %v383
        %v412 = vpack.c.b16 %v386, %v385
        %v413 = vpack.c.b16 %v388, %v387
        %v414 = vpack.c.b16 %v390, %v389
        %v415 = vpack.c.b16 %v392, %v391
        %v416 = vpack.c.b16 %v394, %v393
        %v417 = vpack.c.b16 %v396, %v395
        %v418 = vpack.c.b16 %v398, %v397
        %v419 = vpack.c.b16 %v400, %v399
        %v420 = vpack.c.b16 %v402, %v401
        %v421 = vpack.c.b16 %v404, %v403
        %v422 = vpack.c.b16 %v406, %v405
        %439 = vmatpush.bf16.msra.mxu0 %v414
        %440 = vmatpush.bf16.msra.mxu0 %v413
        %441 = vmatpush.bf16.msra.mxu0 %v412
        %442 = vmatpush.bf16.msra.mxu0 %v411
        %443 = vmatpush.bf16.msra.mxu0 %v410
        %444 = vmatpush.bf16.msra.mxu0 %v409
        %445 = vmatpush.bf16.msra.mxu0 %v408
        %446 = vmatpush.bf16.msra.mxu0 %v407
        %447 = vmatmul.bf16.gmra.mxu0 %v307
        %v448 = vpop.f32.mrf.mxu0
        %v449 = vadd.f32 0.0, %v448
        %v450 = vpop.f32.mrf.mxu0
        %v451 = vadd.f32 0.0, %v450
        %452 = vmatmul.bf16.gmra.mxu0 %v309
        %v453 = vpop.f32.mrf.mxu0
        %v454 = vadd.f32 0.0, %v453
        %v455 = vpop.f32.mrf.mxu0
        %v456 = vadd.f32 0.0, %v455
        %457 = vdwg.mxu0
        %458 = vmatpush.bf16.msra.mxu0 %v422
        %459 = vmatpush.bf16.msra.mxu0 %v421
        %460 = vmatpush.bf16.msra.mxu0 %v420
        %461 = vmatpush.bf16.msra.mxu0 %v419
        %462 = vmatpush.bf16.msra.mxu0 %v418
        %463 = vmatpush.bf16.msra.mxu0 %v417
        %464 = vmatpush.bf16.msra.mxu0 %v416
        %465 = vmatpush.bf16.msra.mxu0 %v415
        %466 = vmatmul.bf16.gmra.mxu0 %v308
        %v467 = vpop.f32.mrf.mxu0
        %v468 = vadd.f32 %v449, %v467
        %v469 = vpop.f32.mrf.mxu0
        %v470 = vadd.f32 %v451, %v469
        %471 = vmatmul.bf16.gmra.mxu0 %v310
        %v472 = vpop.f32.mrf.mxu0
        %v473 = vadd.f32 %v454, %v472
        %v474 = vpop.f32.mrf.mxu0
        %v475 = vadd.f32 %v456, %v474
        %476 = vdwg.mxu0
        %v477 = vpack.c.bf16 %v470, %v468
        %v478 = vpack.c.bf16 %v475, %v473
        %v479 = vld [vmem:[#allocation4] sm:$0xff]
        %v480 = vld [vmem:[#allocation4 + $0x8] sm:$0xff]
        %v481 = vld [vmem:[#allocation4 + $0x10] sm:$0xff]
        %v482 = vld [vmem:[#allocation4 + $0x18] sm:$0xff]
        %v483 = vld [vmem:[#allocation4 + $0x20] sm:$0xff]
        %v484 = vld [vmem:[#allocation4 + $0x28] sm:$0xff]
        %v485 = vld [vmem:[#allocation4 + $0x30] sm:$0xff]
        %v486 = vld [vmem:[#allocation4 + $0x38] sm:$0xff]
        %v487 = vld [vmem:[#allocation4 + $0x40] sm:$0xff]
        %v488 = vld [vmem:[#allocation4 + $0x48] sm:$0xff]
        %v489 = vld [vmem:[#allocation4 + $0x50] sm:$0xff]
        %v490 = vld [vmem:[#allocation4 + $0x58] sm:$0xff]
        %v491 = vld [vmem:[#allocation4 + $0x60] sm:$0xff]
        %v492 = vld [vmem:[#allocation4 + $0x68] sm:$0xff]
        %v493 = vld [vmem:[#allocation4 + $0x70] sm:$0xff]
        %v494 = vld [vmem:[#allocation4 + $0x78] sm:$0xff]
        %v495 = vld [vmem:[#allocation4 + $0x80] sm:$0xff]
        %v496 = vld [vmem:[#allocation4 + $0x88] sm:$0xff]
        %v497 = vld [vmem:[#allocation4 + $0x90] sm:$0xff]
        %v498 = vld [vmem:[#allocation4 + $0x98] sm:$0xff]
        %v499 = vld [vmem:[#allocation4 + $0xa0] sm:$0xff]
        %v500 = vld [vmem:[#allocation4 + $0xa8] sm:$0xff]
        %v501 = vld [vmem:[#allocation4 + $0xb0] sm:$0xff]
        %v502 = vld [vmem:[#allocation4 + $0xb8] sm:$0xff]
        %v503 = vld [vmem:[#allocation4 + $0xc0] sm:$0xff]
        %v504 = vld [vmem:[#allocation4 + $0xc8] sm:$0xff]
        %v505 = vld [vmem:[#allocation4 + $0xd0] sm:$0xff]
        %v506 = vld [vmem:[#allocation4 + $0xd8] sm:$0xff]
        %v507 = vld [vmem:[#allocation4 + $0xe0] sm:$0xff]
        %v508 = vld [vmem:[#allocation4 + $0xe8] sm:$0xff]
        %v509 = vld [vmem:[#allocation4 + $0xf0] sm:$0xff]
        %v510 = vld [vmem:[#allocation4 + $0xf8] sm:$0xff]
        %v511 = vld [vmem:[%s4] sm:$0xf]
        %v513 = vperm.slane %v511, 0
        %v514 = vperm.slane %v511, 1
        %v515 = vperm.slane %v511, 2
        %v516 = vperm.slane %v511, 3
        %v553 = vunpack.c.l.b16 %v479
        %v554 = vunpack.c.h.b16 %v479
        %v555 = vunpack.c.l.b16 %v480
        %v556 = vunpack.c.h.b16 %v480
        %v557 = vunpack.c.l.b16 %v481
        %v558 = vunpack.c.h.b16 %v481
        %v559 = vunpack.c.l.b16 %v482
        %v560 = vunpack.c.h.b16 %v482
        %v561 = vunpack.c.l.b16 %v483
        %v562 = vunpack.c.h.b16 %v483
        %v563 = vunpack.c.l.b16 %v484
        %v564 = vunpack.c.h.b16 %v484
        %v565 = vunpack.c.l.b16 %v485
        %v566 = vunpack.c.h.b16 %v485
        %v567 = vunpack.c.l.b16 %v486
        %v568 = vunpack.c.h.b16 %v486
        %v569 = vunpack.c.l.b16 %v487
        %v570 = vunpack.c.h.b16 %v487
        %v571 = vunpack.c.l.b16 %v488
        %v572 = vunpack.c.h.b16 %v488
        %v573 = vunpack.c.l.b16 %v489
        %v574 = vunpack.c.h.b16 %v489
        %v575 = vunpack.c.l.b16 %v490
        %v576 = vunpack.c.h.b16 %v490
        %v577 = vunpack.c.l.b16 %v491
        %v578 = vunpack.c.h.b16 %v491
        %v579 = vunpack.c.l.b16 %v492
        %v580 = vunpack.c.h.b16 %v492
        %v581 = vunpack.c.l.b16 %v493
        %v582 = vunpack.c.h.b16 %v493
        %v583 = vunpack.c.l.b16 %v494
        %v584 = vunpack.c.h.b16 %v494
        %v585 = vunpack.c.l.b16 %v495
        %v586 = vunpack.c.h.b16 %v495
        %v587 = vunpack.c.l.b16 %v496
        %v588 = vunpack.c.h.b16 %v496
        %v589 = vunpack.c.l.b16 %v497
        %v590 = vunpack.c.h.b16 %v497
        %v591 = vunpack.c.l.b16 %v498
        %v592 = vunpack.c.h.b16 %v498
        %v593 = vunpack.c.l.b16 %v499
        %v594 = vunpack.c.h.b16 %v499
        %v595 = vunpack.c.l.b16 %v500
        %v596 = vunpack.c.h.b16 %v500
        %v597 = vunpack.c.l.b16 %v501
        %v598 = vunpack.c.h.b16 %v501
        %v599 = vunpack.c.l.b16 %v502
        %v600 = vunpack.c.h.b16 %v502
        %v601 = vunpack.c.l.b16 %v503
        %v602 = vunpack.c.h.b16 %v503
        %v603 = vunpack.c.l.b16 %v504
        %v604 = vunpack.c.h.b16 %v504
        %v605 = vunpack.c.l.b16 %v505
        %v606 = vunpack.c.h.b16 %v505
        %v607 = vunpack.c.l.b16 %v506
        %v608 = vunpack.c.h.b16 %v506
        %v609 = vunpack.c.l.b16 %v507
        %v610 = vunpack.c.h.b16 %v507
        %v611 = vunpack.c.l.b16 %v508
        %v612 = vunpack.c.h.b16 %v508
        %v613 = vunpack.c.l.b16 %v509
        %v614 = vunpack.c.h.b16 %v509
        %v615 = vunpack.c.l.b16 %v510
        %v616 = vunpack.c.h.b16 %v510
        %v617 = vpack.c.b16 %v557, %v553
        %v618 = vpack.c.b16 %v558, %v554
        %v619 = vpack.c.b16 %v559, %v555
        %v620 = vpack.c.b16 %v560, %v556
        %v621 = vpack.c.b16 %v565, %v561
        %v622 = vpack.c.b16 %v566, %v562
        %v623 = vpack.c.b16 %v567, %v563
        %v624 = vpack.c.b16 %v568, %v564
        %v625 = vpack.c.b16 %v573, %v569
        %v626 = vpack.c.b16 %v574, %v570
        %v627 = vpack.c.b16 %v575, %v571
        %v628 = vpack.c.b16 %v576, %v572
        %v629 = vpack.c.b16 %v581, %v577
        %v630 = vpack.c.b16 %v582, %v578
        %v631 = vpack.c.b16 %v583, %v579
        %v632 = vpack.c.b16 %v584, %v580
        %v633 = vpack.c.b16 %v589, %v585
        %v634 = vpack.c.b16 %v590, %v586
        %v635 = vpack.c.b16 %v591, %v587
        %v636 = vpack.c.b16 %v592, %v588
        %v637 = vpack.c.b16 %v597, %v593
        %v638 = vpack.c.b16 %v598, %v594
        %v639 = vpack.c.b16 %v599, %v595
        %v640 = vpack.c.b16 %v600, %v596
        %v641 = vpack.c.b16 %v605, %v601
        %v642 = vpack.c.b16 %v606, %v602
        %v643 = vpack.c.b16 %v607, %v603
        %v644 = vpack.c.b16 %v608, %v604
        %v645 = vpack.c.b16 %v613, %v609
        %v646 = vpack.c.b16 %v614, %v610
        %v647 = vpack.c.b16 %v615, %v611
        %v648 = vpack.c.b16 %v616, %v612
        %681 = vmatpush.bf16.msra.mxu0 %v645
        %682 = vmatpush.bf16.msra.mxu0 %v641
        %683 = vmatpush.bf16.msra.mxu0 %v637
        %684 = vmatpush.bf16.msra.mxu0 %v633
        %685 = vmatpush.bf16.msra.mxu0 %v629
        %686 = vmatpush.bf16.msra.mxu0 %v625
        %687 = vmatpush.bf16.msra.mxu0 %v621
        %688 = vmatpush.bf16.msra.mxu0 %v617
        %689 = vmatmul.bf16.gmra.mxu0 %v477
        %v690 = vpop.f32.mrf.mxu0
        %v691 = vadd.f32 %v513, %v690
        %v692 = vpop.f32.mrf.mxu0
        %v693 = vadd.f32 %v513, %v692
        %694 = vmatmul.bf16.gmra.mxu0 %v478
        %v695 = vpop.f32.mrf.mxu0
        %v696 = vadd.f32 %v513, %v695
        %v697 = vpop.f32.mrf.mxu0
        %v698 = vadd.f32 %v513, %v697
        %699 = vdwg.mxu0
        %700 = vmatpush.bf16.msra.mxu0 %v646
        %701 = vmatpush.bf16.msra.mxu0 %v642
        %702 = vmatpush.bf16.msra.mxu0 %v638
        %703 = vmatpush.bf16.msra.mxu0 %v634
        %704 = vmatpush.bf16.msra.mxu0 %v630
        %705 = vmatpush.bf16.msra.mxu0 %v626
        %706 = vmatpush.bf16.msra.mxu0 %v622
        %707 = vmatpush.bf16.msra.mxu0 %v618
        %708 = vmatmul.bf16.gmra.mxu0 %v477
        %v709 = vpop.f32.mrf.mxu0
        %v710 = vadd.f32 %v514, %v709
        %v711 = vpop.f32.mrf.mxu0
        %v712 = vadd.f32 %v514, %v711
        %713 = vmatmul.bf16.gmra.mxu0 %v478
        %v714 = vpop.f32.mrf.mxu0
        %v715 = vadd.f32 %v514, %v714
        %v716 = vpop.f32.mrf.mxu0
        %v717 = vadd.f32 %v514, %v716
        %718 = vdwg.mxu0
        %719 = vmatpush.bf16.msra.mxu0 %v647
        %720 = vmatpush.bf16.msra.mxu0 %v643
        %721 = vmatpush.bf16.msra.mxu0 %v639
        %722 = vmatpush.bf16.msra.mxu0 %v635
        %723 = vmatpush.bf16.msra.mxu0 %v631
        %724 = vmatpush.bf16.msra.mxu0 %v627
        %725 = vmatpush.bf16.msra.mxu0 %v623
        %726 = vmatpush.bf16.msra.mxu0 %v619
        %727 = vmatmul.bf16.gmra.mxu0 %v477
        %v728 = vpop.f32.mrf.mxu0
        %v729 = vadd.f32 %v515, %v728
        %v730 = vpop.f32.mrf.mxu0
        %v731 = vadd.f32 %v515, %v730
        %732 = vmatmul.bf16.gmra.mxu0 %v478
        %v733 = vpop.f32.mrf.mxu0
        %v734 = vadd.f32 %v515, %v733
        %v735 = vpop.f32.mrf.mxu0
        %v736 = vadd.f32 %v515, %v735
        %737 = vdwg.mxu0
        %738 = vmatpush.bf16.msra.mxu0 %v648
        %739 = vmatpush.bf16.msra.mxu0 %v644
        %740 = vmatpush.bf16.msra.mxu0 %v640
        %741 = vmatpush.bf16.msra.mxu0 %v636
        %742 = vmatpush.bf16.msra.mxu0 %v632
        %743 = vmatpush.bf16.msra.mxu0 %v628
        %744 = vmatpush.bf16.msra.mxu0 %v624
        %745 = vmatpush.bf16.msra.mxu0 %v620
        %746 = vmatmul.bf16.gmra.mxu0 %v477
        %v747 = vpop.f32.mrf.mxu0
        %v748 = vadd.f32 %v516, %v747
        %v749 = vpop.f32.mrf.mxu0
        %v750 = vadd.f32 %v516, %v749
        %751 = vmatmul.bf16.gmra.mxu0 %v478
        %v752 = vpop.f32.mrf.mxu0
        %v753 = vadd.f32 %v516, %v752
        %v754 = vpop.f32.mrf.mxu0
        %v755 = vadd.f32 %v516, %v754
        %756 = vdwg.mxu0
        %757 = vst [vmem:[%s262] sm:$0xff] %v691
        %758 = vst [vmem:[%s262 + $0x8] sm:$0xff] %v710
        %759 = vst [vmem:[%s262 + $0x10] sm:$0xff] %v729
        %760 = vst [vmem:[%s262 + $0x18] sm:$0xff] %v748
        %761 = vst [vmem:[%s262 + $0x20] sm:$0xff] %v693
        %762 = vst [vmem:[%s262 + $0x28] sm:$0xff] %v712
        %763 = vst [vmem:[%s262 + $0x30] sm:$0xff] %v731
        %764 = vst [vmem:[%s262 + $0x38] sm:$0xff] %v750
        %765 = vst [vmem:[%s262 + $0x40] sm:$0xff] %v696
        %766 = vst [vmem:[%s262 + $0x48] sm:$0xff] %v715
        %767 = vst [vmem:[%s262 + $0x50] sm:$0xff] %v734
        %768 = vst [vmem:[%s262 + $0x58] sm:$0xff] %v753
        %769 = vst [vmem:[%s262 + $0x60] sm:$0xff] %v698
        %770 = vst [vmem:[%s262 + $0x68] sm:$0xff] %v717
        %771 = vst [vmem:[%s262 + $0x70] sm:$0xff] %v736
        %772 = vst [vmem:[%s262 + $0x78] sm:$0xff] %v755
        %p773 = scmp.eq.s32.totalorder %s18, 0
        // Predicated region
        $region49: #{decoder_forward.2} parent=39 // pred_check
          %p774 = pneg %p773
        $region50: #{decoder_forward.2} parent=39 // pred_check_branch
          %776 = sbr.rel (%p774) target = $region52
        $region51: #{decoder_forward.2} parent=39 // pred_region
          %v777 = vld [vmem:[%s1] sm:$0xff]
          %v778 = vpack.c.bf16 %v777, %v777
          %v779 = vld [vmem:[#allocation4] sm:$0xff]
          %v780 = vld [vmem:[#allocation4 + $0x8] sm:$0xff]
          %v781 = vld [vmem:[#allocation4 + $0x10] sm:$0xff]
          %v782 = vld [vmem:[#allocation4 + $0x18] sm:$0xff]
          %v783 = vld [vmem:[#allocation4 + $0x20] sm:$0xff]
          %v784 = vld [vmem:[#allocation4 + $0x28] sm:$0xff]
          %v785 = vld [vmem:[#allocation4 + $0x30] sm:$0xff]
          %v786 = vld [vmem:[#allocation4 + $0x38] sm:$0xff]
          %v787 = vld [vmem:[#allocation4 + $0x40] sm:$0xff]
          %v788 = vld [vmem:[#allocation4 + $0x48] sm:$0xff]
          %v789 = vld [vmem:[#allocation4 + $0x50] sm:$0xff]
          %v790 = vld [vmem:[#allocation4 + $0x58] sm:$0xff]
          %v791 = vld [vmem:[#allocation4 + $0x60] sm:$0xff]
          %v792 = vld [vmem:[#allocation4 + $0x68] sm:$0xff]
          %v793 = vld [vmem:[#allocation4 + $0x70] sm:$0xff]
          %v794 = vld [vmem:[#allocation4 + $0x78] sm:$0xff]
          %v795 = vld [vmem:[#allocation4 + $0x80] sm:$0xff]
          %v796 = vld [vmem:[#allocation4 + $0x88] sm:$0xff]
          %v797 = vld [vmem:[#allocation4 + $0x90] sm:$0xff]
          %v798 = vld [vmem:[#allocation4 + $0x98] sm:$0xff]
          %v799 = vld [vmem:[#allocation4 + $0xa0] sm:$0xff]
          %v800 = vld [vmem:[#allocation4 + $0xa8] sm:$0xff]
          %v801 = vld [vmem:[#allocation4 + $0xb0] sm:$0xff]
          %v802 = vld [vmem:[#allocation4 + $0xb8] sm:$0xff]
          %v803 = vld [vmem:[#allocation4 + $0xc0] sm:$0xff]
          %v804 = vld [vmem:[#allocation4 + $0xc8] sm:$0xff]
          %v805 = vld [vmem:[#allocation4 + $0xd0] sm:$0xff]
          %v806 = vld [vmem:[#allocation4 + $0xd8] sm:$0xff]
          %v807 = vld [vmem:[#allocation4 + $0xe0] sm:$0xff]
          %v808 = vld [vmem:[#allocation4 + $0xe8] sm:$0xff]
          %v809 = vld [vmem:[#allocation4 + $0xf0] sm:$0xff]
          %v810 = vld [vmem:[#allocation4 + $0xf8] sm:$0xff]
          %v811 = vld [vmem:[%s4] sm:$0xf]
          %v813 = vperm.slane %v811, 0
          %v814 = vperm.slane %v811, 1
          %v815 = vperm.slane %v811, 2
          %v816 = vperm.slane %v811, 3
          %v853 = vunpack.c.l.b16 %v779
          %v854 = vunpack.c.h.b16 %v779
          %v855 = vunpack.c.l.b16 %v780
          %v856 = vunpack.c.h.b16 %v780
          %v857 = vunpack.c.l.b16 %v781
          %v858 = vunpack.c.h.b16 %v781
          %v859 = vunpack.c.l.b16 %v782
          %v860 = vunpack.c.h.b16 %v782
          %v861 = vunpack.c.l.b16 %v783
          %v862 = vunpack.c.h.b16 %v783
          %v863 = vunpack.c.l.b16 %v784
          %v864 = vunpack.c.h.b16 %v784
          %v865 = vunpack.c.l.b16 %v785
          %v866 = vunpack.c.h.b16 %v785
          %v867 = vunpack.c.l.b16 %v786
          %v868 = vunpack.c.h.b16 %v786
          %v869 = vunpack.c.l.b16 %v787
          %v870 = vunpack.c.h.b16 %v787
          %v871 = vunpack.c.l.b16 %v788
          %v872 = vunpack.c.h.b16 %v788
          %v873 = vunpack.c.l.b16 %v789
          %v874 = vunpack.c.h.b16 %v789
          %v875 = vunpack.c.l.b16 %v790
          %v876 = vunpack.c.h.b16 %v790
          %v877 = vunpack.c.l.b16 %v791
          %v878 = vunpack.c.h.b16 %v791
          %v879 = vunpack.c.l.b16 %v792
          %v880 = vunpack.c.h.b16 %v792
          %v881 = vunpack.c.l.b16 %v793
          %v882 = vunpack.c.h.b16 %v793
          %v883 = vunpack.c.l.b16 %v794
          %v884 = vunpack.c.h.b16 %v794
          %v885 = vunpack.c.l.b16 %v795
          %v886 = vunpack.c.h.b16 %v795
          %v887 = vunpack.c.l.b16 %v796
          %v888 = vunpack.c.h.b16 %v796
          %v889 = vunpack.c.l.b16 %v797
          %v890 = vunpack.c.h.b16 %v797
          %v891 = vunpack.c.l.b16 %v798
          %v892 = vunpack.c.h.b16 %v798
          %v893 = vunpack.c.l.b16 %v799
          %v894 = vunpack.c.h.b16 %v799
          %v895 = vunpack.c.l.b16 %v800
          %v896 = vunpack.c.h.b16 %v800
          %v897 = vunpack.c.l.b16 %v801
          %v898 = vunpack.c.h.b16 %v801
          %v899 = vunpack.c.l.b16 %v802
          %v900 = vunpack.c.h.b16 %v802
          %v901 = vunpack.c.l.b16 %v803
          %v902 = vunpack.c.h.b16 %v803
          %v903 = vunpack.c.l.b16 %v804
          %v904 = vunpack.c.h.b16 %v804
          %v905 = vunpack.c.l.b16 %v805
          %v906 = vunpack.c.h.b16 %v805
          %v907 = vunpack.c.l.b16 %v806
          %v908 = vunpack.c.h.b16 %v806
          %v909 = vunpack.c.l.b16 %v807
          %v910 = vunpack.c.h.b16 %v807
          %v911 = vunpack.c.l.b16 %v808
          %v912 = vunpack.c.h.b16 %v808
          %v913 = vunpack.c.l.b16 %v809
          %v914 = vunpack.c.h.b16 %v809
          %v915 = vunpack.c.l.b16 %v810
          %v916 = vunpack.c.h.b16 %v810
          %v917 = vpack.c.b16 %v857, %v853
          %v918 = vpack.c.b16 %v858, %v854
          %v919 = vpack.c.b16 %v859, %v855
          %v920 = vpack.c.b16 %v860, %v856
          %v921 = vpack.c.b16 %v865, %v861
          %v922 = vpack.c.b16 %v866, %v862
          %v923 = vpack.c.b16 %v867, %v863
          %v924 = vpack.c.b16 %v868, %v864
          %v925 = vpack.c.b16 %v873, %v869
          %v926 = vpack.c.b16 %v874, %v870
          %v927 = vpack.c.b16 %v875, %v871
          %v928 = vpack.c.b16 %v876, %v872
          %v929 = vpack.c.b16 %v881, %v877
          %v930 = vpack.c.b16 %v882, %v878
          %v931 = vpack.c.b16 %v883, %v879
          %v932 = vpack.c.b16 %v884, %v880
          %v933 = vpack.c.b16 %v889, %v885
          %v934 = vpack.c.b16 %v890, %v886
          %v935 = vpack.c.b16 %v891, %v887
          %v936 = vpack.c.b16 %v892, %v888
          %v937 = vpack.c.b16 %v897, %v893
          %v938 = vpack.c.b16 %v898, %v894
          %v939 = vpack.c.b16 %v899, %v895
          %v940 = vpack.c.b16 %v900, %v896
          %v941 = vpack.c.b16 %v905, %v901
          %v942 = vpack.c.b16 %v906, %v902
          %v943 = vpack.c.b16 %v907, %v903
          %v944 = vpack.c.b16 %v908, %v904
          %v945 = vpack.c.b16 %v913, %v909
          %v946 = vpack.c.b16 %v914, %v910
          %v947 = vpack.c.b16 %v915, %v911
          %v948 = vpack.c.b16 %v916, %v912
          %981 = vmatpush.bf16.msra.mxu0 %v945
          %982 = vmatpush.bf16.msra.mxu0 %v941
          %983 = vmatpush.bf16.msra.mxu0 %v937
          %984 = vmatpush.bf16.msra.mxu0 %v933
          %985 = vmatpush.bf16.msra.mxu0 %v929
          %986 = vmatpush.bf16.msra.mxu0 %v925
          %987 = vmatpush.bf16.msra.mxu0 %v921
          %988 = vmatpush.bf16.msra.mxu0 %v917
          %989 = vmatmul.bf16.gmra.mxu0 %v778
          %v990 = vpop.f32.mrf.mxu0
          %v991 = vadd.f32 %v813, %v990
          %v992 = vpop.f32.mrf.mxu0
          %993 = vdwg.mxu0
          %994 = vmatpush.bf16.msra.mxu0 %v946
          %995 = vmatpush.bf16.msra.mxu0 %v942
          %996 = vmatpush.bf16.msra.mxu0 %v938
          %997 = vmatpush.bf16.msra.mxu0 %v934
          %998 = vmatpush.bf16.msra.mxu0 %v930
          %999 = vmatpush.bf16.msra.mxu0 %v926
          %1000 = vmatpush.bf16.msra.mxu0 %v922
          %1001 = vmatpush.bf16.msra.mxu0 %v918
          %1002 = vmatmul.bf16.gmra.mxu0 %v778
          %v1003 = vpop.f32.mrf.mxu0
          %v1004 = vadd.f32 %v814, %v1003
          %v1005 = vpop.f32.mrf.mxu0
          %1006 = vdwg.mxu0
          %1007 = vmatpush.bf16.msra.mxu0 %v947
          %1008 = vmatpush.bf16.msra.mxu0 %v943
          %1009 = vmatpush.bf16.msra.mxu0 %v939
          %1010 = vmatpush.bf16.msra.mxu0 %v935
          %1011 = vmatpush.bf16.msra.mxu0 %v931
          %1012 = vmatpush.bf16.msra.mxu0 %v927
          %1013 = vmatpush.bf16.msra.mxu0 %v923
          %1014 = vmatpush.bf16.msra.mxu0 %v919
          %1015 = vmatmul.bf16.gmra.mxu0 %v778
          %v1016 = vpop.f32.mrf.mxu0
          %v1017 = vadd.f32 %v815, %v1016
          %v1018 = vpop.f32.mrf.mxu0
          %1019 = vdwg.mxu0
          %1020 = vmatpush.bf16.msra.mxu0 %v948
          %1021 = vmatpush.bf16.msra.mxu0 %v944
          %1022 = vmatpush.bf16.msra.mxu0 %v940
          %1023 = vmatpush.bf16.msra.mxu0 %v936
          %1024 = vmatpush.bf16.msra.mxu0 %v932
          %1025 = vmatpush.bf16.msra.mxu0 %v928
          %1026 = vmatpush.bf16.msra.mxu0 %v924
          %1027 = vmatpush.bf16.msra.mxu0 %v920
          %1028 = vmatmul.bf16.gmra.mxu0 %v778
          %v1029 = vpop.f32.mrf.mxu0
          %v1030 = vadd.f32 %v816, %v1029
          %v1031 = vpop.f32.mrf.mxu0
          %1032 = vdwg.mxu0
          %1033 = vst [vmem:[%s262] sm:$0xff] %v991
          %1034 = vst [vmem:[%s262 + $0x8] sm:$0xff] %v1004
          %1035 = vst [vmem:[%s262 + $0x10] sm:$0xff] %v1017
          %1036 = vst [vmem:[%s262 + $0x18] sm:$0xff] %v1030
        $region52: #{decoder_forward.2} parent=39 // pred_fallthru
          _
        %s1037 = smul.u32 4, %s18
        %p1038 = scmp.lt.s32.totalorder %s1037, 7
        %s1039 = scalar_select %p1038, %s1037, 7
        %s1040 = smul.addr %s1039, 4
        %s1041 = smul.addr %s1040, 8
        %s1042 = scalar_lea.vmem %s5, %s1041
        // Predicated region
        $region53: #{decoder_forward.2} parent=39 // pred_check
          %p1043 = pneg %p146
        $region54: #{decoder_forward.2} parent=39 // pred_check_branch
          %1045 = sbr.rel (%p1043) target = $region56
        $region55: #{decoder_forward.2} parent=39 // pred_region
          %s1046 = smul.u32 4, %s18
        $region56: #{decoder_forward.2} parent=39 // pred_fallthru
          _
      $region40: #{decoder_forward.2} parent=5 // pred_fallthru
        _
      %p1047 = scmp.le.s32.totalorder 2, %s13
      // Predicated region
      $region57: #{decoder_forward.2} parent=5 // pred_check
        %p1048 = pneg %p1047
      $region58: #{decoder_forward.2} parent=5 // pred_check_branch
        %1050 = sbr.rel (%p1048) target = $region60
      $region59: #{decoder_forward.2} parent=5 // pred_region
        %s1051 = ssub.s32 %s13, 2
        // Predicated region
        $region61: #{decoder_forward.2} parent=59 // pred_check
          %p1052 = pneg %p152
        $region62: #{decoder_forward.2} parent=59 // pred_check_branch
          %1054 = sbr.rel (%p1052) target = $region64
        $region63: #{decoder_forward.2} parent=59 // pred_region
          %s1055 = smul.u32 4, %s19
          %p1056 = scmp.lt.s32.totalorder %s1055, 7
          %s1057 = scalar_select %p1056, %s1055, 7
          %s1058 = smul.addr %s1057, 4
          %s1059 = smul.addr %s1058, 8
          %s1060 = scalar_lea.vmem %s5, %s1059
        $region64: #{decoder_forward.2} parent=59 // pred_fallthru
          _
      $region60: #{decoder_forward.2} parent=5 // pred_fallthru
        _
    $region6: #{decoder_forward.2} parent=1 // loop_footer
      %s17 = sadd.s32 1, %s13
    $region7: #{decoder_forward.2} parent=1 // loop_footer_branch
      %12 = sbr.rel target = $region3
    $region8: #{decoder_forward.2} parent=1 // loop_exit
      _
    %1061 = vsyncpa [#allocation3], 1
    %s1062 = scalar_lea.sflag [#allocation3], 1
    %1063 = vsyncpa %s1062, 1
    %1064 = vsyncpa [#allocation5], 1

// kernel: decoder_forward.3
$region0: #{decoder_forward.3}
  #allocation0 [shape = 'u32[]', space=smem, size = 0x4, offset = 0x4, fixed_abs, tag = 'smem constant byte address 0x4 - core index']
  #allocation1 [shape = 'u32[72,128]{1,0:T(1,128)}', space=vmem, size = 0x9000, scoped, tag = 'internal scratch']
  #allocation2 [shape = 'f32[8,8,128]{2,1,0:T(8,128)}', space=vmem, size = 0x8000, scoped, tag = 'scratch operand']
  %s0 = inlined_call_operand.vmem [shape: f32[8,8,512], index: 0, kind: input, shape index: {}]
  %s1 = inlined_call_operand.vmem [shape: bf16[128,512], index: 1, kind: input, shape index: {}]
  %s2 = inlined_call_operand.vmem [shape: bf16[128,256], index: 2, kind: input, shape index: {}]
  %s3 = inlined_call_operand.vmem [shape: f32[1,256], index: 3, kind: input, shape index: {}]
  %s4 = inlined_call_operand.vmem [shape: f32[8,8,256], index: 4, kind: output, shape index: {}]
  %s5 = sld [smem:[#allocation0]]
  $region26: #{decoder_forward.3} parent=0
    _
  %s7 = ssub.s32 1, %s5
  %s8 = scalar_select 0, %s7, %s5
  // Predicated region
  $region2: #{decoder_forward.3} parent=0 // pred_check
    _
  $region3: #{decoder_forward.3} parent=0 // pred_check_branch
    %10 = sbr.rel (0) target = $region5
  $region4: #{decoder_forward.3} parent=0 // pred_region
    _
  $region5: #{decoder_forward.3} parent=0 // pred_fallthru
    _
  // Predicated region
  $region6: #{decoder_forward.3} parent=0 // pred_check
    _
  $region7: #{decoder_forward.3} parent=0 // pred_check_branch
    %12 = sbr.rel (0) target = $region9
  $region8: #{decoder_forward.3} parent=0 // pred_region
    _
  $region9: #{decoder_forward.3} parent=0 // pred_fallthru
    _
  // Predicated region
  $region10: #{decoder_forward.3} parent=0 // pred_check
    _
  $region11: #{decoder_forward.3} parent=0 // pred_check_branch
    %14 = sbr.rel (0) target = $region13
  $region12: #{decoder_forward.3} parent=0 // pred_region
    _
  $region13: #{decoder_forward.3} parent=0 // pred_fallthru
    _
  // Predicated region
  $region14: #{decoder_forward.3} parent=0 // pred_check
    _
  $region15: #{decoder_forward.3} parent=0 // pred_check_branch
    %16 = sbr.rel (0) target = $region17
  $region16: #{decoder_forward.3} parent=0 // pred_region
    _
  $region17: #{decoder_forward.3} parent=0 // pred_fallthru
    _
  %v18 = vld [vmem:[%s0] sm:$0xff]
  %v19 = vld [vmem:[%s0 + $0x8] sm:$0xff]
  %v20 = vld [vmem:[%s0 + $0x10] sm:$0xff]
  %v21 = vld [vmem:[%s0 + $0x18] sm:$0xff]
  %v22 = vld [vmem:[%s1] sm:$0xff]
  %v23 = vld [vmem:[%s1 + $0x8] sm:$0xff]
  %v24 = vld [vmem:[%s1 + $0x10] sm:$0xff]
  %v25 = vld [vmem:[%s1 + $0x18] sm:$0xff]
  %v26 = vld [vmem:[%s1 + $0x20] sm:$0xff]
  %v27 = vld [vmem:[%s1 + $0x28] sm:$0xff]
  %v28 = vld [vmem:[%s1 + $0x30] sm:$0xff]
  %v29 = vld [vmem:[%s1 + $0x38] sm:$0xff]
  %v30 = vld [vmem:[%s1 + $0x40] sm:$0xff]
  %v31 = vld [vmem:[%s1 + $0x48] sm:$0xff]
  %v32 = vld [vmem:[%s1 + $0x50] sm:$0xff]
  %v33 = vld [vmem:[%s1 + $0x58] sm:$0xff]
  %v34 = vld [vmem:[%s1 + $0x60] sm:$0xff]
  %v35 = vld [vmem:[%s1 + $0x68] sm:$0xff]
  %v36 = vld [vmem:[%s1 + $0x70] sm:$0xff]
  %v37 = vld [vmem:[%s1 + $0x78] sm:$0xff]
  %v38 = vld [vmem:[%s1 + $0x80] sm:$0xff]
  %v39 = vld [vmem:[%s1 + $0x88] sm:$0xff]
  %v40 = vld [vmem:[%s1 + $0x90] sm:$0xff]
  %v41 = vld [vmem:[%s1 + $0x98] sm:$0xff]
  %v42 = vld [vmem:[%s1 + $0xa0] sm:$0xff]
  %v43 = vld [vmem:[%s1 + $0xa8] sm:$0xff]
  %v44 = vld [vmem:[%s1 + $0xb0] sm:$0xff]
  %v45 = vld [vmem:[%s1 + $0xb8] sm:$0xff]
  %v46 = vld [vmem:[%s1 + $0xc0] sm:$0xff]
  %v47 = vld [vmem:[%s1 + $0xc8] sm:$0xff]
  %v48 = vld [vmem:[%s1 + $0xd0] sm:$0xff]
  %v49 = vld [vmem:[%s1 + $0xd8] sm:$0xff]
  %v50 = vld [vmem:[%s1 + $0xe0] sm:$0xff]
  %v51 = vld [vmem:[%s1 + $0xe8] sm:$0xff]
  %v52 = vld [vmem:[%s1 + $0xf0] sm:$0xff]
  %v53 = vld [vmem:[%s1 + $0xf8] sm:$0xff]
  %v86 = vunpack.c.l.b16 %v22
  %v87 = vunpack.c.h.b16 %v22
  %v88 = vunpack.c.l.b16 %v23
  %v89 = vunpack.c.h.b16 %v23
  %v90 = vunpack.c.l.b16 %v24
  %v91 = vunpack.c.h.b16 %v24
  %v92 = vunpack.c.l.b16 %v25
  %v93 = vunpack.c.h.b16 %v25
  %v94 = vunpack.c.l.b16 %v26
  %v95 = vunpack.c.h.b16 %v26
  %v96 = vunpack.c.l.b16 %v27
  %v97 = vunpack.c.h.b16 %v27
  %v98 = vunpack.c.l.b16 %v28
  %v99 = vunpack.c.h.b16 %v28
  %v100 = vunpack.c.l.b16 %v29
  %v101 = vunpack.c.h.b16 %v29
  %v102 = vunpack.c.l.b16 %v30
  %v103 = vunpack.c.h.b16 %v30
  %v104 = vunpack.c.l.b16 %v31
  %v105 = vunpack.c.h.b16 %v31
  %v106 = vunpack.c.l.b16 %v32
  %v107 = vunpack.c.h.b16 %v32
  %v108 = vunpack.c.l.b16 %v33
  %v109 = vunpack.c.h.b16 %v33
  %v110 = vunpack.c.l.b16 %v34
  %v111 = vunpack.c.h.b16 %v34
  %v112 = vunpack.c.l.b16 %v35
  %v113 = vunpack.c.h.b16 %v35
  %v114 = vunpack.c.l.b16 %v36
  %v115 = vunpack.c.h.b16 %v36
  %v116 = vunpack.c.l.b16 %v37
  %v117 = vunpack.c.h.b16 %v37
  %v118 = vunpack.c.l.b16 %v38
  %v119 = vunpack.c.h.b16 %v38
  %v120 = vunpack.c.l.b16 %v39
  %v121 = vunpack.c.h.b16 %v39
  %v122 = vunpack.c.l.b16 %v40
  %v123 = vunpack.c.h.b16 %v40
  %v124 = vunpack.c.l.b16 %v41
  %v125 = vunpack.c.h.b16 %v41
  %v126 = vunpack.c.l.b16 %v42
  %v127 = vunpack.c.h.b16 %v42
  %v128 = vunpack.c.l.b16 %v43
  %v129 = vunpack.c.h.b16 %v43
  %v130 = vunpack.c.l.b16 %v44
  %v131 = vunpack.c.h.b16 %v44
  %v132 = vunpack.c.l.b16 %v45
  %v133 = vunpack.c.h.b16 %v45
  %v134 = vunpack.c.l.b16 %v46
  %v135 = vunpack.c.h.b16 %v46
  %v136 = vunpack.c.l.b16 %v47
  %v137 = vunpack.c.h.b16 %v47
  %v138 = vunpack.c.l.b16 %v48
  %v139 = vunpack.c.h.b16 %v48
  %v140 = vunpack.c.l.b16 %v49
  %v141 = vunpack.c.h.b16 %v49
  %v142 = vunpack.c.l.b16 %v50
  %v143 = vunpack.c.h.b16 %v50
  %v144 = vunpack.c.l.b16 %v51
  %v145 = vunpack.c.h.b16 %v51
  %v146 = vunpack.c.l.b16 %v52
  %v147 = vunpack.c.h.b16 %v52
  %v148 = vunpack.c.l.b16 %v53
  %v149 = vunpack.c.h.b16 %v53
  %v150 = vpack.c.b16 %v90, %v86
  %v151 = vpack.c.b16 %v91, %v87
  %v152 = vpack.c.b16 %v92, %v88
  %v153 = vpack.c.b16 %v93, %v89
  %v154 = vpack.c.b16 %v98, %v94
  %v155 = vpack.c.b16 %v99, %v95
  %v156 = vpack.c.b16 %v100, %v96
  %v157 = vpack.c.b16 %v101, %v97
  %v158 = vpack.c.b16 %v106, %v102
  %v159 = vpack.c.b16 %v107, %v103
  %v160 = vpack.c.b16 %v108, %v104
  %v161 = vpack.c.b16 %v109, %v105
  %v162 = vpack.c.b16 %v114, %v110
  %v163 = vpack.c.b16 %v115, %v111
  %v164 = vpack.c.b16 %v116, %v112
  %v165 = vpack.c.b16 %v117, %v113
  %v166 = vpack.c.b16 %v122, %v118
  %v167 = vpack.c.b16 %v123, %v119
  %v168 = vpack.c.b16 %v124, %v120
  %v169 = vpack.c.b16 %v125, %v121
  %v170 = vpack.c.b16 %v130, %v126
  %v171 = vpack.c.b16 %v131, %v127
  %v172 = vpack.c.b16 %v132, %v128
  %v173 = vpack.c.b16 %v133, %v129
  %v174 = vpack.c.b16 %v138, %v134
  %v175 = vpack.c.b16 %v139, %v135
  %v176 = vpack.c.b16 %v140, %v136
  %v177 = vpack.c.b16 %v141, %v137
  %v178 = vpack.c.b16 %v146, %v142
  %v179 = vpack.c.b16 %v147, %v143
  %v180 = vpack.c.b16 %v148, %v144
  %v181 = vpack.c.b16 %v149, %v145
  %214 = vmatpush.bf16.msra.mxu0 %v178
  %215 = vmatpush.bf16.msra.mxu0 %v174
  %216 = vmatpush.bf16.msra.mxu0 %v170
  %217 = vmatpush.bf16.msra.mxu0 %v166
  %218 = vmatpush.bf16.msra.mxu0 %v162
  %219 = vmatpush.bf16.msra.mxu0 %v158
  %220 = vmatpush.bf16.msra.mxu0 %v154
  %221 = vmatpush.bf16.msra.mxu0 %v150
  %222 = vmatmul.bf16.gmra.mxu0 0
  %v223 = vpop.f32.mrf.mxu0
  %v224 = vadd.f32 0.0, %v223
  %v225 = vpop.f32.mrf.mxu0
  %226 = vdwg.mxu0
  %227 = vmatpush.bf16.msra.mxu0 %v179
  %228 = vmatpush.bf16.msra.mxu0 %v175
  %229 = vmatpush.bf16.msra.mxu0 %v171
  %230 = vmatpush.bf16.msra.mxu0 %v167
  %231 = vmatpush.bf16.msra.mxu0 %v163
  %232 = vmatpush.bf16.msra.mxu0 %v159
  %233 = vmatpush.bf16.msra.mxu0 %v155
  %234 = vmatpush.bf16.msra.mxu0 %v151
  %235 = vmatmul.bf16.gmra.mxu0 0
  %v236 = vpop.f32.mrf.mxu0
  %v237 = vadd.f32 0.0, %v236
  %v238 = vpop.f32.mrf.mxu0
  %239 = vdwg.mxu0
  %240 = vmatpush.bf16.msra.mxu0 %v180
  %241 = vmatpush.bf16.msra.mxu0 %v176
  %242 = vmatpush.bf16.msra.mxu0 %v172
  %243 = vmatpush.bf16.msra.mxu0 %v168
  %244 = vmatpush.bf16.msra.mxu0 %v164
  %245 = vmatpush.bf16.msra.mxu0 %v160
  %246 = vmatpush.bf16.msra.mxu0 %v156
  %247 = vmatpush.bf16.msra.mxu0 %v152
  %248 = vmatmul.bf16.gmra.mxu0 0
  %v249 = vpop.f32.mrf.mxu0
  %v250 = vadd.f32 0.0, %v249
  %v251 = vpop.f32.mrf.mxu0
  %252 = vdwg.mxu0
  %253 = vmatpush.bf16.msra.mxu0 %v181
  %254 = vmatpush.bf16.msra.mxu0 %v177
  %255 = vmatpush.bf16.msra.mxu0 %v173
  %256 = vmatpush.bf16.msra.mxu0 %v169
  %257 = vmatpush.bf16.msra.mxu0 %v165
  %258 = vmatpush.bf16.msra.mxu0 %v161
  %259 = vmatpush.bf16.msra.mxu0 %v157
  %260 = vmatpush.bf16.msra.mxu0 %v153
  %261 = vmatmul.bf16.gmra.mxu0 0
  %v262 = vpop.f32.mrf.mxu0
  %v263 = vadd.f32 0.0, %v262
  %v264 = vpop.f32.mrf.mxu0
  %265 = vdwg.mxu0
  %v266 = vadd.f32 %v18, %v224
  %v267 = vadd.f32 %v19, %v237
  %v268 = vadd.f32 %v20, %v250
  %v269 = vadd.f32 %v21, %v263
  %v270 = vxor.u32 %v266, 2147483648
  %v271 = vmul.f32 %v270, 1.442695
  %v272 = vpow.pop %v271
  %v273 = vadd.f32 %v272, 1.0
  %v274 = vrcp.pop %v273
  %v275 = vmul.f32 %v273, %v274
  %v276 = vsub.f32 1.0, %v275
  %v277 = vmul.f32 %v274, %v276
  %v278 = vadd.f32 %v274, %v277
  %vm279 = vweird.f32 %v273
  %vm280 = vweird.f32 %v274
  %vm281 = vmor %vm279, %vm280
  %v282 = vsel %vm281, %v274, %v278
  %v283 = vand.u32 2147483647, %v273
  %vm284 = vcmp.eq.f32.partialorder %v283, 8.507059e+37
  %v285 = vand.u32 %v273, 2147483648
  %v286 = vor.u32 1.1754944e-38, %v285
  %v287 = vsel %vm284, %v286, %v282
  %v288 = vmul.f32 1.0, %v287
  %v289 = vxor.u32 %v267, 2147483648
  %v290 = vmul.f32 %v289, 1.442695
  %v291 = vpow.pop %v290
  %v292 = vadd.f32 %v291, 1.0
  %v293 = vrcp.pop %v292
  %v294 = vmul.f32 %v292, %v293
  %v295 = vsub.f32 1.0, %v294
  %v296 = vmul.f32 %v293, %v295
  %v297 = vadd.f32 %v293, %v296
  %vm298 = vweird.f32 %v292
  %vm299 = vweird.f32 %v293
  %vm300 = vmor %vm298, %vm299
  %v301 = vsel %vm300, %v293, %v297
  %v302 = vand.u32 2147483647, %v292
  %vm303 = vcmp.eq.f32.partialorder %v302, 8.507059e+37
  %v304 = vand.u32 %v292, 2147483648
  %v305 = vor.u32 1.1754944e-38, %v304
  %v306 = vsel %vm303, %v305, %v301
  %v307 = vmul.f32 1.0, %v306
  %v308 = vtanh.pop %v268
  %v309 = vxor.u32 %v269, 2147483648
  %v310 = vmul.f32 %v309, 1.442695
  %v311 = vpow.pop %v310
  %v312 = vadd.f32 %v311, 1.0
  %v313 = vrcp.pop %v312
  %v314 = vmul.f32 %v312, %v313
  %v315 = vsub.f32 1.0, %v314
  %v316 = vmul.f32 %v313, %v315
  %v317 = vadd.f32 %v313, %v316
  %vm318 = vweird.f32 %v312
  %vm319 = vweird.f32 %v313
  %vm320 = vmor %vm318, %vm319
  %v321 = vsel %vm320, %v313, %v317
  %v322 = vand.u32 2147483647, %v312
  %vm323 = vcmp.eq.f32.partialorder %v322, 8.507059e+37
  %v324 = vand.u32 %v312, 2147483648
  %v325 = vor.u32 1.1754944e-38, %v324
  %v326 = vsel %vm323, %v325, %v321
  %v327 = vmul.f32 1.0, %v326
  %v328 = vmul.f32 %v307, 0.0
  %v329 = vmul.f32 %v288, %v308
  %v330 = vadd.f32 %v328, %v329
  %v331 = vtanh.pop %v330
  %v332 = vmul.f32 %v327, %v331
  %333 = vst [vmem:[#allocation2] sm:$0xff] %v332
  %s334 = scalar_lea.vmem %s0, 32
  %v335 = vld [vmem:[%s334] sm:$0xff]
  %v336 = vld [vmem:[%s334 + $0x8] sm:$0xff]
  %v337 = vld [vmem:[%s334 + $0x10] sm:$0xff]
  %v338 = vld [vmem:[%s334 + $0x18] sm:$0xff]
  %v339 = vpack.c.bf16 %v332, %v332
  %v340 = vld [vmem:[%s1] sm:$0xff]
  %v341 = vld [vmem:[%s1 + $0x8] sm:$0xff]
  %v342 = vld [vmem:[%s1 + $0x10] sm:$0xff]
  %v343 = vld [vmem:[%s1 + $0x18] sm:$0xff]
  %v344 = vld [vmem:[%s1 + $0x20] sm:$0xff]
  %v345 = vld [vmem:[%s1 + $0x28] sm:$0xff]
  %v346 = vld [vmem:[%s1 + $0x30] sm:$0xff]
  %v347 = vld [vmem:[%s1 + $0x38] sm:$0xff]
  %v348 = vld [vmem:[%s1 + $0x40] sm:$0xff]
  %v349 = vld [vmem:[%s1 + $0x48] sm:$0xff]
  %v350 = vld [vmem:[%s1 + $0x50] sm:$0xff]
  %v351 = vld [vmem:[%s1 + $0x58] sm:$0xff]
  %v352 = vld [vmem:[%s1 + $0x60] sm:$0xff]
  %v353 = vld [vmem:[%s1 + $0x68] sm:$0xff]
  %v354 = vld [vmem:[%s1 + $0x70] sm:$0xff]
  %v355 = vld [vmem:[%s1 + $0x78] sm:$0xff]
  %v356 = vld [vmem:[%s1 + $0x80] sm:$0xff]
  %v357 = vld [vmem:[%s1 + $0x88] sm:$0xff]
  %v358 = vld [vmem:[%s1 + $0x90] sm:$0xff]
  %v359 = vld [vmem:[%s1 + $0x98] sm:$0xff]
  %v360 = vld [vmem:[%s1 + $0xa0] sm:$0xff]
  %v361 = vld [vmem:[%s1 + $0xa8] sm:$0xff]
  %v362 = vld [vmem:[%s1 + $0xb0] sm:$0xff]
  %v363 = vld [vmem:[%s1 + $0xb8] sm:$0xff]
  %v364 = vld [vmem:[%s1 + $0xc0] sm:$0xff]
  %v365 = vld [vmem:[%s1 + $0xc8] sm:$0xff]
  %v366 = vld [vmem:[%s1 + $0xd0] sm:$0xff]
  %v367 = vld [vmem:[%s1 + $0xd8] sm:$0xff]
  %v368 = vld [vmem:[%s1 + $0xe0] sm:$0xff]
  %v369 = vld [vmem:[%s1 + $0xe8] sm:$0xff]
  %v370 = vld [vmem:[%s1 + $0xf0] sm:$0xff]
  %v371 = vld [vmem:[%s1 + $0xf8] sm:$0xff]
  %v404 = vunpack.c.l.b16 %v340
  %v405 = vunpack.c.h.b16 %v340
  %v406 = vunpack.c.l.b16 %v341
  %v407 = vunpack.c.h.b16 %v341
  %v408 = vunpack.c.l.b16 %v342
  %v409 = vunpack.c.h.b16 %v342
  %v410 = vunpack.c.l.b16 %v343
  %v411 = vunpack.c.h.b16 %v343
  %v412 = vunpack.c.l.b16 %v344
  %v413 = vunpack.c.h.b16 %v344
  %v414 = vunpack.c.l.b16 %v345
  %v415 = vunpack.c.h.b16 %v345
  %v416 = vunpack.c.l.b16 %v346
  %v417 = vunpack.c.h.b16 %v346
  %v418 = vunpack.c.l.b16 %v347
  %v419 = vunpack.c.h.b16 %v347
  %v420 = vunpack.c.l.b16 %v348
  %v421 = vunpack.c.h.b16 %v348
  %v422 = vunpack.c.l.b16 %v349
  %v423 = vunpack.c.h.b16 %v349
  %v424 = vunpack.c.l.b16 %v350
  %v425 = vunpack.c.h.b16 %v350
  %v426 = vunpack.c.l.b16 %v351
  %v427 = vunpack.c.h.b16 %v351
  %v428 = vunpack.c.l.b16 %v352
  %v429 = vunpack.c.h.b16 %v352
  %v430 = vunpack.c.l.b16 %v353
  %v431 = vunpack.c.h.b16 %v353
  %v432 = vunpack.c.l.b16 %v354
  %v433 = vunpack.c.h.b16 %v354
  %v434 = vunpack.c.l.b16 %v355
  %v435 = vunpack.c.h.b16 %v355
  %v436 = vunpack.c.l.b16 %v356
  %v437 = vunpack.c.h.b16 %v356
  %v438 = vunpack.c.l.b16 %v357
  %v439 = vunpack.c.h.b16 %v357
  %v440 = vunpack.c.l.b16 %v358
  %v441 = vunpack.c.h.b16 %v358
  %v442 = vunpack.c.l.b16 %v359
  %v443 = vunpack.c.h.b16 %v359
  %v444 = vunpack.c.l.b16 %v360
  %v445 = vunpack.c.h.b16 %v360
  %v446 = vunpack.c.l.b16 %v361
  %v447 = vunpack.c.h.b16 %v361
  %v448 = vunpack.c.l.b16 %v362
  %v449 = vunpack.c.h.b16 %v362
  %v450 = vunpack.c.l.b16 %v363
  %v451 = vunpack.c.h.b16 %v363
  %v452 = vunpack.c.l.b16 %v364
  %v453 = vunpack.c.h.b16 %v364
  %v454 = vunpack.c.l.b16 %v365
  %v455 = vunpack.c.h.b16 %v365
  %v456 = vunpack.c.l.b16 %v366
  %v457 = vunpack.c.h.b16 %v366
  %v458 = vunpack.c.l.b16 %v367
  %v459 = vunpack.c.h.b16 %v367
  %v460 = vunpack.c.l.b16 %v368
  %v461 = vunpack.c.h.b16 %v368
  %v462 = vunpack.c.l.b16 %v369
  %v463 = vunpack.c.h.b16 %v369
  %v464 = vunpack.c.l.b16 %v370
  %v465 = vunpack.c.h.b16 %v370
  %v466 = vunpack.c.l.b16 %v371
  %v467 = vunpack.c.h.b16 %v371
  %v468 = vpack.c.b16 %v408, %v404
  %v469 = vpack.c.b16 %v409, %v405
  %v470 = vpack.c.b16 %v410, %v406
  %v471 = vpack.c.b16 %v411, %v407
  %v472 = vpack.c.b16 %v416, %v412
  %v473 = vpack.c.b16 %v417, %v413
  %v474 = vpack.c.b16 %v418, %v414
  %v475 = vpack.c.b16 %v419, %v415
  %v476 = vpack.c.b16 %v424, %v420
  %v477 = vpack.c.b16 %v425, %v421
  %v478 = vpack.c.b16 %v426, %v422
  %v479 = vpack.c.b16 %v427, %v423
  %v480 = vpack.c.b16 %v432, %v428
  %v481 = vpack.c.b16 %v433, %v429
  %v482 = vpack.c.b16 %v434, %v430
  %v483 = vpack.c.b16 %v435, %v431
  %v484 = vpack.c.b16 %v440, %v436
  %v485 = vpack.c.b16 %v441, %v437
  %v486 = vpack.c.b16 %v442, %v438
  %v487 = vpack.c.b16 %v443, %v439
  %v488 = vpack.c.b16 %v448, %v444
  %v489 = vpack.c.b16 %v449, %v445
  %v490 = vpack.c.b16 %v450, %v446
  %v491 = vpack.c.b16 %v451, %v447
  %v492 = vpack.c.b16 %v456, %v452
  %v493 = vpack.c.b16 %v457, %v453
  %v494 = vpack.c.b16 %v458, %v454
  %v495 = vpack.c.b16 %v459, %v455
  %v496 = vpack.c.b16 %v464, %v460
  %v497 = vpack.c.b16 %v465, %v461
  %v498 = vpack.c.b16 %v466, %v462
  %v499 = vpack.c.b16 %v467, %v463
  %532 = vmatpush.bf16.msra.mxu0 %v496
  %533 = vmatpush.bf16.msra.mxu0 %v492
  %534 = vmatpush.bf16.msra.mxu0 %v488
  %535 = vmatpush.bf16.msra.mxu0 %v484
  %536 = vmatpush.bf16.msra.mxu0 %v480
  %537 = vmatpush.bf16.msra.mxu0 %v476
  %538 = vmatpush.bf16.msra.mxu0 %v472
  %539 = vmatpush.bf16.msra.mxu0 %v468
  %540 = vmatmul.bf16.gmra.mxu0 %v339
  %v541 = vpop.f32.mrf.mxu0
  %v542 = vadd.f32 0.0, %v541
  %v543 = vpop.f32.mrf.mxu0
  %544 = vdwg.mxu0
  %545 = vmatpush.bf16.msra.mxu0 %v497
  %546 = vmatpush.bf16.msra.mxu0 %v493
  %547 = vmatpush.bf16.msra.mxu0 %v489
  %548 = vmatpush.bf16.msra.mxu0 %v485
  %549 = vmatpush.bf16.msra.mxu0 %v481
  %550 = vmatpush.bf16.msra.mxu0 %v477
  %551 = vmatpush.bf16.msra.mxu0 %v473
  %552 = vmatpush.bf16.msra.mxu0 %v469
  %553 = vmatmul.bf16.gmra.mxu0 %v339
  %v554 = vpop.f32.mrf.mxu0
  %v555 = vadd.f32 0.0, %v554
  %v556 = vpop.f32.mrf.mxu0
  %557 = vdwg.mxu0
  %558 = vmatpush.bf16.msra.mxu0 %v498
  %559 = vmatpush.bf16.msra.mxu0 %v494
  %560 = vmatpush.bf16.msra.mxu0 %v490
  %561 = vmatpush.bf16.msra.mxu0 %v486
  %562 = vmatpush.bf16.msra.mxu0 %v482
  %563 = vmatpush.bf16.msra.mxu0 %v478
  %564 = vmatpush.bf16.msra.mxu0 %v474
  %565 = vmatpush.bf16.msra.mxu0 %v470
  %566 = vmatmul.bf16.gmra.mxu0 %v339
  %v567 = vpop.f32.mrf.mxu0
  %v568 = vadd.f32 0.0, %v567
  %v569 = vpop.f32.mrf.mxu0
  %570 = vdwg.mxu0
  %571 = vmatpush.bf16.msra.mxu0 %v499
  %572 = vmatpush.bf16.msra.mxu0 %v495
  %573 = vmatpush.bf16.msra.mxu0 %v491
  %574 = vmatpush.bf16.msra.mxu0 %v487
  %575 = vmatpush.bf16.msra.mxu0 %v483
  %576 = vmatpush.bf16.msra.mxu0 %v479
  %577 = vmatpush.bf16.msra.mxu0 %v475
  %578 = vmatpush.bf16.msra.mxu0 %v471
  %579 = vmatmul.bf16.gmra.mxu0 %v339
  %v580 = vpop.f32.mrf.mxu0
  %v581 = vadd.f32 0.0, %v580
  %v582 = vpop.f32.mrf.mxu0
  %583 = vdwg.mxu0
  %v584 = vadd.f32 %v335, %v542
  %v585 = vadd.f32 %v336, %v555
  %v586 = vadd.f32 %v337, %v568
  %v587 = vadd.f32 %v338, %v581
  %v588 = vxor.u32 %v584, 2147483648
  %v589 = vmul.f32 %v588, 1.442695
  %v590 = vpow.pop %v589
  %v591 = vadd.f32 %v590, 1.0
  %v592 = vrcp.pop %v591
  %v593 = vmul.f32 %v591, %v592
  %v594 = vsub.f32 1.0, %v593
  %v595 = vmul.f32 %v592, %v594
  %v596 = vadd.f32 %v592, %v595
  %vm597 = vweird.f32 %v591
  %vm598 = vweird.f32 %v592
  %vm599 = vmor %vm597, %vm598
  %v600 = vsel %vm599, %v592, %v596
  %v601 = vand.u32 2147483647, %v591
  %vm602 = vcmp.eq.f32.partialorder %v601, 8.507059e+37
  %v603 = vand.u32 %v591, 2147483648
  %v604 = vor.u32 1.1754944e-38, %v603
  %v605 = vsel %vm602, %v604, %v600
  %v606 = vmul.f32 1.0, %v605
  %v607 = vxor.u32 %v585, 2147483648
  %v608 = vmul.f32 %v607, 1.442695
  %v609 = vpow.pop %v608
  %v610 = vadd.f32 %v609, 1.0
  %v611 = vrcp.pop %v610
  %v612 = vmul.f32 %v610, %v611
  %v613 = vsub.f32 1.0, %v612
  %v614 = vmul.f32 %v611, %v613
  %v615 = vadd.f32 %v611, %v614
  %vm616 = vweird.f32 %v610
  %vm617 = vweird.f32 %v611
  %vm618 = vmor %vm616, %vm617
  %v619 = vsel %vm618, %v611, %v615
  %v620 = vand.u32 2147483647, %v610
  %vm621 = vcmp.eq.f32.partialorder %v620, 8.507059e+37
  %v622 = vand.u32 %v610, 2147483648
  %v623 = vor.u32 1.1754944e-38, %v622
  %v624 = vsel %vm621, %v623, %v619
  %v625 = vmul.f32 1.0, %v624
  %v626 = vtanh.pop %v586
  %v627 = vxor.u32 %v587, 2147483648
  %v628 = vmul.f32 %v627, 1.442695
  %v629 = vpow.pop %v628
  %v630 = vadd.f32 %v629, 1.0
  %v631 = vrcp.pop %v630
  %v632 = vmul.f32 %v630, %v631
  %v633 = vsub.f32 1.0, %v632
  %v634 = vmul.f32 %v631, %v633
  %v635 = vadd.f32 %v631, %v634
  %vm636 = vweird.f32 %v630
  %vm637 = vweird.f32 %v631
  %vm638 = vmor %vm636, %vm637
  %v639 = vsel %vm638, %v631, %v635
  %v640 = vand.u32 2147483647, %v630
  %vm641 = vcmp.eq.f32.partialorder %v640, 8.507059e+37
  %v642 = vand.u32 %v630, 2147483648
  %v643 = vor.u32 1.1754944e-38, %v642
  %v644 = vsel %vm641, %v643, %v639
  %v645 = vmul.f32 1.0, %v644
  %v646 = vmul.f32 %v625, %v330
  %v647 = vmul.f32 %v606, %v626
  %v648 = vadd.f32 %v646, %v647
  %v649 = vtanh.pop %v648
  %v650 = vmul.f32 %v645, %v649
  %s651 = scalar_lea.vmem [#allocation2], 8
  %652 = vst [vmem:[%s651] sm:$0xff] %v650
  %s653 = scalar_lea.vmem %s0, 64
  %v654 = vld [vmem:[%s653] sm:$0xff]
  %v655 = vld [vmem:[%s653 + $0x8] sm:$0xff]
  %v656 = vld [vmem:[%s653 + $0x10] sm:$0xff]
  %v657 = vld [vmem:[%s653 + $0x18] sm:$0xff]
  %v658 = vpack.c.bf16 %v650, %v650
  %v659 = vld [vmem:[%s1] sm:$0xff]
  %v660 = vld [vmem:[%s1 + $0x8] sm:$0xff]
  %v661 = vld [vmem:[%s1 + $0x10] sm:$0xff]
  %v662 = vld [vmem:[%s1 + $0x18] sm:$0xff]
  %v663 = vld [vmem:[%s1 + $0x20] sm:$0xff]
  %v664 = vld [vmem:[%s1 + $0x28] sm:$0xff]
  %v665 = vld [vmem:[%s1 + $0x30] sm:$0xff]
  %v666 = vld [vmem:[%s1 + $0x38] sm:$0xff]
  %v667 = vld [vmem:[%s1 + $0x40] sm:$0xff]
  %v668 = vld [vmem:[%s1 + $0x48] sm:$0xff]
  %v669 = vld [vmem:[%s1 + $0x50] sm:$0xff]
  %v670 = vld [vmem:[%s1 + $0x58] sm:$0xff]
  %v671 = vld [vmem:[%s1 + $0x60] sm:$0xff]
  %v672 = vld [vmem:[%s1 + $0x68] sm:$0xff]
  %v673 = vld [vmem:[%s1 + $0x70] sm:$0xff]
  %v674 = vld [vmem:[%s1 + $0x78] sm:$0xff]
  %v675 = vld [vmem:[%s1 + $0x80] sm:$0xff]
  %v676 = vld [vmem:[%s1 + $0x88] sm:$0xff]
  %v677 = vld [vmem:[%s1 + $0x90] sm:$0xff]
  %v678 = vld [vmem:[%s1 + $0x98] sm:$0xff]
  %v679 = vld [vmem:[%s1 + $0xa0] sm:$0xff]
  %v680 = vld [vmem:[%s1 + $0xa8] sm:$0xff]
  %v681 = vld [vmem:[%s1 + $0xb0] sm:$0xff]
  %v682 = vld [vmem:[%s1 + $0xb8] sm:$0xff]
  %v683 = vld [vmem:[%s1 + $0xc0] sm:$0xff]
  %v684 = vld [vmem:[%s1 + $0xc8] sm:$0xff]
  %v685 = vld [vmem:[%s1 + $0xd0] sm:$0xff]
  %v686 = vld [vmem:[%s1 + $0xd8] sm:$0xff]
  %v687 = vld [vmem:[%s1 + $0xe0] sm:$0xff]
  %v688 = vld [vmem:[%s1 + $0xe8] sm:$0xff]
  %v689 = vld [vmem:[%s1 + $0xf0] sm:$0xff]
  %v690 = vld [vmem:[%s1 + $0xf8] sm:$0xff]
  %v723 = vunpack.c.l.b16 %v659
  %v724 = vunpack.c.h.b16 %v659
  %v725 = vunpack.c.l.b16 %v660
  %v726 = vunpack.c.h.b16 %v660
  %v727 = vunpack.c.l.b16 %v661
  %v728 = vunpack.c.h.b16 %v661
  %v729 = vunpack.c.l.b16 %v662
  %v730 = vunpack.c.h.b16 %v662
  %v731 = vunpack.c.l.b16 %v663
  %v732 = vunpack.c.h.b16 %v663
  %v733 = vunpack.c.l.b16 %v664
  %v734 = vunpack.c.h.b16 %v664
  %v735 = vunpack.c.l.b16 %v665
  %v736 = vunpack.c.h.b16 %v665
  %v737 = vunpack.c.l.b16 %v666
  %v738 = vunpack.c.h.b16 %v666
  %v739 = vunpack.c.l.b16 %v667
  %v740 = vunpack.c.h.b16 %v667
  %v741 = vunpack.c.l.b16 %v668
  %v742 = vunpack.c.h.b16 %v668
  %v743 = vunpack.c.l.b16 %v669
  %v744 = vunpack.c.h.b16 %v669
  %v745 = vunpack.c.l.b16 %v670
  %v746 = vunpack.c.h.b16 %v670
  %v747 = vunpack.c.l.b16 %v671
  %v748 = vunpack.c.h.b16 %v671
  %v749 = vunpack.c.l.b16 %v672
  %v750 = vunpack.c.h.b16 %v672
  %v751 = vunpack.c.l.b16 %v673
  %v752 = vunpack.c.h.b16 %v673
  %v753 = vunpack.c.l.b16 %v674
  %v754 = vunpack.c.h.b16 %v674
  %v755 = vunpack.c.l.b16 %v675
  %v756 = vunpack.c.h.b16 %v675
  %v757 = vunpack.c.l.b16 %v676
  %v758 = vunpack.c.h.b16 %v676
  %v759 = vunpack.c.l.b16 %v677
  %v760 = vunpack.c.h.b16 %v677
  %v761 = vunpack.c.l.b16 %v678
  %v762 = vunpack.c.h.b16 %v678
  %v763 = vunpack.c.l.b16 %v679
  %v764 = vunpack.c.h.b16 %v679
  %v765 = vunpack.c.l.b16 %v680
  %v766 = vunpack.c.h.b16 %v680
  %v767 = vunpack.c.l.b16 %v681
  %v768 = vunpack.c.h.b16 %v681
  %v769 = vunpack.c.l.b16 %v682
  %v770 = vunpack.c.h.b16 %v682
  %v771 = vunpack.c.l.b16 %v683
  %v772 = vunpack.c.h.b16 %v683
  %v773 = vunpack.c.l.b16 %v684
  %v774 = vunpack.c.h.b16 %v684
  %v775 = vunpack.c.l.b16 %v685
  %v776 = vunpack.c.h.b16 %v685
  %v777 = vunpack.c.l.b16 %v686
  %v778 = vunpack.c.h.b16 %v686
  %v779 = vunpack.c.l.b16 %v687
  %v780 = vunpack.c.h.b16 %v687
  %v781 = vunpack.c.l.b16 %v688
  %v782 = vunpack.c.h.b16 %v688
  %v783 = vunpack.c.l.b16 %v689
  %v784 = vunpack.c.h.b16 %v689
  %v785 = vunpack.c.l.b16 %v690
  %v786 = vunpack.c.h.b16 %v690
  %v787 = vpack.c.b16 %v727, %v723
  %v788 = vpack.c.b16 %v728, %v724
  %v789 = vpack.c.b16 %v729, %v725
  %v790 = vpack.c.b16 %v730, %v726
  %v791 = vpack.c.b16 %v735, %v731
  %v792 = vpack.c.b16 %v736, %v732
  %v793 = vpack.c.b16 %v737, %v733
  %v794 = vpack.c.b16 %v738, %v734
  %v795 = vpack.c.b16 %v743, %v739
  %v796 = vpack.c.b16 %v744, %v740
  %v797 = vpack.c.b16 %v745, %v741
  %v798 = vpack.c.b16 %v746, %v742
  %v799 = vpack.c.b16 %v751, %v747
  %v800 = vpack.c.b16 %v752, %v748
  %v801 = vpack.c.b16 %v753, %v749
  %v802 = vpack.c.b16 %v754, %v750
  %v803 = vpack.c.b16 %v759, %v755
  %v804 = vpack.c.b16 %v760, %v756
  %v805 = vpack.c.b16 %v761, %v757
  %v806 = vpack.c.b16 %v762, %v758
  %v807 = vpack.c.b16 %v767, %v763
  %v808 = vpack.c.b16 %v768, %v764
  %v809 = vpack.c.b16 %v769, %v765
  %v810 = vpack.c.b16 %v770, %v766
  %v811 = vpack.c.b16 %v775, %v771
  %v812 = vpack.c.b16 %v776, %v772
  %v813 = vpack.c.b16 %v777, %v773
  %v814 = vpack.c.b16 %v778, %v774
  %v815 = vpack.c.b16 %v783, %v779
  %v816 = vpack.c.b16 %v784, %v780
  %v817 = vpack.c.b16 %v785, %v781
  %v818 = vpack.c.b16 %v786, %v782
  %851 = vmatpush.bf16.msra.mxu0 %v815
  %852 = vmatpush.bf16.msra.mxu0 %v811
  %853 = vmatpush.bf16.msra.mxu0 %v807
  %854 = vmatpush.bf16.msra.mxu0 %v803
  %855 = vmatpush.bf16.msra.mxu0 %v799
  %856 = vmatpush.bf16.msra.mxu0 %v795
  %857 = vmatpush.bf16.msra.mxu0 %v791
  %858 = vmatpush.bf16.msra.mxu0 %v787
  %859 = vmatmul.bf16.gmra.mxu0 %v658
  %v860 = vpop.f32.mrf.mxu0
  %v861 = vadd.f32 0.0, %v860
  %v862 = vpop.f32.mrf.mxu0
  %863 = vdwg.mxu0
  %864 = vmatpush.bf16.msra.mxu0 %v816
  %865 = vmatpush.bf16.msra.mxu0 %v812
  %866 = vmatpush.bf16.msra.mxu0 %v808
  %867 = vmatpush.bf16.msra.mxu0 %v804
  %868 = vmatpush.bf16.msra.mxu0 %v800
  %869 = vmatpush.bf16.msra.mxu0 %v796
  %870 = vmatpush.bf16.msra.mxu0 %v792
  %871 = vmatpush.bf16.msra.mxu0 %v788
  %872 = vmatmul.bf16.gmra.mxu0 %v658
  %v873 = vpop.f32.mrf.mxu0
  %v874 = vadd.f32 0.0, %v873
  %v875 = vpop.f32.mrf.mxu0
  %876 = vdwg.mxu0
  %877 = vmatpush.bf16.msra.mxu0 %v817
  %878 = vmatpush.bf16.msra.mxu0 %v813
  %879 = vmatpush.bf16.msra.mxu0 %v809
  %880 = vmatpush.bf16.msra.mxu0 %v805
  %881 = vmatpush.bf16.msra.mxu0 %v801
  %882 = vmatpush.bf16.msra.mxu0 %v797
  %883 = vmatpush.bf16.msra.mxu0 %v793
  %884 = vmatpush.bf16.msra.mxu0 %v789
  %885 = vmatmul.bf16.gmra.mxu0 %v658
  %v886 = vpop.f32.mrf.mxu0
  %v887 = vadd.f32 0.0, %v886
  %v888 = vpop.f32.mrf.mxu0
  %889 = vdwg.mxu0
  %890 = vmatpush.bf16.msra.mxu0 %v818
  %891 = vmatpush.bf16.msra.mxu0 %v814
  %892 = vmatpush.bf16.msra.mxu0 %v810
  %893 = vmatpush.bf16.msra.mxu0 %v806
  %894 = vmatpush.bf16.msra.mxu0 %v802
  %895 = vmatpush.bf16.msra.mxu0 %v798
  %896 = vmatpush.bf16.msra.mxu0 %v794
  %897 = vmatpush.bf16.msra.mxu0 %v790
  %898 = vmatmul.bf16.gmra.mxu0 %v658
  %v899 = vpop.f32.mrf.mxu0
  %v900 = vadd.f32 0.0, %v899
  %v901 = vpop.f32.mrf.mxu0
  %902 = vdwg.mxu0
  %v903 = vadd.f32 %v654, %v861
  %v904 = vadd.f32 %v655, %v874
  %v905 = vadd.f32 %v656, %v887
  %v906 = vadd.f32 %v657, %v900
  %v907 = vxor.u32 %v903, 2147483648
  %v908 = vmul.f32 %v907, 1.442695
  %v909 = vpow.pop %v908
  %v910 = vadd.f32 %v909, 1.0
  %v911 = vrcp.pop %v910
  %v912 = vmul.f32 %v910, %v911
  %v913 = vsub.f32 1.0, %v912
  %v914 = vmul.f32 %v911, %v913
  %v915 = vadd.f32 %v911, %v914
  %vm916 = vweird.f32 %v910
  %vm917 = vweird.f32 %v911
  %vm918 = vmor %vm916, %vm917
  %v919 = vsel %vm918, %v911, %v915
  %v920 = vand.u32 2147483647, %v910
  %vm921 = vcmp.eq.f32.partialorder %v920, 8.507059e+37
  %v922 = vand.u32 %v910, 2147483648
  %v923 = vor.u32 1.1754944e-38, %v922
  %v924 = vsel %vm921, %v923, %v919
  %v925 = vmul.f32 1.0, %v924
  %v926 = vxor.u32 %v904, 2147483648
  %v927 = vmul.f32 %v926, 1.442695
  %v928 = vpow.pop %v927
  %v929 = vadd.f32 %v928, 1.0
  %v930 = vrcp.pop %v929
  %v931 = vmul.f32 %v929, %v930
  %v932 = vsub.f32 1.0, %v931
  %v933 = vmul.f32 %v930, %v932
  %v934 = vadd.f32 %v930, %v933
  %vm935 = vweird.f32 %v929
  %vm936 = vweird.f32 %v930
  %vm937 = vmor %vm935, %vm936
  %v938 = vsel %vm937, %v930, %v934
  %v939 = vand.u32 2147483647, %v929
  %vm940 = vcmp.eq.f32.partialorder %v939, 8.507059e+37
  %v941 = vand.u32 %v929, 2147483648
  %v942 = vor.u32 1.1754944e-38, %v941
  %v943 = vsel %vm940, %v942, %v938
  %v944 = vmul.f32 1.0, %v943
  %v945 = vtanh.pop %v905
  %v946 = vxor.u32 %v906, 2147483648
  %v947 = vmul.f32 %v946, 1.442695
  %v948 = vpow.pop %v947
  %v949 = vadd.f32 %v948, 1.0
  %v950 = vrcp.pop %v949
  %v951 = vmul.f32 %v949, %v950
  %v952 = vsub.f32 1.0, %v951
  %v953 = vmul.f32 %v950, %v952
  %v954 = vadd.f32 %v950, %v953
  %vm955 = vweird.f32 %v949
  %vm956 = vweird.f32 %v950
  %vm957 = vmor %vm955, %vm956
  %v958 = vsel %vm957, %v950, %v954
  %v959 = vand.u32 2147483647, %v949
  %vm960 = vcmp.eq.f32.partialorder %v959, 8.507059e+37
  %v961 = vand.u32 %v949, 2147483648
  %v962 = vor.u32 1.1754944e-38, %v961
  %v963 = vsel %vm960, %v962, %v958
  %v964 = vmul.f32 1.0, %v963
  %v965 = vmul.f32 %v944, %v648
  %v966 = vmul.f32 %v925, %v945
  %v967 = vadd.f32 %v965, %v966
  %v968 = vtanh.pop %v967
  %v969 = vmul.f32 %v964, %v968
  %s970 = scalar_lea.vmem [#allocation2], 16
  %971 = vst [vmem:[%s970] sm:$0xff] %v969
  %s972 = scalar_lea.vmem %s0, 96
  %v973 = vld [vmem:[%s972] sm:$0xff]
  %v974 = vld [vmem:[%s972 + $0x8] sm:$0xff]
  %v975 = vld [vmem:[%s972 + $0x10] sm:$0xff]
  %v976 = vld [vmem:[%s972 + $0x18] sm:$0xff]
  %v977 = vpack.c.bf16 %v969, %v969
  %v978 = vld [vmem:[%s1] sm:$0xff]
  %v979 = vld [vmem:[%s1 + $0x8] sm:$0xff]
  %v980 = vld [vmem:[%s1 + $0x10] sm:$0xff]
  %v981 = vld [vmem:[%s1 + $0x18] sm:$0xff]
  %v982 = vld [vmem:[%s1 + $0x20] sm:$0xff]
  %v983 = vld [vmem:[%s1 + $0x28] sm:$0xff]
  %v984 = vld [vmem:[%s1 + $0x30] sm:$0xff]
  %v985 = vld [vmem:[%s1 + $0x38] sm:$0xff]
  %v986 = vld [vmem:[%s1 + $0x40] sm:$0xff]
  %v987 = vld [vmem:[%s1 + $0x48] sm:$0xff]
  %v988 = vld [vmem:[%s1 + $0x50] sm:$0xff]
  %v989 = vld [vmem:[%s1 + $0x58] sm:$0xff]
  %v990 = vld [vmem:[%s1 + $0x60] sm:$0xff]
  %v991 = vld [vmem:[%s1 + $0x68] sm:$0xff]
  %v992 = vld [vmem:[%s1 + $0x70] sm:$0xff]
  %v993 = vld [vmem:[%s1 + $0x78] sm:$0xff]
  %v994 = vld [vmem:[%s1 + $0x80] sm:$0xff]
  %v995 = vld [vmem:[%s1 + $0x88] sm:$0xff]
  %v996 = vld [vmem:[%s1 + $0x90] sm:$0xff]
  %v997 = vld [vmem:[%s1 + $0x98] sm:$0xff]
  %v998 = vld [vmem:[%s1 + $0xa0] sm:$0xff]
  %v999 = vld [vmem:[%s1 + $0xa8] sm:$0xff]
  %v1000 = vld [vmem:[%s1 + $0xb0] sm:$0xff]
  %v1001 = vld [vmem:[%s1 + $0xb8] sm:$0xff]
  %v1002 = vld [vmem:[%s1 + $0xc0] sm:$0xff]
  %v1003 = vld [vmem:[%s1 + $0xc8] sm:$0xff]
  %v1004 = vld [vmem:[%s1 + $0xd0] sm:$0xff]
  %v1005 = vld [vmem:[%s1 + $0xd8] sm:$0xff]
  %v1006 = vld [vmem:[%s1 + $0xe0] sm:$0xff]
  %v1007 = vld [vmem:[%s1 + $0xe8] sm:$0xff]
  %v1008 = vld [vmem:[%s1 + $0xf0] sm:$0xff]
  %v1009 = vld [vmem:[%s1 + $0xf8] sm:$0xff]
  %v1042 = vunpack.c.l.b16 %v978
  %v1043 = vunpack.c.h.b16 %v978
  %v1044 = vunpack.c.l.b16 %v979
  %v1045 = vunpack.c.h.b16 %v979
  %v1046 = vunpack.c.l.b16 %v980
  %v1047 = vunpack.c.h.b16 %v980
  %v1048 = vunpack.c.l.b16 %v981
  %v1049 = vunpack.c.h.b16 %v981
  %v1050 = vunpack.c.l.b16 %v982
  %v1051 = vunpack.c.h.b16 %v982
  %v1052 = vunpack.c.l.b16 %v983
  %v1053 = vunpack.c.h.b16 %v983
  %v1054 = vunpack.c.l.b16 %v984
  %v1055 = vunpack.c.h.b16 %v984
  %v1056 = vunpack.c.l.b16 %v985
  %v1057 = vunpack.c.h.b16 %v985
  %v1058 = vunpack.c.l.b16 %v986
  %v1059 = vunpack.c.h.b16 %v986
  %v1060 = vunpack.c.l.b16 %v987
  %v1061 = vunpack.c.h.b16 %v987
  %v1062 = vunpack.c.l.b16 %v988
  %v1063 = vunpack.c.h.b16 %v988
  %v1064 = vunpack.c.l.b16 %v989
  %v1065 = vunpack.c.h.b16 %v989
  %v1066 = vunpack.c.l.b16 %v990
  %v1067 = vunpack.c.h.b16 %v990
  %v1068 = vunpack.c.l.b16 %v991
  %v1069 = vunpack.c.h.b16 %v991
  %v1070 = vunpack.c.l.b16 %v992
  %v1071 = vunpack.c.h.b16 %v992
  %v1072 = vunpack.c.l.b16 %v993
  %v1073 = vunpack.c.h.b16 %v993
  %v1074 = vunpack.c.l.b16 %v994
  %v1075 = vunpack.c.h.b16 %v994
  %v1076 = vunpack.c.l.b16 %v995
  %v1077 = vunpack.c.h.b16 %v995
  %v1078 = vunpack.c.l.b16 %v996
  %v1079 = vunpack.c.h.b16 %v996
  %v1080 = vunpack.c.l.b16 %v997
  %v1081 = vunpack.c.h.b16 %v997
  %v1082 = vunpack.c.l.b16 %v998
  %v1083 = vunpack.c.h.b16 %v998
  %v1084 = vunpack.c.l.b16 %v999
  %v1085 = vunpack.c.h.b16 %v999
  %v1086 = vunpack.c.l.b16 %v1000
  %v1087 = vunpack.c.h.b16 %v1000
  %v1088 = vunpack.c.l.b16 %v1001
  %v1089 = vunpack.c.h.b16 %v1001
  %v1090 = vunpack.c.l.b16 %v1002
  %v1091 = vunpack.c.h.b16 %v1002
  %v1092 = vunpack.c.l.b16 %v1003
  %v1093 = vunpack.c.h.b16 %v1003
  %v1094 = vunpack.c.l.b16 %v1004
  %v1095 = vunpack.c.h.b16 %v1004
  %v1096 = vunpack.c.l.b16 %v1005
  %v1097 = vunpack.c.h.b16 %v1005
  %v1098 = vunpack.c.l.b16 %v1006
  %v1099 = vunpack.c.h.b16 %v1006
  %v1100 = vunpack.c.l.b16 %v1007
  %v1101 = vunpack.c.h.b16 %v1007
  %v1102 = vunpack.c.l.b16 %v1008
  %v1103 = vunpack.c.h.b16 %v1008
  %v1104 = vunpack.c.l.b16 %v1009
  %v1105 = vunpack.c.h.b16 %v1009
  %v1106 = vpack.c.b16 %v1046, %v1042
  %v1107 = vpack.c.b16 %v1047, %v1043
  %v1108 = vpack.c.b16 %v1048, %v1044
  %v1109 = vpack.c.b16 %v1049, %v1045
  %v1110 = vpack.c.b16 %v1054, %v1050
  %v1111 = vpack.c.b16 %v1055, %v1051
  %v1112 = vpack.c.b16 %v1056, %v1052
  %v1113 = vpack.c.b16 %v1057, %v1053
  %v1114 = vpack.c.b16 %v1062, %v1058
  %v1115 = vpack.c.b16 %v1063, %v1059
  %v1116 = vpack.c.b16 %v1064, %v1060
  %v1117 = vpack.c.b16 %v1065, %v1061
  %v1118 = vpack.c.b16 %v1070, %v1066
  %v1119 = vpack.c.b16 %v1071, %v1067
  %v1120 = vpack.c.b16 %v1072, %v1068
  %v1121 = vpack.c.b16 %v1073, %v1069
  %v1122 = vpack.c.b16 %v1078, %v1074
  %v1123 = vpack.c.b16 %v1079, %v1075
  %v1124 = vpack.c.b16 %v1080, %v1076
  %v1125 = vpack.c.b16 %v1081, %v1077
  %v1126 = vpack.c.b16 %v1086, %v1082
  %v1127 = vpack.c.b16 %v1087, %v1083
  %v1128 = vpack.c.b16 %v1088, %v1084
  %v1129 = vpack.c.b16 %v1089, %v1085
  %v1130 = vpack.c.b16 %v1094, %v1090
  %v1131 = vpack.c.b16 %v1095, %v1091
  %v1132 = vpack.c.b16 %v1096, %v1092
  %v1133 = vpack.c.b16 %v1097, %v1093
  %v1134 = vpack.c.b16 %v1102, %v1098
  %v1135 = vpack.c.b16 %v1103, %v1099
  %v1136 = vpack.c.b16 %v1104, %v1100
  %v1137 = vpack.c.b16 %v1105, %v1101
  %1170 = vmatpush.bf16.msra.mxu0 %v1134
  %1171 = vmatpush.bf16.msra.mxu0 %v1130
  %1172 = vmatpush.bf16.msra.mxu0 %v1126
  %1173 = vmatpush.bf16.msra.mxu0 %v1122
  %1174 = vmatpush.bf16.msra.mxu0 %v1118
  %1175 = vmatpush.bf16.msra.mxu0 %v1114
  %1176 = vmatpush.bf16.msra.mxu0 %v1110
  %1177 = vmatpush.bf16.msra.mxu0 %v1106
  %1178 = vmatmul.bf16.gmra.mxu0 %v977
  %v1179 = vpop.f32.mrf.mxu0
  %v1180 = vadd.f32 0.0, %v1179
  %v1181 = vpop.f32.mrf.mxu0
  %1182 = vdwg.mxu0
  %1183 = vmatpush.bf16.msra.mxu0 %v1135
  %1184 = vmatpush.bf16.msra.mxu0 %v1131
  %1185 = vmatpush.bf16.msra.mxu0 %v1127
  %1186 = vmatpush.bf16.msra.mxu0 %v1123
  %1187 = vmatpush.bf16.msra.mxu0 %v1119
  %1188 = vmatpush.bf16.msra.mxu0 %v1115
  %1189 = vmatpush.bf16.msra.mxu0 %v1111
  %1190 = vmatpush.bf16.msra.mxu0 %v1107
  %1191 = vmatmul.bf16.gmra.mxu0 %v977
  %v1192 = vpop.f32.mrf.mxu0
  %v1193 = vadd.f32 0.0, %v1192
  %v1194 = vpop.f32.mrf.mxu0
  %1195 = vdwg.mxu0
  %1196 = vmatpush.bf16.msra.mxu0 %v1136
  %1197 = vmatpush.bf16.msra.mxu0 %v1132
  %1198 = vmatpush.bf16.msra.mxu0 %v1128
  %1199 = vmatpush.bf16.msra.mxu0 %v1124
  %1200 = vmatpush.bf16.msra.mxu0 %v1120
  %1201 = vmatpush.bf16.msra.mxu0 %v1116
  %1202 = vmatpush.bf16.msra.mxu0 %v1112
  %1203 = vmatpush.bf16.msra.mxu0 %v1108
  %1204 = vmatmul.bf16.gmra.mxu0 %v977
  %v1205 = vpop.f32.mrf.mxu0
  %v1206 = vadd.f32 0.0, %v1205
  %v1207 = vpop.f32.mrf.mxu0
  %1208 = vdwg.mxu0
  %1209 = vmatpush.bf16.msra.mxu0 %v1137
  %1210 = vmatpush.bf16.msra.mxu0 %v1133
  %1211 = vmatpush.bf16.msra.mxu0 %v1129
  %1212 = vmatpush.bf16.msra.mxu0 %v1125
  %1213 = vmatpush.bf16.msra.mxu0 %v1121
  %1214 = vmatpush.bf16.msra.mxu0 %v1117
  %1215 = vmatpush.bf16.msra.mxu0 %v1113
  %1216 = vmatpush.bf16.msra.mxu0 %v1109
  %1217 = vmatmul.bf16.gmra.mxu0 %v977
  %v1218 = vpop.f32.mrf.mxu0
  %v1219 = vadd.f32 0.0, %v1218
  %v1220 = vpop.f32.mrf.mxu0
  %1221 = vdwg.mxu0
  %v1222 = vadd.f32 %v973, %v1180
  %v1223 = vadd.f32 %v974, %v1193
  %v1224 = vadd.f32 %v975, %v1206
  %v1225 = vadd.f32 %v976, %v1219
  %v1226 = vxor.u32 %v1222, 2147483648
  %v1227 = vmul.f32 %v1226, 1.442695
  %v1228 = vpow.pop %v1227
  %v1229 = vadd.f32 %v1228, 1.0
  %v1230 = vrcp.pop %v1229
  %v1231 = vmul.f32 %v1229, %v1230
  %v1232 = vsub.f32 1.0, %v1231
  %v1233 = vmul.f32 %v1230, %v1232
  %v1234 = vadd.f32 %v1230, %v1233
  %vm1235 = vweird.f32 %v1229
  %vm1236 = vweird.f32 %v1230
  %vm1237 = vmor %vm1235, %vm1236
  %v1238 = vsel %vm1237, %v1230, %v1234
  %v1239 = vand.u32 2147483647, %v1229
  %vm1240 = vcmp.eq.f32.partialorder %v1239, 8.507059e+37
  %v1241 = vand.u32 %v1229, 2147483648
  %v1242 = vor.u32 1.1754944e-38, %v1241
  %v1243 = vsel %vm1240, %v1242, %v1238
  %v1244 = vmul.f32 1.0, %v1243
  %v1245 = vxor.u32 %v1223, 2147483648
  %v1246 = vmul.f32 %v1245, 1.442695
  %v1247 = vpow.pop %v1246
  %v1248 = vadd.f32 %v1247, 1.0
  %v1249 = vrcp.pop %v1248
  %v1250 = vmul.f32 %v1248, %v1249
  %v1251 = vsub.f32 1.0, %v1250
  %v1252 = vmul.f32 %v1249, %v1251
  %v1253 = vadd.f32 %v1249, %v1252
  %vm1254 = vweird.f32 %v1248
  %vm1255 = vweird.f32 %v1249
  %vm1256 = vmor %vm1254, %vm1255
  %v1257 = vsel %vm1256, %v1249, %v1253
  %v1258 = vand.u32 2147483647, %v1248
  %vm1259 = vcmp.eq.f32.partialorder %v1258, 8.507059e+37
  %v1260 = vand.u32 %v1248, 2147483648
  %v1261 = vor.u32 1.1754944e-38, %v1260
  %v1262 = vsel %vm1259, %v1261, %v1257
  %v1263 = vmul.f32 1.0, %v1262
  %v1264 = vtanh.pop %v1224
  %v1265 = vxor.u32 %v1225, 2147483648
  %v1266 = vmul.f32 %v1265, 1.442695
  %v1267 = vpow.pop %v1266
  %v1268 = vadd.f32 %v1267, 1.0
  %v1269 = vrcp.pop %v1268
  %v1270 = vmul.f32 %v1268, %v1269
  %v1271 = vsub.f32 1.0, %v1270
  %v1272 = vmul.f32 %v1269, %v1271
  %v1273 = vadd.f32 %v1269, %v1272
  %vm1274 = vweird.f32 %v1268
  %vm1275 = vweird.f32 %v1269
  %vm1276 = vmor %vm1274, %vm1275
  %v1277 = vsel %vm1276, %v1269, %v1273
  %v1278 = vand.u32 2147483647, %v1268
  %vm1279 = vcmp.eq.f32.partialorder %v1278, 8.507059e+37
  %v1280 = vand.u32 %v1268, 2147483648
  %v1281 = vor.u32 1.1754944e-38, %v1280
  %v1282 = vsel %vm1279, %v1281, %v1277
  %v1283 = vmul.f32 1.0, %v1282
  %v1284 = vmul.f32 %v1263, %v967
  %v1285 = vmul.f32 %v1244, %v1264
  %v1286 = vadd.f32 %v1284, %v1285
  %v1287 = vtanh.pop %v1286
  %v1288 = vmul.f32 %v1283, %v1287
  %s1289 = scalar_lea.vmem [#allocation2], 24
  %1290 = vst [vmem:[%s1289] sm:$0xff] %v1288
  %s1291 = scalar_lea.vmem %s0, 128
  %v1292 = vld [vmem:[%s1291] sm:$0xff]
  %v1293 = vld [vmem:[%s1291 + $0x8] sm:$0xff]
  %v1294 = vld [vmem:[%s1291 + $0x10] sm:$0xff]
  %v1295 = vld [vmem:[%s1291 + $0x18] sm:$0xff]
  %v1296 = vpack.c.bf16 %v1288, %v1288
  %v1297 = vld [vmem:[%s1] sm:$0xff]
  %v1298 = vld [vmem:[%s1 + $0x8] sm:$0xff]
  %v1299 = vld [vmem:[%s1 + $0x10] sm:$0xff]
  %v1300 = vld [vmem:[%s1 + $0x18] sm:$0xff]
  %v1301 = vld [vmem:[%s1 + $0x20] sm:$0xff]
  %v1302 = vld [vmem:[%s1 + $0x28] sm:$0xff]
  %v1303 = vld [vmem:[%s1 + $0x30] sm:$0xff]
  %v1304 = vld [vmem:[%s1 + $0x38] sm:$0xff]
  %v1305 = vld [vmem:[%s1 + $0x40] sm:$0xff]
  %v1306 = vld [vmem:[%s1 + $0x48] sm:$0xff]
  %v1307 = vld [vmem:[%s1 + $0x50] sm:$0xff]
  %v1308 = vld [vmem:[%s1 + $0x58] sm:$0xff]
  %v1309 = vld [vmem:[%s1 + $0x60] sm:$0xff]
  %v1310 = vld [vmem:[%s1 + $0x68] sm:$0xff]
  %v1311 = vld [vmem:[%s1 + $0x70] sm:$0xff]
  %v1312 = vld [vmem:[%s1 + $0x78] sm:$0xff]
  %v1313 = vld [vmem:[%s1 + $0x80] sm:$0xff]
  %v1314 = vld [vmem:[%s1 + $0x88] sm:$0xff]
  %v1315 = vld [vmem:[%s1 + $0x90] sm:$0xff]
  %v1316 = vld [vmem:[%s1 + $0x98] sm:$0xff]
  %v1317 = vld [vmem:[%s1 + $0xa0] sm:$0xff]
  %v1318 = vld [vmem:[%s1 + $0xa8] sm:$0xff]
  %v1319 = vld [vmem:[%s1 + $0xb0] sm:$0xff]
  %v1320 = vld [vmem:[%s1 + $0xb8] sm:$0xff]
  %v1321 = vld [vmem:[%s1 + $0xc0] sm:$0xff]
  %v1322 = vld [vmem:[%s1 + $0xc8] sm:$0xff]
  %v1323 = vld [vmem:[%s1 + $0xd0] sm:$0xff]
  %v1324 = vld [vmem:[%s1 + $0xd8] sm:$0xff]
  %v1325 = vld [vmem:[%s1 + $0xe0] sm:$0xff]
  %v1326 = vld [vmem:[%s1 + $0xe8] sm:$0xff]
  %v1327 = vld [vmem:[%s1 + $0xf0] sm:$0xff]
  %v1328 = vld [vmem:[%s1 + $0xf8] sm:$0xff]
  %v1361 = vunpack.c.l.b16 %v1297
  %v1362 = vunpack.c.h.b16 %v1297
  %v1363 = vunpack.c.l.b16 %v1298
  %v1364 = vunpack.c.h.b16 %v1298
  %v1365 = vunpack.c.l.b16 %v1299
  %v1366 = vunpack.c.h.b16 %v1299
  %v1367 = vunpack.c.l.b16 %v1300
  %v1368 = vunpack.c.h.b16 %v1300
  %v1369 = vunpack.c.l.b16 %v1301
  %v1370 = vunpack.c.h.b16 %v1301
  %v1371 = vunpack.c.l.b16 %v1302
  %v1372 = vunpack.c.h.b16 %v1302
  %v1373 = vunpack.c.l.b16 %v1303
  %v1374 = vunpack.c.h.b16 %v1303
  %v1375 = vunpack.c.l.b16 %v1304
  %v1376 = vunpack.c.h.b16 %v1304
  %v1377 = vunpack.c.l.b16 %v1305
  %v1378 = vunpack.c.h.b16 %v1305
  %v1379 = vunpack.c.l.b16 %v1306
  %v1380 = vunpack.c.h.b16 %v1306
  %v1381 = vunpack.c.l.b16 %v1307
  %v1382 = vunpack.c.h.b16 %v1307
  %v1383 = vunpack.c.l.b16 %v1308
  %v1384 = vunpack.c.h.b16 %v1308
  %v1385 = vunpack.c.l.b16 %v1309
  %v1386 = vunpack.c.h.b16 %v1309
  %v1387 = vunpack.c.l.b16 %v1310
  %v1388 = vunpack.c.h.b16 %v1310
  %v1389 = vunpack.c.l.b16 %v1311
  %v1390 = vunpack.c.h.b16 %v1311
  %v1391 = vunpack.c.l.b16 %v1312
  %v1392 = vunpack.c.h.b16 %v1312
  %v1393 = vunpack.c.l.b16 %v1313
  %v1394 = vunpack.c.h.b16 %v1313
  %v1395 = vunpack.c.l.b16 %v1314
  %v1396 = vunpack.c.h.b16 %v1314
  %v1397 = vunpack.c.l.b16 %v1315
  %v1398 = vunpack.c.h.b16 %v1315
  %v1399 = vunpack.c.l.b16 %v1316
  %v1400 = vunpack.c.h.b16 %v1316
  %v1401 = vunpack.c.l.b16 %v1317
  %v1402 = vunpack.c.h.b16 %v1317
  %v1403 = vunpack.c.l.b16 %v1318
  %v1404 = vunpack.c.h.b16 %v1318
  %v1405 = vunpack.c.l.b16 %v1319
  %v1406 = vunpack.c.h.b16 %v1319
  %v1407 = vunpack.c.l.b16 %v1320
  %v1408 = vunpack.c.h.b16 %v1320
  %v1409 = vunpack.c.l.b16 %v1321
  %v1410 = vunpack.c.h.b16 %v1321
  %v1411 = vunpack.c.l.b16 %v1322
  %v1412 = vunpack.c.h.b16 %v1322
  %v1413 = vunpack.c.l.b16 %v1323
  %v1414 = vunpack.c.h.b16 %v1323
  %v1415 = vunpack.c.l.b16 %v1324
  %v1416 = vunpack.c.h.b16 %v1324
  %v1417 = vunpack.c.l.b16 %v1325
  %v1418 = vunpack.c.h.b16 %v1325
  %v1419 = vunpack.c.l.b16 %v1326
  %v1420 = vunpack.c.h.b16 %v1326
  %v1421 = vunpack.c.l.b16 %v1327
  %v1422 = vunpack.c.h.b16 %v1327
  %v1423 = vunpack.c.l.b16 %v1328
  %v1424 = vunpack.c.h.b16 %v1328
  %v1425 = vpack.c.b16 %v1365, %v1361
  %v1426 = vpack.c.b16 %v1366, %v1362
  %v1427 = vpack.c.b16 %v1367, %v1363
  %v1428 = vpack.c.b16 %v1368, %v1364
  %v1429 = vpack.c.b16 %v1373, %v1369
  %v1430 = vpack.c.b16 %v1374, %v1370
  %v1431 = vpack.c.b16 %v1375, %v1371
  %v1432 = vpack.c.b16 %v1376, %v1372
  %v1433 = vpack.c.b16 %v1381, %v1377
  %v1434 = vpack.c.b16 %v1382, %v1378
  %v1435 = vpack.c.b16 %v1383, %v1379
  %v1436 = vpack.c.b16 %v1384, %v1380
  %v1437 = vpack.c.b16 %v1389, %v1385
  %v1438 = vpack.c.b16 %v1390, %v1386
  %v1439 = vpack.c.b16 %v1391, %v1387
  %v1440 = vpack.c.b16 %v1392, %v1388
  %v1441 = vpack.c.b16 %v1397, %v1393
  %v1442 = vpack.c.b16 %v1398, %v1394
  %v1443 = vpack.c.b16 %v1399, %v1395
  %v1444 = vpack.c.b16 %v1400, %v1396
  %v1445 = vpack.c.b16 %v1405, %v1401
  %v1446 = vpack.c.b16 %v1406, %v1402
  %v1447 = vpack.c.b16 %v1407, %v1403
  %v1448 = vpack.c.b16 %v1408, %v1404
  %v1449 = vpack.c.b16 %v1413, %v1409
  %v1450 = vpack.c.b16 %v1414, %v1410
  %v1451 = vpack.c.b16 %v1415, %v1411
  %v1452 = vpack.c.b16 %v1416, %v1412
  %v1453 = vpack.c.b16 %v1421, %v1417
  %v1454 = vpack.c.b16 %v1422, %v1418
  %v1455 = vpack.c.b16 %v1423, %v1419
  %v1456 = vpack.c.b16 %v1424, %v1420
  %1489 = vmatpush.bf16.msra.mxu0 %v1453
  %1490 = vmatpush.bf16.msra.mxu0 %v1449
  %1491 = vmatpush.bf16.msra.mxu0 %v1445
  %1492 = vmatpush.bf16.msra.mxu0 %v1441
  %1493 = vmatpush.bf16.msra.mxu0 %v1437
  %1494 = vmatpush.bf16.msra.mxu0 %v1433
  %1495 = vmatpush.bf16.msra.mxu0 %v1429
  %1496 = vmatpush.bf16.msra.mxu0 %v1425
  %1497 = vmatmul.bf16.gmra.mxu0 %v1296
  %v1498 = vpop.f32.mrf.mxu0
  %v1499 = vadd.f32 0.0, %v1498
  %v1500 = vpop.f32.mrf.mxu0
  %1501 = vdwg.mxu0
  %1502 = vmatpush.bf16.msra.mxu0 %v1454
  %1503 = vmatpush.bf16.msra.mxu0 %v1450
  %1504 = vmatpush.bf16.msra.mxu0 %v1446
  %1505 = vmatpush.bf16.msra.mxu0 %v1442
  %1506 = vmatpush.bf16.msra.mxu0 %v1438
  %1507 = vmatpush.bf16.msra.mxu0 %v1434
  %1508 = vmatpush.bf16.msra.mxu0 %v1430
  %1509 = vmatpush.bf16.msra.mxu0 %v1426
  %1510 = vmatmul.bf16.gmra.mxu0 %v1296
  %v1511 = vpop.f32.mrf.mxu0
  %v1512 = vadd.f32 0.0, %v1511
  %v1513 = vpop.f32.mrf.mxu0
  %1514 = vdwg.mxu0
  %1515 = vmatpush.bf16.msra.mxu0 %v1455
  %1516 = vmatpush.bf16.msra.mxu0 %v1451
  %1517 = vmatpush.bf16.msra.mxu0 %v1447
  %1518 = vmatpush.bf16.msra.mxu0 %v1443
  %1519 = vmatpush.bf16.msra.mxu0 %v1439
  %1520 = vmatpush.bf16.msra.mxu0 %v1435
  %1521 = vmatpush.bf16.msra.mxu0 %v1431
  %1522 = vmatpush.bf16.msra.mxu0 %v1427
  %1523 = vmatmul.bf16.gmra.mxu0 %v1296
  %v1524 = vpop.f32.mrf.mxu0
  %v1525 = vadd.f32 0.0, %v1524
  %v1526 = vpop.f32.mrf.mxu0
  %1527 = vdwg.mxu0
  %1528 = vmatpush.bf16.msra.mxu0 %v1456
  %1529 = vmatpush.bf16.msra.mxu0 %v1452
  %1530 = vmatpush.bf16.msra.mxu0 %v1448
  %1531 = vmatpush.bf16.msra.mxu0 %v1444
  %1532 = vmatpush.bf16.msra.mxu0 %v1440
  %1533 = vmatpush.bf16.msra.mxu0 %v1436
  %1534 = vmatpush.bf16.msra.mxu0 %v1432
  %1535 = vmatpush.bf16.msra.mxu0 %v1428
  %1536 = vmatmul.bf16.gmra.mxu0 %v1296
  %v1537 = vpop.f32.mrf.mxu0
  %v1538 = vadd.f32 0.0, %v1537
  %v1539 = vpop.f32.mrf.mxu0
  %1540 = vdwg.mxu0
  %v1541 = vadd.f32 %v1292, %v1499
  %v1542 = vadd.f32 %v1293, %v1512
  %v1543 = vadd.f32 %v1294, %v1525
  %v1544 = vadd.f32 %v1295, %v1538
  %v1545 = vxor.u32 %v1541, 2147483648
  %v1546 = vmul.f32 %v1545, 1.442695
  %v1547 = vpow.pop %v1546
  %v1548 = vadd.f32 %v1547, 1.0
  %v1549 = vrcp.pop %v1548
  %v1550 = vmul.f32 %v1548, %v1549
  %v1551 = vsub.f32 1.0, %v1550
  %v1552 = vmul.f32 %v1549, %v1551
  %v1553 = vadd.f32 %v1549, %v1552
  %vm1554 = vweird.f32 %v1548
  %vm1555 = vweird.f32 %v1549
  %vm1556 = vmor %vm1554, %vm1555
  %v1557 = vsel %vm1556, %v1549, %v1553
  %v1558 = vand.u32 2147483647, %v1548
  %vm1559 = vcmp.eq.f32.partialorder %v1558, 8.507059e+37
  %v1560 = vand.u32 %v1548, 2147483648
  %v1561 = vor.u32 1.1754944e-38, %v1560
  %v1562 = vsel %vm1559, %v1561, %v1557
  %v1563 = vmul.f32 1.0, %v1562
  %v1564 = vxor.u32 %v1542, 2147483648
  %v1565 = vmul.f32 %v1564, 1.442695
  %v1566 = vpow.pop %v1565
  %v1567 = vadd.f32 %v1566, 1.0
  %v1568 = vrcp.pop %v1567
  %v1569 = vmul.f32 %v1567, %v1568
  %v1570 = vsub.f32 1.0, %v1569
  %v1571 = vmul.f32 %v1568, %v1570
  %v1572 = vadd.f32 %v1568, %v1571
  %vm1573 = vweird.f32 %v1567
  %vm1574 = vweird.f32 %v1568
  %vm1575 = vmor %vm1573, %vm1574
  %v1576 = vsel %vm1575, %v1568, %v1572
  %v1577 = vand.u32 2147483647, %v1567
  %vm1578 = vcmp.eq.f32.partialorder %v1577, 8.507059e+37
  %v1579 = vand.u32 %v1567, 2147483648
  %v1580 = vor.u32 1.1754944e-38, %v1579
  %v1581 = vsel %vm1578, %v1580, %v1576
  %v1582 = vmul.f32 1.0, %v1581
  %v1583 = vtanh.pop %v1543
  %v1584 = vxor.u32 %v1544, 2147483648
  %v1585 = vmul.f32 %v1584, 1.442695
  %v1586 = vpow.pop %v1585
  %v1587 = vadd.f32 %v1586, 1.0
  %v1588 = vrcp.pop %v1587
  %v1589 = vmul.f32 %v1587, %v1588
  %v1590 = vsub.f32 1.0, %v1589
  %v1591 = vmul.f32 %v1588, %v1590
  %v1592 = vadd.f32 %v1588, %v1591
  %vm1593 = vweird.f32 %v1587
  %vm1594 = vweird.f32 %v1588
  %vm1595 = vmor %vm1593, %vm1594
  %v1596 = vsel %vm1595, %v1588, %v1592
  %v1597 = vand.u32 2147483647, %v1587
  %vm1598 = vcmp.eq.f32.partialorder %v1597, 8.507059e+37
  %v1599 = vand.u32 %v1587, 2147483648
  %v1600 = vor.u32 1.1754944e-38, %v1599
  %v1601 = vsel %vm1598, %v1600, %v1596
  %v1602 = vmul.f32 1.0, %v1601
  %v1603 = vmul.f32 %v1582, %v1286
  %v1604 = vmul.f32 %v1563, %v1583
  %v1605 = vadd.f32 %v1603, %v1604
  %v1606 = vtanh.pop %v1605
  %v1607 = vmul.f32 %v1602, %v1606
  %s1608 = scalar_lea.vmem [#allocation2], 32
  %1609 = vst [vmem:[%s1608] sm:$0xff] %v1607
  %s1610 = scalar_lea.vmem %s0, 160
  %v1611 = vld [vmem:[%s1610] sm:$0xff]
  %v1612 = vld [vmem:[%s1610 + $0x8] sm:$0xff]
  %v1613 = vld [vmem:[%s1610 + $0x10] sm:$0xff]
  %v1614 = vld [vmem:[%s1610 + $0x18] sm:$0xff]
  %v1615 = vpack.c.bf16 %v1607, %v1607
  %v1616 = vld [vmem:[%s1] sm:$0xff]
  %v1617 = vld [vmem:[%s1 + $0x8] sm:$0xff]
  %v1618 = vld [vmem:[%s1 + $0x10] sm:$0xff]
  %v1619 = vld [vmem:[%s1 + $0x18] sm:$0xff]
  %v1620 = vld [vmem:[%s1 + $0x20] sm:$0xff]
  %v1621 = vld [vmem:[%s1 + $0x28] sm:$0xff]
  %v1622 = vld [vmem:[%s1 + $0x30] sm:$0xff]
  %v1623 = vld [vmem:[%s1 + $0x38] sm:$0xff]
  %v1624 = vld [vmem:[%s1 + $0x40] sm:$0xff]
  %v1625 = vld [vmem:[%s1 + $0x48] sm:$0xff]
  %v1626 = vld [vmem:[%s1 + $0x50] sm:$0xff]
  %v1627 = vld [vmem:[%s1 + $0x58] sm:$0xff]
  %v1628 = vld [vmem:[%s1 + $0x60] sm:$0xff]
  %v1629 = vld [vmem:[%s1 + $0x68] sm:$0xff]
  %v1630 = vld [vmem:[%s1 + $0x70] sm:$0xff]
  %v1631 = vld [vmem:[%s1 + $0x78] sm:$0xff]
  %v1632 = vld [vmem:[%s1 + $0x80] sm:$0xff]
  %v1633 = vld [vmem:[%s1 + $0x88] sm:$0xff]
  %v1634 = vld [vmem:[%s1 + $0x90] sm:$0xff]
  %v1635 = vld [vmem:[%s1 + $0x98] sm:$0xff]
  %v1636 = vld [vmem:[%s1 + $0xa0] sm:$0xff]
  %v1637 = vld [vmem:[%s1 + $0xa8] sm:$0xff]
  %v1638 = vld [vmem:[%s1 + $0xb0] sm:$0xff]
  %v1639 = vld [vmem:[%s1 + $0xb8] sm:$0xff]
  %v1640 = vld [vmem:[%s1 + $0xc0] sm:$0xff]
  %v1641 = vld [vmem:[%s1 + $0xc8] sm:$0xff]
  %v1642 = vld [vmem:[%s1 + $0xd0] sm:$0xff]
  %v1643 = vld [vmem:[%s1 + $0xd8] sm:$0xff]
  %v1644 = vld [vmem:[%s1 + $0xe0] sm:$0xff]
  %v1645 = vld [vmem:[%s1 + $0xe8] sm:$0xff]
  %v1646 = vld [vmem:[%s1 + $0xf0] sm:$0xff]
  %v1647 = vld [vmem:[%s1 + $0xf8] sm:$0xff]
  %v1680 = vunpack.c.l.b16 %v1616
  %v1681 = vunpack.c.h.b16 %v1616
  %v1682 = vunpack.c.l.b16 %v1617
  %v1683 = vunpack.c.h.b16 %v1617
  %v1684 = vunpack.c.l.b16 %v1618
  %v1685 = vunpack.c.h.b16 %v1618
  %v1686 = vunpack.c.l.b16 %v1619
  %v1687 = vunpack.c.h.b16 %v1619
  %v1688 = vunpack.c.l.b16 %v1620
  %v1689 = vunpack.c.h.b16 %v1620
  %v1690 = vunpack.c.l.b16 %v1621
  %v1691 = vunpack.c.h.b16 %v1621
  %v1692 = vunpack.c.l.b16 %v1622
  %v1693 = vunpack.c.h.b16 %v1622
  %v1694 = vunpack.c.l.b16 %v1623
  %v1695 = vunpack.c.h.b16 %v1623
  %v1696 = vunpack.c.l.b16 %v1624
  %v1697 = vunpack.c.h.b16 %v1624
  %v1698 = vunpack.c.l.b16 %v1625
  %v1699 = vunpack.c.h.b16 %v1625
  %v1700 = vunpack.c.l.b16 %v1626
  %v1701 = vunpack.c.h.b16 %v1626
  %v1702 = vunpack.c.l.b16 %v1627
  %v1703 = vunpack.c.h.b16 %v1627
  %v1704 = vunpack.c.l.b16 %v1628
  %v1705 = vunpack.c.h.b16 %v1628
  %v1706 = vunpack.c.l.b16 %v1629
  %v1707 = vunpack.c.h.b16 %v1629
  %v1708 = vunpack.c.l.b16 %v1630
  %v1709 = vunpack.c.h.b16 %v1630
  %v1710 = vunpack.c.l.b16 %v1631
  %v1711 = vunpack.c.h.b16 %v1631
  %v1712 = vunpack.c.l.b16 %v1632
  %v1713 = vunpack.c.h.b16 %v1632
  %v1714 = vunpack.c.l.b16 %v1633
  %v1715 = vunpack.c.h.b16 %v1633
  %v1716 = vunpack.c.l.b16 %v1634
  %v1717 = vunpack.c.h.b16 %v1634
  %v1718 = vunpack.c.l.b16 %v1635
  %v1719 = vunpack.c.h.b16 %v1635
  %v1720 = vunpack.c.l.b16 %v1636
  %v1721 = vunpack.c.h.b16 %v1636
  %v1722 = vunpack.c.l.b16 %v1637
  %v1723 = vunpack.c.h.b16 %v1637
  %v1724 = vunpack.c.l.b16 %v1638
  %v1725 = vunpack.c.h.b16 %v1638
  %v1726 = vunpack.c.l.b16 %v1639
  %v1727 = vunpack.c.h.b16 %v1639
  %v1728 = vunpack.c.l.b16 %v1640
  %v1729 = vunpack.c.h.b16 %v1640
  %v1730 = vunpack.c.l.b16 %v1641
  %v1731 = vunpack.c.h.b16 %v1641
  %v1732 = vunpack.c.l.b16 %v1642
  %v1733 = vunpack.c.h.b16 %v1642
  %v1734 = vunpack.c.l.b16 %v1643
  %v1735 = vunpack.c.h.b16 %v1643
  %v1736 = vunpack.c.l.b16 %v1644
  %v1737 = vunpack.c.h.b16 %v1644
  %v1738 = vunpack.c.l.b16 %v1645
  %v1739 = vunpack.c.h.b16 %v1645
  %v1740 = vunpack.c.l.b16 %v1646
  %v1741 = vunpack.c.h.b16 %v1646
  %v1742 = vunpack.c.l.b16 %v1647
  %v1743 = vunpack.c.h.b16 %v1647
  %v1744 = vpack.c.b16 %v1684, %v1680
  %v1745 = vpack.c.b16 %v1685, %v1681
  %v1746 = vpack.c.b16 %v1686, %v1682
  %v1747 = vpack.c.b16 %v1687, %v1683
  %v1748 = vpack.c.b16 %v1692, %v1688
  %v1749 = vpack.c.b16 %v1693, %v1689
  %v1750 = vpack.c.b16 %v1694, %v1690
  %v1751 = vpack.c.b16 %v1695, %v1691
  %v1752 = vpack.c.b16 %v1700, %v1696
  %v1753 = vpack.c.b16 %v1701, %v1697
  %v1754 = vpack.c.b16 %v1702, %v1698
  %v1755 = vpack.c.b16 %v1703, %v1699
  %v1756 = vpack.c.b16 %v1708, %v1704
  %v1757 = vpack.c.b16 %v1709, %v1705
  %v1758 = vpack.c.b16 %v1710, %v1706
  %v1759 = vpack.c.b16 %v1711, %v1707
  %v1760 = vpack.c.b16 %v1716, %v1712
  %v1761 = vpack.c.b16 %v1717, %v1713
  %v1762 = vpack.c.b16 %v1718, %v1714
  %v1763 = vpack.c.b16 %v1719, %v1715
  %v1764 = vpack.c.b16 %v1724, %v1720
  %v1765 = vpack.c.b16 %v1725, %v1721
  %v1766 = vpack.c.b16 %v1726, %v1722
  %v1767 = vpack.c.b16 %v1727, %v1723
  %v1768 = vpack.c.b16 %v1732, %v1728
  %v1769 = vpack.c.b16 %v1733, %v1729
  %v1770 = vpack.c.b16 %v1734, %v1730
  %v1771 = vpack.c.b16 %v1735, %v1731
  %v1772 = vpack.c.b16 %v1740, %v1736
  %v1773 = vpack.c.b16 %v1741, %v1737
  %v1774 = vpack.c.b16 %v1742, %v1738
  %v1775 = vpack.c.b16 %v1743, %v1739
  %1808 = vmatpush.bf16.msra.mxu0 %v1772
  %1809 = vmatpush.bf16.msra.mxu0 %v1768
  %1810 = vmatpush.bf16.msra.mxu0 %v1764
  %1811 = vmatpush.bf16.msra.mxu0 %v1760
  %1812 = vmatpush.bf16.msra.mxu0 %v1756
  %1813 = vmatpush.bf16.msra.mxu0 %v1752
  %1814 = vmatpush.bf16.msra.mxu0 %v1748
  %1815 = vmatpush.bf16.msra.mxu0 %v1744
  %1816 = vmatmul.bf16.gmra.mxu0 %v1615
  %v1817 = vpop.f32.mrf.mxu0
  %v1818 = vadd.f32 0.0, %v1817
  %v1819 = vpop.f32.mrf.mxu0
  %1820 = vdwg.mxu0
  %1821 = vmatpush.bf16.msra.mxu0 %v1773
  %1822 = vmatpush.bf16.msra.mxu0 %v1769
  %1823 = vmatpush.bf16.msra.mxu0 %v1765
  %1824 = vmatpush.bf16.msra.mxu0 %v1761
  %1825 = vmatpush.bf16.msra.mxu0 %v1757
  %1826 = vmatpush.bf16.msra.mxu0 %v1753
  %1827 = vmatpush.bf16.msra.mxu0 %v1749
  %1828 = vmatpush.bf16.msra.mxu0 %v1745
  %1829 = vmatmul.bf16.gmra.mxu0 %v1615
  %v1830 = vpop.f32.mrf.mxu0
  %v1831 = vadd.f32 0.0, %v1830
  %v1832 = vpop.f32.mrf.mxu0
  %1833 = vdwg.mxu0
  %1834 = vmatpush.bf16.msra.mxu0 %v1774
  %1835 = vmatpush.bf16.msra.mxu0 %v1770
  %1836 = vmatpush.bf16.msra.mxu0 %v1766
  %1837 = vmatpush.bf16.msra.mxu0 %v1762
  %1838 = vmatpush.bf16.msra.mxu0 %v1758
  %1839 = vmatpush.bf16.msra.mxu0 %v1754
  %1840 = vmatpush.bf16.msra.mxu0 %v1750
  %1841 = vmatpush.bf16.msra.mxu0 %v1746
  %1842 = vmatmul.bf16.gmra.mxu0 %v1615
  %v1843 = vpop.f32.mrf.mxu0
  %v1844 = vadd.f32 0.0, %v1843
  %v1845 = vpop.f32.mrf.mxu0
  %1846 = vdwg.mxu0
  %1847 = vmatpush.bf16.msra.mxu0 %v1775
  %1848 = vmatpush.bf16.msra.mxu0 %v1771
  %1849 = vmatpush.bf16.msra.mxu0 %v1767
  %1850 = vmatpush.bf16.msra.mxu0 %v1763
  %1851 = vmatpush.bf16.msra.mxu0 %v1759
  %1852 = vmatpush.bf16.msra.mxu0 %v1755
  %1853 = vmatpush.bf16.msra.mxu0 %v1751
  %1854 = vmatpush.bf16.msra.mxu0 %v1747
  %1855 = vmatmul.bf16.gmra.mxu0 %v1615
  %v1856 = vpop.f32.mrf.mxu0
  %v1857 = vadd.f32 0.0, %v1856
  %v1858 = vpop.f32.mrf.mxu0
  %1859 = vdwg.mxu0
  %v1860 = vadd.f32 %v1611, %v1818
  %v1861 = vadd.f32 %v1612, %v1831
  %v1862 = vadd.f32 %v1613, %v1844
  %v1863 = vadd.f32 %v1614, %v1857
  %v1864 = vxor.u32 %v1860, 2147483648
  %v1865 = vmul.f32 %v1864, 1.442695
  %v1866 = vpow.pop %v1865
  %v1867 = vadd.f32 %v1866, 1.0
  %v1868 = vrcp.pop %v1867
  %v1869 = vmul.f32 %v1867, %v1868
  %v1870 = vsub.f32 1.0, %v1869
  %v1871 = vmul.f32 %v1868, %v1870
  %v1872 = vadd.f32 %v1868, %v1871
  %vm1873 = vweird.f32 %v1867
  %vm1874 = vweird.f32 %v1868
  %vm1875 = vmor %vm1873, %vm1874
  %v1876 = vsel %vm1875, %v1868, %v1872
  %v1877 = vand.u32 2147483647, %v1867
  %vm1878 = vcmp.eq.f32.partialorder %v1877, 8.507059e+37
  %v1879 = vand.u32 %v1867, 2147483648
  %v1880 = vor.u32 1.1754944e-38, %v1879
  %v1881 = vsel %vm1878, %v1880, %v1876
  %v1882 = vmul.f32 1.0, %v1881
  %v1883 = vxor.u32 %v1861, 2147483648
  %v1884 = vmul.f32 %v1883, 1.442695
  %v1885 = vpow.pop %v1884
  %v1886 = vadd.f32 %v1885, 1.0
  %v1887 = vrcp.pop %v1886
  %v1888 = vmul.f32 %v1886, %v1887
  %v1889 = vsub.f32 1.0, %v1888
  %v1890 = vmul.f32 %v1887, %v1889
  %v1891 = vadd.f32 %v1887, %v1890
  %vm1892 = vweird.f32 %v1886
  %vm1893 = vweird.f32 %v1887
  %vm1894 = vmor %vm1892, %vm1893
  %v1895 = vsel %vm1894, %v1887, %v1891
  %v1896 = vand.u32 2147483647, %v1886
  %vm1897 = vcmp.eq.f32.partialorder %v1896, 8.507059e+37
  %v1898 = vand.u32 %v1886, 2147483648
  %v1899 = vor.u32 1.1754944e-38, %v1898
  %v1900 = vsel %vm1897, %v1899, %v1895
  %v1901 = vmul.f32 1.0, %v1900
  %v1902 = vtanh.pop %v1862
  %v1903 = vxor.u32 %v1863, 2147483648
  %v1904 = vmul.f32 %v1903, 1.442695
  %v1905 = vpow.pop %v1904
  %v1906 = vadd.f32 %v1905, 1.0
  %v1907 = vrcp.pop %v1906
  %v1908 = vmul.f32 %v1906, %v1907
  %v1909 = vsub.f32 1.0, %v1908
  %v1910 = vmul.f32 %v1907, %v1909
  %v1911 = vadd.f32 %v1907, %v1910
  %vm1912 = vweird.f32 %v1906
  %vm1913 = vweird.f32 %v1907
  %vm1914 = vmor %vm1912, %vm1913
  %v1915 = vsel %vm1914, %v1907, %v1911
  %v1916 = vand.u32 2147483647, %v1906
  %vm1917 = vcmp.eq.f32.partialorder %v1916, 8.507059e+37
  %v1918 = vand.u32 %v1906, 2147483648
  %v1919 = vor.u32 1.1754944e-38, %v1918
  %v1920 = vsel %vm1917, %v1919, %v1915
  %v1921 = vmul.f32 1.0, %v1920
  %v1922 = vmul.f32 %v1901, %v1605
  %v1923 = vmul.f32 %v1882, %v1902
  %v1924 = vadd.f32 %v1922, %v1923
  %v1925 = vtanh.pop %v1924
  %v1926 = vmul.f32 %v1921, %v1925
  %s1927 = scalar_lea.vmem [#allocation2], 40
  %1928 = vst [vmem:[%s1927] sm:$0xff] %v1926
  %s1929 = scalar_lea.vmem %s0, 192
  %v1930 = vld [vmem:[%s1929] sm:$0xff]
  %v1931 = vld [vmem:[%s1929 + $0x8] sm:$0xff]
  %v1932 = vld [vmem:[%s1929 + $0x10] sm:$0xff]
  %v1933 = vld [vmem:[%s1929 + $0x18] sm:$0xff]
  %v1934 = vpack.c.bf16 %v1926, %v1926
  %v1935 = vld [vmem:[%s1] sm:$0xff]
  %v1936 = vld [vmem:[%s1 + $0x8] sm:$0xff]
  %v1937 = vld [vmem:[%s1 + $0x10] sm:$0xff]
  %v1938 = vld [vmem:[%s1 + $0x18] sm:$0xff]
  %v1939 = vld [vmem:[%s1 + $0x20] sm:$0xff]
  %v1940 = vld [vmem:[%s1 + $0x28] sm:$0xff]
  %v1941 = vld [vmem:[%s1 + $0x30] sm:$0xff]
  %v1942 = vld [vmem:[%s1 + $0x38] sm:$0xff]
  %v1943 = vld [vmem:[%s1 + $0x40] sm:$0xff]
  %v1944 = vld [vmem:[%s1 + $0x48] sm:$0xff]
  %v1945 = vld [vmem:[%s1 + $0x50] sm:$0xff]
  %v1946 = vld [vmem:[%s1 + $0x58] sm:$0xff]
  %v1947 = vld [vmem:[%s1 + $0x60] sm:$0xff]
  %v1948 = vld [vmem:[%s1 + $0x68] sm:$0xff]
  %v1949 = vld [vmem:[%s1 + $0x70] sm:$0xff]
  %v1950 = vld [vmem:[%s1 + $0x78] sm:$0xff]
  %v1951 = vld [vmem:[%s1 + $0x80] sm:$0xff]
  %v1952 = vld [vmem:[%s1 + $0x88] sm:$0xff]
  %v1953 = vld [vmem:[%s1 + $0x90] sm:$0xff]
  %v1954 = vld [vmem:[%s1 + $0x98] sm:$0xff]
  %v1955 = vld [vmem:[%s1 + $0xa0] sm:$0xff]
  %v1956 = vld [vmem:[%s1 + $0xa8] sm:$0xff]
  %v1957 = vld [vmem:[%s1 + $0xb0] sm:$0xff]
  %v1958 = vld [vmem:[%s1 + $0xb8] sm:$0xff]
  %v1959 = vld [vmem:[%s1 + $0xc0] sm:$0xff]
  %v1960 = vld [vmem:[%s1 + $0xc8] sm:$0xff]
  %v1961 = vld [vmem:[%s1 + $0xd0] sm:$0xff]
  %v1962 = vld [vmem:[%s1 + $0xd8] sm:$0xff]
  %v1963 = vld [vmem:[%s1 + $0xe0] sm:$0xff]
  %v1964 = vld [vmem:[%s1 + $0xe8] sm:$0xff]
  %v1965 = vld [vmem:[%s1 + $0xf0] sm:$0xff]
  %v1966 = vld [vmem:[%s1 + $0xf8] sm:$0xff]
  %v1999 = vunpack.c.l.b16 %v1935
  %v2000 = vunpack.c.h.b16 %v1935
  %v2001 = vunpack.c.l.b16 %v1936
  %v2002 = vunpack.c.h.b16 %v1936
  %v2003 = vunpack.c.l.b16 %v1937
  %v2004 = vunpack.c.h.b16 %v1937
  %v2005 = vunpack.c.l.b16 %v1938
  %v2006 = vunpack.c.h.b16 %v1938
  %v2007 = vunpack.c.l.b16 %v1939
  %v2008 = vunpack.c.h.b16 %v1939
  %v2009 = vunpack.c.l.b16 %v1940
  %v2010 = vunpack.c.h.b16 %v1940
  %v2011 = vunpack.c.l.b16 %v1941
  %v2012 = vunpack.c.h.b16 %v1941
  %v2013 = vunpack.c.l.b16 %v1942
  %v2014 = vunpack.c.h.b16 %v1942
  %v2015 = vunpack.c.l.b16 %v1943
  %v2016 = vunpack.c.h.b16 %v1943
  %v2017 = vunpack.c.l.b16 %v1944
  %v2018 = vunpack.c.h.b16 %v1944
  %v2019 = vunpack.c.l.b16 %v1945
  %v2020 = vunpack.c.h.b16 %v1945
  %v2021 = vunpack.c.l.b16 %v1946
  %v2022 = vunpack.c.h.b16 %v1946
  %v2023 = vunpack.c.l.b16 %v1947
  %v2024 = vunpack.c.h.b16 %v1947
  %v2025 = vunpack.c.l.b16 %v1948
  %v2026 = vunpack.c.h.b16 %v1948
  %v2027 = vunpack.c.l.b16 %v1949
  %v2028 = vunpack.c.h.b16 %v1949
  %v2029 = vunpack.c.l.b16 %v1950
  %v2030 = vunpack.c.h.b16 %v1950
  %v2031 = vunpack.c.l.b16 %v1951
  %v2032 = vunpack.c.h.b16 %v1951
  %v2033 = vunpack.c.l.b16 %v1952
  %v2034 = vunpack.c.h.b16 %v1952
  %v2035 = vunpack.c.l.b16 %v1953
  %v2036 = vunpack.c.h.b16 %v1953
  %v2037 = vunpack.c.l.b16 %v1954
  %v2038 = vunpack.c.h.b16 %v1954
  %v2039 = vunpack.c.l.b16 %v1955
  %v2040 = vunpack.c.h.b16 %v1955
  %v2041 = vunpack.c.l.b16 %v1956
  %v2042 = vunpack.c.h.b16 %v1956
  %v2043 = vunpack.c.l.b16 %v1957
  %v2044 = vunpack.c.h.b16 %v1957
  %v2045 = vunpack.c.l.b16 %v1958
  %v2046 = vunpack.c.h.b16 %v1958
  %v2047 = vunpack.c.l.b16 %v1959
  %v2048 = vunpack.c.h.b16 %v1959
  %v2049 = vunpack.c.l.b16 %v1960
  %v2050 = vunpack.c.h.b16 %v1960
  %v2051 = vunpack.c.l.b16 %v1961
  %v2052 = vunpack.c.h.b16 %v1961
  %v2053 = vunpack.c.l.b16 %v1962
  %v2054 = vunpack.c.h.b16 %v1962
  %v2055 = vunpack.c.l.b16 %v1963
  %v2056 = vunpack.c.h.b16 %v1963
  %v2057 = vunpack.c.l.b16 %v1964
  %v2058 = vunpack.c.h.b16 %v1964
  %v2059 = vunpack.c.l.b16 %v1965
  %v2060 = vunpack.c.h.b16 %v1965
  %v2061 = vunpack.c.l.b16 %v1966
  %v2062 = vunpack.c.h.b16 %v1966
  %v2063 = vpack.c.b16 %v2003, %v1999
  %v2064 = vpack.c.b16 %v2004, %v2000
  %v2065 = vpack.c.b16 %v2005, %v2001
  %v2066 = vpack.c.b16 %v2006, %v2002
  %v2067 = vpack.c.b16 %v2011, %v2007
  %v2068 = vpack.c.b16 %v2012, %v2008
  %v2069 = vpack.c.b16 %v2013, %v2009
  %v2070 = vpack.c.b16 %v2014, %v2010
  %v2071 = vpack.c.b16 %v2019, %v2015
  %v2072 = vpack.c.b16 %v2020, %v2016
  %v2073 = vpack.c.b16 %v2021, %v2017
  %v2074 = vpack.c.b16 %v2022, %v2018
  %v2075 = vpack.c.b16 %v2027, %v2023
  %v2076 = vpack.c.b16 %v2028, %v2024
  %v2077 = vpack.c.b16 %v2029, %v2025
  %v2078 = vpack.c.b16 %v2030, %v2026
  %v2079 = vpack.c.b16 %v2035, %v2031
  %v2080 = vpack.c.b16 %v2036, %v2032
  %v2081 = vpack.c.b16 %v2037, %v2033
  %v2082 = vpack.c.b16 %v2038, %v2034
  %v2083 = vpack.c.b16 %v2043, %v2039
  %v2084 = vpack.c.b16 %v2044, %v2040
  %v2085 = vpack.c.b16 %v2045, %v2041
  %v2086 = vpack.c.b16 %v2046, %v2042
  %v2087 = vpack.c.b16 %v2051, %v2047
  %v2088 = vpack.c.b16 %v2052, %v2048
  %v2089 = vpack.c.b16 %v2053, %v2049
  %v2090 = vpack.c.b16 %v2054, %v2050
  %v2091 = vpack.c.b16 %v2059, %v2055
  %v2092 = vpack.c.b16 %v2060, %v2056
  %v2093 = vpack.c.b16 %v2061, %v2057
  %v2094 = vpack.c.b16 %v2062, %v2058
  %2127 = vmatpush.bf16.msra.mxu0 %v2091
  %2128 = vmatpush.bf16.msra.mxu0 %v2087
  %2129 = vmatpush.bf16.msra.mxu0 %v2083
  %2130 = vmatpush.bf16.msra.mxu0 %v2079
  %2131 = vmatpush.bf16.msra.mxu0 %v2075
  %2132 = vmatpush.bf16.msra.mxu0 %v2071
  %2133 = vmatpush.bf16.msra.mxu0 %v2067
  %2134 = vmatpush.bf16.msra.mxu0 %v2063
  %2135 = vmatmul.bf16.gmra.mxu0 %v1934
  %v2136 = vpop.f32.mrf.mxu0
  %v2137 = vadd.f32 0.0, %v2136
  %v2138 = vpop.f32.mrf.mxu0
  %2139 = vdwg.mxu0
  %2140 = vmatpush.bf16.msra.mxu0 %v2092
  %2141 = vmatpush.bf16.msra.mxu0 %v2088
  %2142 = vmatpush.bf16.msra.mxu0 %v2084
  %2143 = vmatpush.bf16.msra.mxu0 %v2080
  %2144 = vmatpush.bf16.msra.mxu0 %v2076
  %2145 = vmatpush.bf16.msra.mxu0 %v2072
  %2146 = vmatpush.bf16.msra.mxu0 %v2068
  %2147 = vmatpush.bf16.msra.mxu0 %v2064
  %2148 = vmatmul.bf16.gmra.mxu0 %v1934
  %v2149 = vpop.f32.mrf.mxu0
  %v2150 = vadd.f32 0.0, %v2149
  %v2151 = vpop.f32.mrf.mxu0
  %2152 = vdwg.mxu0
  %2153 = vmatpush.bf16.msra.mxu0 %v2093
  %2154 = vmatpush.bf16.msra.mxu0 %v2089
  %2155 = vmatpush.bf16.msra.mxu0 %v2085
  %2156 = vmatpush.bf16.msra.mxu0 %v2081
  %2157 = vmatpush.bf16.msra.mxu0 %v2077
  %2158 = vmatpush.bf16.msra.mxu0 %v2073
  %2159 = vmatpush.bf16.msra.mxu0 %v2069
  %2160 = vmatpush.bf16.msra.mxu0 %v2065
  %2161 = vmatmul.bf16.gmra.mxu0 %v1934
  %v2162 = vpop.f32.mrf.mxu0
  %v2163 = vadd.f32 0.0, %v2162
  %v2164 = vpop.f32.mrf.mxu0
  %2165 = vdwg.mxu0
  %2166 = vmatpush.bf16.msra.mxu0 %v2094
  %2167 = vmatpush.bf16.msra.mxu0 %v2090
  %2168 = vmatpush.bf16.msra.mxu0 %v2086
  %2169 = vmatpush.bf16.msra.mxu0 %v2082
  %2170 = vmatpush.bf16.msra.mxu0 %v2078
  %2171 = vmatpush.bf16.msra.mxu0 %v2074
  %2172 = vmatpush.bf16.msra.mxu0 %v2070
  %2173 = vmatpush.bf16.msra.mxu0 %v2066
  %2174 = vmatmul.bf16.gmra.mxu0 %v1934
  %v2175 = vpop.f32.mrf.mxu0
  %v2176 = vadd.f32 0.0, %v2175
  %v2177 = vpop.f32.mrf.mxu0
  %2178 = vdwg.mxu0
  %v2179 = vadd.f32 %v1930, %v2137
  %v2180 = vadd.f32 %v1931, %v2150
  %v2181 = vadd.f32 %v1932, %v2163
  %v2182 = vadd.f32 %v1933, %v2176
  %v2183 = vxor.u32 %v2179, 2147483648
  %v2184 = vmul.f32 %v2183, 1.442695
  %v2185 = vpow.pop %v2184
  %v2186 = vadd.f32 %v2185, 1.0
  %v2187 = vrcp.pop %v2186
  %v2188 = vmul.f32 %v2186, %v2187
  %v2189 = vsub.f32 1.0, %v2188
  %v2190 = vmul.f32 %v2187, %v2189
  %v2191 = vadd.f32 %v2187, %v2190
  %vm2192 = vweird.f32 %v2186
  %vm2193 = vweird.f32 %v2187
  %vm2194 = vmor %vm2192, %vm2193
  %v2195 = vsel %vm2194, %v2187, %v2191
  %v2196 = vand.u32 2147483647, %v2186
  %vm2197 = vcmp.eq.f32.partialorder %v2196, 8.507059e+37
  %v2198 = vand.u32 %v2186, 2147483648
  %v2199 = vor.u32 1.1754944e-38, %v2198
  %v2200 = vsel %vm2197, %v2199, %v2195
  %v2201 = vmul.f32 1.0, %v2200
  %v2202 = vxor.u32 %v2180, 2147483648
  %v2203 = vmul.f32 %v2202, 1.442695
  %v2204 = vpow.pop %v2203
  %v2205 = vadd.f32 %v2204, 1.0
  %v2206 = vrcp.pop %v2205
  %v2207 = vmul.f32 %v2205, %v2206
  %v2208 = vsub.f32 1.0, %v2207
  %v2209 = vmul.f32 %v2206, %v2208
  %v2210 = vadd.f32 %v2206, %v2209
  %vm2211 = vweird.f32 %v2205
  %vm2212 = vweird.f32 %v2206
  %vm2213 = vmor %vm2211, %vm2212
  %v2214 = vsel %vm2213, %v2206, %v2210
  %v2215 = vand.u32 2147483647, %v2205
  %vm2216 = vcmp.eq.f32.partialorder %v2215, 8.507059e+37
  %v2217 = vand.u32 %v2205, 2147483648
  %v2218 = vor.u32 1.1754944e-38, %v2217
  %v2219 = vsel %vm2216, %v2218, %v2214
  %v2220 = vmul.f32 1.0, %v2219
  %v2221 = vtanh.pop %v2181
  %v2222 = vxor.u32 %v2182, 2147483648
  %v2223 = vmul.f32 %v2222, 1.442695
  %v2224 = vpow.pop %v2223
  %v2225 = vadd.f32 %v2224, 1.0
  %v2226 = vrcp.pop %v2225
  %v2227 = vmul.f32 %v2225, %v2226
  %v2228 = vsub.f32 1.0, %v2227
  %v2229 = vmul.f32 %v2226, %v2228
  %v2230 = vadd.f32 %v2226, %v2229
  %vm2231 = vweird.f32 %v2225
  %vm2232 = vweird.f32 %v2226
  %vm2233 = vmor %vm2231, %vm2232
  %v2234 = vsel %vm2233, %v2226, %v2230
  %v2235 = vand.u32 2147483647, %v2225
  %vm2236 = vcmp.eq.f32.partialorder %v2235, 8.507059e+37
  %v2237 = vand.u32 %v2225, 2147483648
  %v2238 = vor.u32 1.1754944e-38, %v2237
  %v2239 = vsel %vm2236, %v2238, %v2234
  %v2240 = vmul.f32 1.0, %v2239
  %v2241 = vmul.f32 %v2220, %v1924
  %v2242 = vmul.f32 %v2201, %v2221
  %v2243 = vadd.f32 %v2241, %v2242
  %v2244 = vtanh.pop %v2243
  %v2245 = vmul.f32 %v2240, %v2244
  %s2246 = scalar_lea.vmem [#allocation2], 48
  %2247 = vst [vmem:[%s2246] sm:$0xff] %v2245
  %s2248 = scalar_lea.vmem %s0, 224
  %v2249 = vld [vmem:[%s2248] sm:$0xff]
  %v2250 = vld [vmem:[%s2248 + $0x8] sm:$0xff]
  %v2251 = vld [vmem:[%s2248 + $0x10] sm:$0xff]
  %v2252 = vld [vmem:[%s2248 + $0x18] sm:$0xff]
  %v2253 = vpack.c.bf16 %v2245, %v2245
  %v2254 = vld [vmem:[%s1] sm:$0xff]
  %v2255 = vld [vmem:[%s1 + $0x8] sm:$0xff]
  %v2256 = vld [vmem:[%s1 + $0x10] sm:$0xff]
  %v2257 = vld [vmem:[%s1 + $0x18] sm:$0xff]
  %v2258 = vld [vmem:[%s1 + $0x20] sm:$0xff]
  %v2259 = vld [vmem:[%s1 + $0x28] sm:$0xff]
  %v2260 = vld [vmem:[%s1 + $0x30] sm:$0xff]
  %v2261 = vld [vmem:[%s1 + $0x38] sm:$0xff]
  %v2262 = vld [vmem:[%s1 + $0x40] sm:$0xff]
  %v2263 = vld [vmem:[%s1 + $0x48] sm:$0xff]
  %v2264 = vld [vmem:[%s1 + $0x50] sm:$0xff]
  %v2265 = vld [vmem:[%s1 + $0x58] sm:$0xff]
  %v2266 = vld [vmem:[%s1 + $0x60] sm:$0xff]
  %v2267 = vld [vmem:[%s1 + $0x68] sm:$0xff]
  %v2268 = vld [vmem:[%s1 + $0x70] sm:$0xff]
  %v2269 = vld [vmem:[%s1 + $0x78] sm:$0xff]
  %v2270 = vld [vmem:[%s1 + $0x80] sm:$0xff]
  %v2271 = vld [vmem:[%s1 + $0x88] sm:$0xff]
  %v2272 = vld [vmem:[%s1 + $0x90] sm:$0xff]
  %v2273 = vld [vmem:[%s1 + $0x98] sm:$0xff]
  %v2274 = vld [vmem:[%s1 + $0xa0] sm:$0xff]
  %v2275 = vld [vmem:[%s1 + $0xa8] sm:$0xff]
  %v2276 = vld [vmem:[%s1 + $0xb0] sm:$0xff]
  %v2277 = vld [vmem:[%s1 + $0xb8] sm:$0xff]
  %v2278 = vld [vmem:[%s1 + $0xc0] sm:$0xff]
  %v2279 = vld [vmem:[%s1 + $0xc8] sm:$0xff]
  %v2280 = vld [vmem:[%s1 + $0xd0] sm:$0xff]
  %v2281 = vld [vmem:[%s1 + $0xd8] sm:$0xff]
  %v2282 = vld [vmem:[%s1 + $0xe0] sm:$0xff]
  %v2283 = vld [vmem:[%s1 + $0xe8] sm:$0xff]
  %v2284 = vld [vmem:[%s1 + $0xf0] sm:$0xff]
  %v2285 = vld [vmem:[%s1 + $0xf8] sm:$0xff]
  %v2318 = vunpack.c.l.b16 %v2254
  %v2319 = vunpack.c.h.b16 %v2254
  %v2320 = vunpack.c.l.b16 %v2255
  %v2321 = vunpack.c.h.b16 %v2255
  %v2322 = vunpack.c.l.b16 %v2256
  %v2323 = vunpack.c.h.b16 %v2256
  %v2324 = vunpack.c.l.b16 %v2257
  %v2325 = vunpack.c.h.b16 %v2257
  %v2326 = vunpack.c.l.b16 %v2258
  %v2327 = vunpack.c.h.b16 %v2258
  %v2328 = vunpack.c.l.b16 %v2259
  %v2329 = vunpack.c.h.b16 %v2259
  %v2330 = vunpack.c.l.b16 %v2260
  %v2331 = vunpack.c.h.b16 %v2260
  %v2332 = vunpack.c.l.b16 %v2261
  %v2333 = vunpack.c.h.b16 %v2261
  %v2334 = vunpack.c.l.b16 %v2262
  %v2335 = vunpack.c.h.b16 %v2262
  %v2336 = vunpack.c.l.b16 %v2263
  %v2337 = vunpack.c.h.b16 %v2263
  %v2338 = vunpack.c.l.b16 %v2264
  %v2339 = vunpack.c.h.b16 %v2264
  %v2340 = vunpack.c.l.b16 %v2265
  %v2341 = vunpack.c.h.b16 %v2265
  %v2342 = vunpack.c.l.b16 %v2266
  %v2343 = vunpack.c.h.b16 %v2266
  %v2344 = vunpack.c.l.b16 %v2267
  %v2345 = vunpack.c.h.b16 %v2267
  %v2346 = vunpack.c.l.b16 %v2268
  %v2347 = vunpack.c.h.b16 %v2268
  %v2348 = vunpack.c.l.b16 %v2269
  %v2349 = vunpack.c.h.b16 %v2269
  %v2350 = vunpack.c.l.b16 %v2270
  %v2351 = vunpack.c.h.b16 %v2270
  %v2352 = vunpack.c.l.b16 %v2271
  %v2353 = vunpack.c.h.b16 %v2271
  %v2354 = vunpack.c.l.b16 %v2272
  %v2355 = vunpack.c.h.b16 %v2272
  %v2356 = vunpack.c.l.b16 %v2273
  %v2357 = vunpack.c.h.b16 %v2273
  %v2358 = vunpack.c.l.b16 %v2274
  %v2359 = vunpack.c.h.b16 %v2274
  %v2360 = vunpack.c.l.b16 %v2275
  %v2361 = vunpack.c.h.b16 %v2275
  %v2362 = vunpack.c.l.b16 %v2276
  %v2363 = vunpack.c.h.b16 %v2276
  %v2364 = vunpack.c.l.b16 %v2277
  %v2365 = vunpack.c.h.b16 %v2277
  %v2366 = vunpack.c.l.b16 %v2278
  %v2367 = vunpack.c.h.b16 %v2278
  %v2368 = vunpack.c.l.b16 %v2279
  %v2369 = vunpack.c.h.b16 %v2279
  %v2370 = vunpack.c.l.b16 %v2280
  %v2371 = vunpack.c.h.b16 %v2280
  %v2372 = vunpack.c.l.b16 %v2281
  %v2373 = vunpack.c.h.b16 %v2281
  %v2374 = vunpack.c.l.b16 %v2282
  %v2375 = vunpack.c.h.b16 %v2282
  %v2376 = vunpack.c.l.b16 %v2283
  %v2377 = vunpack.c.h.b16 %v2283
  %v2378 = vunpack.c.l.b16 %v2284
  %v2379 = vunpack.c.h.b16 %v2284
  %v2380 = vunpack.c.l.b16 %v2285
  %v2381 = vunpack.c.h.b16 %v2285
  %v2382 = vpack.c.b16 %v2322, %v2318
  %v2383 = vpack.c.b16 %v2323, %v2319
  %v2384 = vpack.c.b16 %v2324, %v2320
  %v2385 = vpack.c.b16 %v2325, %v2321
  %v2386 = vpack.c.b16 %v2330, %v2326
  %v2387 = vpack.c.b16 %v2331, %v2327
  %v2388 = vpack.c.b16 %v2332, %v2328
  %v2389 = vpack.c.b16 %v2333, %v2329
  %v2390 = vpack.c.b16 %v2338, %v2334
  %v2391 = vpack.c.b16 %v2339, %v2335
  %v2392 = vpack.c.b16 %v2340, %v2336
  %v2393 = vpack.c.b16 %v2341, %v2337
  %v2394 = vpack.c.b16 %v2346, %v2342
  %v2395 = vpack.c.b16 %v2347, %v2343
  %v2396 = vpack.c.b16 %v2348, %v2344
  %v2397 = vpack.c.b16 %v2349, %v2345
  %v2398 = vpack.c.b16 %v2354, %v2350
  %v2399 = vpack.c.b16 %v2355, %v2351
  %v2400 = vpack.c.b16 %v2356, %v2352
  %v2401 = vpack.c.b16 %v2357, %v2353
  %v2402 = vpack.c.b16 %v2362, %v2358
  %v2403 = vpack.c.b16 %v2363, %v2359
  %v2404 = vpack.c.b16 %v2364, %v2360
  %v2405 = vpack.c.b16 %v2365, %v2361
  %v2406 = vpack.c.b16 %v2370, %v2366
  %v2407 = vpack.c.b16 %v2371, %v2367
  %v2408 = vpack.c.b16 %v2372, %v2368
  %v2409 = vpack.c.b16 %v2373, %v2369
  %v2410 = vpack.c.b16 %v2378, %v2374
  %v2411 = vpack.c.b16 %v2379, %v2375
  %v2412 = vpack.c.b16 %v2380, %v2376
  %v2413 = vpack.c.b16 %v2381, %v2377
  %2446 = vmatpush.bf16.msra.mxu0 %v2410
  %2447 = vmatpush.bf16.msra.mxu0 %v2406
  %2448 = vmatpush.bf16.msra.mxu0 %v2402
  %2449 = vmatpush.bf16.msra.mxu0 %v2398
  %2450 = vmatpush.bf16.msra.mxu0 %v2394
  %2451 = vmatpush.bf16.msra.mxu0 %v2390
  %2452 = vmatpush.bf16.msra.mxu0 %v2386
  %2453 = vmatpush.bf16.msra.mxu0 %v2382
  %2454 = vmatmul.bf16.gmra.mxu0 %v2253
  %v2455 = vpop.f32.mrf.mxu0
  %v2456 = vadd.f32 0.0, %v2455
  %v2457 = vpop.f32.mrf.mxu0
  %2458 = vdwg.mxu0
  %2459 = vmatpush.bf16.msra.mxu0 %v2411
  %2460 = vmatpush.bf16.msra.mxu0 %v2407
  %2461 = vmatpush.bf16.msra.mxu0 %v2403
  %2462 = vmatpush.bf16.msra.mxu0 %v2399
  %2463 = vmatpush.bf16.msra.mxu0 %v2395
  %2464 = vmatpush.bf16.msra.mxu0 %v2391
  %2465 = vmatpush.bf16.msra.mxu0 %v2387
  %2466 = vmatpush.bf16.msra.mxu0 %v2383
  %2467 = vmatmul.bf16.gmra.mxu0 %v2253
  %v2468 = vpop.f32.mrf.mxu0
  %v2469 = vadd.f32 0.0, %v2468
  %v2470 = vpop.f32.mrf.mxu0
  %2471 = vdwg.mxu0
  %2472 = vmatpush.bf16.msra.mxu0 %v2412
  %2473 = vmatpush.bf16.msra.mxu0 %v2408
  %2474 = vmatpush.bf16.msra.mxu0 %v2404
  %2475 = vmatpush.bf16.msra.mxu0 %v2400
  %2476 = vmatpush.bf16.msra.mxu0 %v2396
  %2477 = vmatpush.bf16.msra.mxu0 %v2392
  %2478 = vmatpush.bf16.msra.mxu0 %v2388
  %2479 = vmatpush.bf16.msra.mxu0 %v2384
  %2480 = vmatmul.bf16.gmra.mxu0 %v2253
  %v2481 = vpop.f32.mrf.mxu0
  %v2482 = vadd.f32 0.0, %v2481
  %v2483 = vpop.f32.mrf.mxu0
  %2484 = vdwg.mxu0
  %2485 = vmatpush.bf16.msra.mxu0 %v2413
  %2486 = vmatpush.bf16.msra.mxu0 %v2409
  %2487 = vmatpush.bf16.msra.mxu0 %v2405
  %2488 = vmatpush.bf16.msra.mxu0 %v2401
  %2489 = vmatpush.bf16.msra.mxu0 %v2397
  %2490 = vmatpush.bf16.msra.mxu0 %v2393
  %2491 = vmatpush.bf16.msra.mxu0 %v2389
  %2492 = vmatpush.bf16.msra.mxu0 %v2385
  %2493 = vmatmul.bf16.gmra.mxu0 %v2253
  %v2494 = vpop.f32.mrf.mxu0
  %v2495 = vadd.f32 0.0, %v2494
  %v2496 = vpop.f32.mrf.mxu0
  %2497 = vdwg.mxu0
  %v2498 = vadd.f32 %v2249, %v2456
  %v2499 = vadd.f32 %v2250, %v2469
  %v2500 = vadd.f32 %v2251, %v2482
  %v2501 = vadd.f32 %v2252, %v2495
  %v2502 = vxor.u32 %v2498, 2147483648
  %v2503 = vmul.f32 %v2502, 1.442695
  %v2504 = vpow.pop %v2503
  %v2505 = vadd.f32 %v2504, 1.0
  %v2506 = vrcp.pop %v2505
  %v2507 = vmul.f32 %v2505, %v2506
  %v2508 = vsub.f32 1.0, %v2507
  %v2509 = vmul.f32 %v2506, %v2508
  %v2510 = vadd.f32 %v2506, %v2509
  %vm2511 = vweird.f32 %v2505
  %vm2512 = vweird.f32 %v2506
  %vm2513 = vmor %vm2511, %vm2512
  %v2514 = vsel %vm2513, %v2506, %v2510
  %v2515 = vand.u32 2147483647, %v2505
  %vm2516 = vcmp.eq.f32.partialorder %v2515, 8.507059e+37
  %v2517 = vand.u32 %v2505, 2147483648
  %v2518 = vor.u32 1.1754944e-38, %v2517
  %v2519 = vsel %vm2516, %v2518, %v2514
  %v2520 = vmul.f32 1.0, %v2519
  %v2521 = vxor.u32 %v2499, 2147483648
  %v2522 = vmul.f32 %v2521, 1.442695
  %v2523 = vpow.pop %v2522
  %v2524 = vadd.f32 %v2523, 1.0
  %v2525 = vrcp.pop %v2524
  %v2526 = vmul.f32 %v2524, %v2525
  %v2527 = vsub.f32 1.0, %v2526
  %v2528 = vmul.f32 %v2525, %v2527
  %v2529 = vadd.f32 %v2525, %v2528
  %vm2530 = vweird.f32 %v2524
  %vm2531 = vweird.f32 %v2525
  %vm2532 = vmor %vm2530, %vm2531
  %v2533 = vsel %vm2532, %v2525, %v2529
  %v2534 = vand.u32 2147483647, %v2524
  %vm2535 = vcmp.eq.f32.partialorder %v2534, 8.507059e+37
  %v2536 = vand.u32 %v2524, 2147483648
  %v2537 = vor.u32 1.1754944e-38, %v2536
  %v2538 = vsel %vm2535, %v2537, %v2533
  %v2539 = vmul.f32 1.0, %v2538
  %v2540 = vtanh.pop %v2500
  %v2541 = vxor.u32 %v2501, 2147483648
  %v2542 = vmul.f32 %v2541, 1.442695
  %v2543 = vpow.pop %v2542
  %v2544 = vadd.f32 %v2543, 1.0
  %v2545 = vrcp.pop %v2544
  %v2546 = vmul.f32 %v2544, %v2545
  %v2547 = vsub.f32 1.0, %v2546
  %v2548 = vmul.f32 %v2545, %v2547
  %v2549 = vadd.f32 %v2545, %v2548
  %vm2550 = vweird.f32 %v2544
  %vm2551 = vweird.f32 %v2545
  %vm2552 = vmor %vm2550, %vm2551
  %v2553 = vsel %vm2552, %v2545, %v2549
  %v2554 = vand.u32 2147483647, %v2544
  %vm2555 = vcmp.eq.f32.partialorder %v2554, 8.507059e+37
  %v2556 = vand.u32 %v2544, 2147483648
  %v2557 = vor.u32 1.1754944e-38, %v2556
  %v2558 = vsel %vm2555, %v2557, %v2553
  %v2559 = vmul.f32 1.0, %v2558
  %v2560 = vmul.f32 %v2539, %v2243
  %v2561 = vmul.f32 %v2520, %v2540
  %v2562 = vadd.f32 %v2560, %v2561
  %v2563 = vtanh.pop %v2562
  %v2564 = vmul.f32 %v2559, %v2563
  %s2565 = scalar_lea.vmem [#allocation2], 56
  %2566 = vst [vmem:[%s2565] sm:$0xff] %v2564
  %v2567 = vld [vmem:[#allocation2] sm:$0xff]
  %v2568 = vld [vmem:[#allocation2 + $0x8] sm:$0xff]
  %v2569 = vld [vmem:[#allocation2 + $0x10] sm:$0xff]
  %v2570 = vld [vmem:[#allocation2 + $0x18] sm:$0xff]
  %v2571 = vld [vmem:[#allocation2 + $0x20] sm:$0xff]
  %v2572 = vld [vmem:[#allocation2 + $0x28] sm:$0xff]
  %v2573 = vld [vmem:[#allocation2 + $0x30] sm:$0xff]
  %v2574 = vld [vmem:[#allocation2 + $0x38] sm:$0xff]
  %v2575 = vpack.c.bf16 %v2568, %v2567
  %v2576 = vpack.c.bf16 %v2570, %v2569
  %v2577 = vpack.c.bf16 %v2572, %v2571
  %v2578 = vpack.c.bf16 %v2574, %v2573
  %v2579 = vld [vmem:[%s2] sm:$0xff]
  %v2580 = vld [vmem:[%s2 + $0x8] sm:$0xff]
  %v2581 = vld [vmem:[%s2 + $0x10] sm:$0xff]
  %v2582 = vld [vmem:[%s2 + $0x18] sm:$0xff]
  %v2583 = vld [vmem:[%s2 + $0x20] sm:$0xff]
  %v2584 = vld [vmem:[%s2 + $0x28] sm:$0xff]
  %v2585 = vld [vmem:[%s2 + $0x30] sm:$0xff]
  %v2586 = vld [vmem:[%s2 + $0x38] sm:$0xff]
  %v2587 = vld [vmem:[%s2 + $0x40] sm:$0xff]
  %v2588 = vld [vmem:[%s2 + $0x48] sm:$0xff]
  %v2589 = vld [vmem:[%s2 + $0x50] sm:$0xff]
  %v2590 = vld [vmem:[%s2 + $0x58] sm:$0xff]
  %v2591 = vld [vmem:[%s2 + $0x60] sm:$0xff]
  %v2592 = vld [vmem:[%s2 + $0x68] sm:$0xff]
  %v2593 = vld [vmem:[%s2 + $0x70] sm:$0xff]
  %v2594 = vld [vmem:[%s2 + $0x78] sm:$0xff]
  %v2595 = vld [vmem:[%s3] sm:$0x3]
  %v2597 = vperm.slane %v2595, 0
  %v2598 = vperm.slane %v2595, 1
  %v2617 = vunpack.c.l.b16 %v2579
  %v2618 = vunpack.c.h.b16 %v2579
  %v2619 = vunpack.c.l.b16 %v2580
  %v2620 = vunpack.c.h.b16 %v2580
  %v2621 = vunpack.c.l.b16 %v2581
  %v2622 = vunpack.c.h.b16 %v2581
  %v2623 = vunpack.c.l.b16 %v2582
  %v2624 = vunpack.c.h.b16 %v2582
  %v2625 = vunpack.c.l.b16 %v2583
  %v2626 = vunpack.c.h.b16 %v2583
  %v2627 = vunpack.c.l.b16 %v2584
  %v2628 = vunpack.c.h.b16 %v2584
  %v2629 = vunpack.c.l.b16 %v2585
  %v2630 = vunpack.c.h.b16 %v2585
  %v2631 = vunpack.c.l.b16 %v2586
  %v2632 = vunpack.c.h.b16 %v2586
  %v2633 = vunpack.c.l.b16 %v2587
  %v2634 = vunpack.c.h.b16 %v2587
  %v2635 = vunpack.c.l.b16 %v2588
  %v2636 = vunpack.c.h.b16 %v2588
  %v2637 = vunpack.c.l.b16 %v2589
  %v2638 = vunpack.c.h.b16 %v2589
  %v2639 = vunpack.c.l.b16 %v2590
  %v2640 = vunpack.c.h.b16 %v2590
  %v2641 = vunpack.c.l.b16 %v2591
  %v2642 = vunpack.c.h.b16 %v2591
  %v2643 = vunpack.c.l.b16 %v2592
  %v2644 = vunpack.c.h.b16 %v2592
  %v2645 = vunpack.c.l.b16 %v2593
  %v2646 = vunpack.c.h.b16 %v2593
  %v2647 = vunpack.c.l.b16 %v2594
  %v2648 = vunpack.c.h.b16 %v2594
  %v2649 = vpack.c.b16 %v2619, %v2617
  %v2650 = vpack.c.b16 %v2620, %v2618
  %v2651 = vpack.c.b16 %v2623, %v2621
  %v2652 = vpack.c.b16 %v2624, %v2622
  %v2653 = vpack.c.b16 %v2627, %v2625
  %v2654 = vpack.c.b16 %v2628, %v2626
  %v2655 = vpack.c.b16 %v2631, %v2629
  %v2656 = vpack.c.b16 %v2632, %v2630
  %v2657 = vpack.c.b16 %v2635, %v2633
  %v2658 = vpack.c.b16 %v2636, %v2634
  %v2659 = vpack.c.b16 %v2639, %v2637
  %v2660 = vpack.c.b16 %v2640, %v2638
  %v2661 = vpack.c.b16 %v2643, %v2641
  %v2662 = vpack.c.b16 %v2644, %v2642
  %v2663 = vpack.c.b16 %v2647, %v2645
  %v2664 = vpack.c.b16 %v2648, %v2646
  %2681 = vmatpush.bf16.msra.mxu0 %v2663
  %2682 = vmatpush.bf16.msra.mxu0 %v2661
  %2683 = vmatpush.bf16.msra.mxu0 %v2659
  %2684 = vmatpush.bf16.msra.mxu0 %v2657
  %2685 = vmatpush.bf16.msra.mxu0 %v2655
  %2686 = vmatpush.bf16.msra.mxu0 %v2653
  %2687 = vmatpush.bf16.msra.mxu0 %v2651
  %2688 = vmatpush.bf16.msra.mxu0 %v2649
  %2689 = vmatmul.bf16.gmra.mxu0 %v2575
  %v2690 = vpop.f32.mrf.mxu0
  %v2691 = vadd.f32 %v2597, %v2690
  %v2692 = vpop.f32.mrf.mxu0
  %v2693 = vadd.f32 %v2597, %v2692
  %2694 = vmatmul.bf16.gmra.mxu0 %v2576
  %v2695 = vpop.f32.mrf.mxu0
  %v2696 = vadd.f32 %v2597, %v2695
  %v2697 = vpop.f32.mrf.mxu0
  %v2698 = vadd.f32 %v2597, %v2697
  %2699 = vmatmul.bf16.gmra.mxu0 %v2577
  %v2700 = vpop.f32.mrf.mxu0
  %v2701 = vadd.f32 %v2597, %v2700
  %v2702 = vpop.f32.mrf.mxu0
  %v2703 = vadd.f32 %v2597, %v2702
  %2704 = vmatmul.bf16.gmra.mxu0 %v2578
  %v2705 = vpop.f32.mrf.mxu0
  %v2706 = vadd.f32 %v2597, %v2705
  %v2707 = vpop.f32.mrf.mxu0
  %v2708 = vadd.f32 %v2597, %v2707
  %2709 = vdwg.mxu0
  %2710 = vmatpush.bf16.msra.mxu0 %v2664
  %2711 = vmatpush.bf16.msra.mxu0 %v2662
  %2712 = vmatpush.bf16.msra.mxu0 %v2660
  %2713 = vmatpush.bf16.msra.mxu0 %v2658
  %2714 = vmatpush.bf16.msra.mxu0 %v2656
  %2715 = vmatpush.bf16.msra.mxu0 %v2654
  %2716 = vmatpush.bf16.msra.mxu0 %v2652
  %2717 = vmatpush.bf16.msra.mxu0 %v2650
  %2718 = vmatmul.bf16.gmra.mxu0 %v2575
  %v2719 = vpop.f32.mrf.mxu0
  %v2720 = vadd.f32 %v2598, %v2719
  %v2721 = vpop.f32.mrf.mxu0
  %v2722 = vadd.f32 %v2598, %v2721
  %2723 = vmatmul.bf16.gmra.mxu0 %v2576
  %v2724 = vpop.f32.mrf.mxu0
  %v2725 = vadd.f32 %v2598, %v2724
  %v2726 = vpop.f32.mrf.mxu0
  %v2727 = vadd.f32 %v2598, %v2726
  %2728 = vmatmul.bf16.gmra.mxu0 %v2577
  %v2729 = vpop.f32.mrf.mxu0
  %v2730 = vadd.f32 %v2598, %v2729
  %v2731 = vpop.f32.mrf.mxu0
  %v2732 = vadd.f32 %v2598, %v2731
  %2733 = vmatmul.bf16.gmra.mxu0 %v2578
  %v2734 = vpop.f32.mrf.mxu0
  %v2735 = vadd.f32 %v2598, %v2734
  %v2736 = vpop.f32.mrf.mxu0
  %v2737 = vadd.f32 %v2598, %v2736
  %2738 = vdwg.mxu0
  %2739 = vst [vmem:[%s4] sm:$0xff] %v2691
  %2740 = vst [vmem:[%s4 + $0x8] sm:$0xff] %v2720
  %2741 = vst [vmem:[%s4 + $0x10] sm:$0xff] %v2693
  %2742 = vst [vmem:[%s4 + $0x18] sm:$0xff] %v2722
  %2743 = vst [vmem:[%s4 + $0x20] sm:$0xff] %v2696
  %2744 = vst [vmem:[%s4 + $0x28] sm:$0xff] %v2725
  %2745 = vst [vmem:[%s4 + $0x30] sm:$0xff] %v2698
  %2746 = vst [vmem:[%s4 + $0x38] sm:$0xff] %v2727
  %2747 = vst [vmem:[%s4 + $0x40] sm:$0xff] %v2701
  %2748 = vst [vmem:[%s4 + $0x48] sm:$0xff] %v2730
  %2749 = vst [vmem:[%s4 + $0x50] sm:$0xff] %v2703
  %2750 = vst [vmem:[%s4 + $0x58] sm:$0xff] %v2732
  %2751 = vst [vmem:[%s4 + $0x60] sm:$0xff] %v2706
  %2752 = vst [vmem:[%s4 + $0x68] sm:$0xff] %v2735
  %2753 = vst [vmem:[%s4 + $0x70] sm:$0xff] %v2708
  %2754 = vst [vmem:[%s4 + $0x78] sm:$0xff] %v2737
  // Predicated region
  $region18: #{decoder_forward.3} parent=0 // pred_check
    _
  $region19: #{decoder_forward.3} parent=0 // pred_check_branch
    %2756 = sbr.rel (0) target = $region21
  $region20: #{decoder_forward.3} parent=0 // pred_region
    _
  $region21: #{decoder_forward.3} parent=0 // pred_fallthru
    _
  // Predicated region
  $region22: #{decoder_forward.3} parent=0 // pred_check
    _
  $region23: #{decoder_forward.3} parent=0 // pred_check_branch
    %2758 = sbr.rel (0) target = $region25
  $region24: #{decoder_forward.3} parent=0 // pred_region
    _
  $region25: #{decoder_forward.3} parent=0 // pred_fallthru
    _

</llo_original>
